<compile_context>
chip_gen: v7x
topology: tpu7x:2x2x1
jax: 0.10.0
libtpu: 0.0.40
codegen_flags: <defaults>
</compile_context>

<pallas_src>
import functools
import math

import jax
import jax.numpy as jnp
from jax import lax
from jax.experimental import pallas as pl
from jax.experimental.pallas import tpu as pltpu

# ----------------------------- model config ---------------------------------
B = 2            # batch (attention batch-mask constants are built for this B)
C = 3            # input channels
IMG = 16         # spatial size
PATCH = 8        # patch size
NP = (IMG // PATCH) ** 2        # num patches = 4
T = NP + 1                      # tokens (with CLS) = 5
BT = B * T                      # batch folded into rows = 10
D = 32                          # hidden dim
NH = 4                          # attention heads
DH = D // NH                    # per-head dim = 8
MLP_DIM = 4 * D                 # 128
N_BLOCKS = 4                    # transformer depth
HEAD_OUT = 16                   # head.mlp output dim
N_LAYERS = 4                    # intermediate layers requested by wrapper
CPP = C * PATCH * PATCH         # 192
EPS = 1e-6
ATT_SCALE = 1.0 / math.sqrt(DH)
NEG_INF = -1e30

# ------------------------ constant-slab row layout ---------------------------
def _r8(n):
    return ((n + 7) // 8) * 8

CST_LANES = 128
OFF_WPE   = 0                               # w_pe        (CPP, D)
OFF_BASE  = OFF_WPE   + _r8(CPP)            # base_bt     (BT, D)
OFF_HMASK = OFF_BASE  + _r8(BT)             # head_mask   (NH*BT, D)
OFF_BBIAS = OFF_HMASK + _r8(NH * BT)        # batch_bias  (BT, NH*BT)
OFF_BONES = OFF_BBIAS + _r8(BT)             # block_ones  (NH*BT, NH*BT)
OFF_WHEAD = OFF_BONES + _r8(NH * BT)        # w_head_cat  (N_LAYERS*D, HEAD_OUT)
OFF_NORMG = OFF_WHEAD + _r8(N_LAYERS * D)   # norm_g      (1, D)
OFF_NORMB = OFF_NORMG + 8                   # norm_b      (1, D)
OFF_BHEAD = OFF_NORMB + 8                   # b_head      (1, HEAD_OUT)
CST_ROWS  = OFF_BHEAD + 8


# ----------------------------- fused Pallas kernel ---------------------------
def _vit_fused_kernel(patches_ref,           # (BT, CPP)   whole batch, CLS rows = 0
                      wbm_ref,               # (NB, 3, D, 128)  [w_qkv | w_proj | w_fc1]
                      wfc2_ref,              # (NB, MLP, D)
                      wbv_ref,               # (NB, 8, 128) per-block vectors
                      cst_ref,               # (CST_ROWS, 128) global constants
                      out_ref,               # (out_rows, HEAD_OUT)
                      *, n_layers, return_all_tokens):
    f32 = jnp.float32

    def layernorm(xv, g, b):
        # one-pass: var = E[x^2] - mu^2 (both cross-lane reductions issue back-to-back)
        mu = jnp.mean(xv, axis=-1, keepdims=True)
        ms = jnp.mean(xv * xv, axis=-1, keepdims=True)
        return (xv - mu) * lax.rsqrt(ms - mu * mu + EPS) * g + b

    def gelu_tanh(xv):
        # TODO(synk): torch.nn.GELU defaults to the exact erf form; tanh approx kept.
        return 0.5 * xv * (1.0 + jnp.tanh(
            0.7978845608028654 * (xv + 0.044715 * xv * xv * xv)))

    # ---- unpack global constants (static row/lane slices of one slab) ----
    w_pe       = cst_ref[OFF_WPE:OFF_WPE + CPP, 0:D]
    base       = cst_ref[OFF_BASE:OFF_BASE + BT, 0:D]
    head_mask  = cst_ref[OFF_HMASK:OFF_HMASK + NH * BT, 0:D]
    batch_bias = cst_ref[OFF_BBIAS:OFF_BBIAS + BT, 0:NH * BT]
    block_ones = cst_ref[OFF_BONES:OFF_BONES + NH * BT, 0:NH * BT]
    norm_g     = cst_ref[OFF_NORMG:OFF_NORMG + 1, 0:D]
    norm_b     = cst_ref[OFF_NORMB:OFF_NORMB + 1, 0:D]
    b_head     = cst_ref[OFF_BHEAD:OFF_BHEAD + 1, 0:HEAD_OUT]

    # ---- patch embed + CLS/pos assembly (CLS rows are zero-padded patches) ----
    x = jnp.dot(patches_ref[...], w_pe, preferred_element_type=f32) + base   # (BT, D)

    first_out = N_BLOCKS - n_layers
    feats = []
    for i in range(N_BLOCKS):
        wb  = wbm_ref[i]                          # (3, D, 128)
        vec = wbv_ref[i]                          # (8, 128)
        w_qkv  = wb[0, :, 0:3 * D]                # (D, 3D)
        w_proj = wb[1, :, 0:D]                    # (D, D)
        w_fc1  = wb[2]                            # (D, MLP)
        w_fc2  = wfc2_ref[i]                      # (MLP, D)
        ln1_g, ln1_b = vec[0:1, 0:D], vec[1:2, 0:D]
        b_qkv  = vec[2:3, 0:3 * D]
        b_proj = vec[3:4, 0:D]
        ln2_g, ln2_b = vec[4:5, 0:D], vec[5:6, 0:D]
        b_fc1  = vec[6:7, 0:MLP_DIM]
        b_fc2  = vec[7:8, 0:D]

        # -------- attention: all heads + whole batch in 5 MXU passes --------
        h1  = layernorm(x, ln1_g, ln1_b)                                      # (BT, D)
        qkv = jnp.dot(h1, w_qkv, preferred_element_type=f32) + b_qkv          # (BT, 3D)
        q, k, v = qkv[:, 0:D], qkv[:, D:2 * D], qkv[:, 2 * D:3 * D]
        # row-stack K/V per head and keep only that head's lanes (block-diag trick)
        k_exp = head_mask * jnp.concatenate([k] * NH, axis=0)                 # (NH*BT, D)
        v_exp = head_mask * jnp.concatenate([v] * NH, axis=0)                 # (NH*BT, D)
        # scores: s[(b,t), (h,b',t')] = q_h(b,t) . k_h(b',t'); cross-batch masked
        s = lax.dot_general(q, k_exp, (((1,), (1,)), ((), ())),
                            preferred_element_type=f32) * ATT_SCALE + batch_bias
        m = jnp.max(s, axis=-1, keepdims=True)            # per-row shift (cancels per group)
        p = jnp.exp(s - m)                                 # masked entries -> 0
        denom = jnp.dot(p, block_ones, preferred_element_type=f32)  # per-head-group sums
        p = p / denom                                      # exact softmax per (head, batch)
        o = jnp.dot(p, v_exp, preferred_element_type=f32)  # (BT, D), head-major lanes
        x = x + jnp.dot(o, w_proj, preferred_element_type=f32) + b_proj

        # -------- MLP --------
        h2 = layernorm(x, ln2_g, ln2_b)
        h2 = gelu_tanh(jnp.dot(h2, w_fc1, preferred_element_type=f32) + b_fc1)
        x = x + jnp.dot(h2, w_fc2, preferred_element_type=f32) + b_fc2

        # intermediate-layer feature (final LayerNorm of this block's output)
        if i >= first_out:
            feats.append(layernorm(x, norm_g, norm_b))

    # concat_i(feat_i) @ W_head + b_head  — one (rows, n_layers*D) @ (n_layers*D, HO) matmul
    fcat = jnp.concatenate(feats, axis=-1)                                    # (BT, n_layers*D)
    if not return_all_tokens:
        fcat = jnp.concatenate([fcat[b * T:b * T + 1, :] for b in range(B)], axis=0)
    w_head = cst_ref[OFF_WHEAD:OFF_WHEAD + n_layers * D, 0:HEAD_OUT]
    emb = jnp.dot(fcat, w_head, preferred_element_type=f32) + b_head
    out_ref[...] = emb.astype(out_ref.dtype)


# ----------------------------- parameter init --------------------------------
def init_params(key):
    ks = iter(jax.random.split(key, 32))
    nrm = lambda shape, s=0.02: (s * jax.random.normal(next(ks), shape)).astype(jnp.float32)
    return dict(
        w_pe=nrm((CPP, D)), b_pe=jnp.zeros((1, D), jnp.float32),
        cls=nrm((1, D)), pos=nrm((T, D)),
        ln1_g=jnp.ones((N_BLOCKS, 1, D), jnp.float32),
        ln1_b=jnp.zeros((N_BLOCKS, 1, D), jnp.float32),
        w_qkv=nrm((N_BLOCKS, D, 3 * D)),
        b_qkv=jnp.zeros((N_BLOCKS, 1, 3 * D), jnp.float32),
        w_proj=nrm((N_BLOCKS, D, D)),
        b_proj=jnp.zeros((N_BLOCKS, 1, D), jnp.float32),
        ln2_g=jnp.ones((N_BLOCKS, 1, D), jnp.float32),
        ln2_b=jnp.zeros((N_BLOCKS, 1, D), jnp.float32),
        w_fc1=nrm((N_BLOCKS, D, MLP_DIM)),
        b_fc1=jnp.zeros((N_BLOCKS, 1, MLP_DIM), jnp.float32),
        w_fc2=nrm((N_BLOCKS, MLP_DIM, D)),
        b_fc2=jnp.zeros((N_BLOCKS, 1, D), jnp.float32),
        norm_g=jnp.ones((1, D), jnp.float32),
        norm_b=jnp.zeros((1, D), jnp.float32),
        w_head=nrm((N_LAYERS, D, HEAD_OUT)),
        b_head=jnp.zeros((1, HEAD_OUT), jnp.float32),
    )


def prepare_params(p):
    """One-time host-side packing of all weights + derived constants into 4 slabs."""
    f32 = jnp.float32

    # per-block matrix slab (NB, 3, D, 128): [w_qkv | w_proj | w_fc1], lane-padded to 128
    wqkv_p  = jnp.pad(p["w_qkv"],  ((0, 0), (0, 0), (0, 128 - 3 * D)))
    wproj_p = jnp.pad(p["w_proj"], ((0, 0), (0, 0), (0, 128 - D)))
    wbm = jnp.stack([wqkv_p, wproj_p, p["w_fc1"]], axis=1).astype(f32)
    wfc2 = p["w_fc2"].astype(f32)                                    # (NB, MLP, D)

    # per-block vector slab (NB, 8, 128)
    def v128(a):
        a = a.reshape(N_BLOCKS, -1)
        return jnp.pad(a, ((0, 0), (0, 128 - a.shape[-1])))
    wbv = jnp.stack([v128(p["ln1_g"]), v128(p["ln1_b"]), v128(p["b_qkv"]),
                     v128(p["b_proj"]), v128(p["ln2_g"]), v128(p["ln2_b"]),
                     v128(p["b_fc1"]), v128(p["b_fc2"])], axis=1).astype(f32)

    # global-constant slab (CST_ROWS, 128)
    base = jnp.concatenate([p["cls"] + p["pos"][0:1],
                            p["pos"][1:] + p["b_pe"]], axis=0)       # (T, D)
    base_bt = jnp.tile(base, (B, 1))                                 # (BT, D)
    lane_head = jnp.arange(D) // DH
    row_head = jnp.arange(NH * BT) // BT
    head_mask = (row_head[:, None] == lane_head[None, :]).astype(f32)
    row_b = jnp.arange(BT) // T
    col_b = (jnp.arange(NH * BT) % BT) // T
    batch_bias = jnp.where(row_b[:, None] == col_b[None, :], 0.0, NEG_INF).astype(f32)
    grp = jnp.arange(NH * BT) // BT
    block_ones = (grp[:, None] == grp[None, :]).astype(f32)
    w_head_cat = p["w_head"].reshape(N_LAYERS * D, HEAD_OUT)

    cst = jnp.zeros((CST_ROWS, CST_LANES), f32)
    def put(c, off, a):
        return c.at[off:off + a.shape[0], 0:a.shape[1]].set(a.astype(f32))
    cst = put(cst, OFF_WPE, p["w_pe"])
    cst = put(cst, OFF_BASE, base_bt)
    cst = put(cst, OFF_HMASK, head_mask)
    cst = put(cst, OFF_BBIAS, batch_bias)
    cst = put(cst, OFF_BONES, block_ones)
    cst = put(cst, OFF_WHEAD, w_head_cat)
    cst = put(cst, OFF_NORMG, p["norm_g"])
    cst = put(cst, OFF_NORMB, p["norm_b"])
    cst = put(cst, OFF_BHEAD, p["b_head"])
    return dict(wbm=wbm, wfc2=wfc2, wbv=wbv, cst=cst)


# ----------------------------- forward ---------------------------------------
def patchify(x):
    # NCHW (B, C, H, W) -> (B, NP, C*P*P), same flatten order as torch Conv2d
    # with stride=kernel=P (pure layout op, done outside the kernel).
    b, c, h, w = x.shape
    x = x.reshape(b, c, h // PATCH, PATCH, w // PATCH, PATCH)
    x = jnp.transpose(x, (0, 2, 4, 1, 3, 5))
    return x.reshape(b, (h // PATCH) * (w // PATCH), c * PATCH * PATCH)


@functools.partial(jax.jit, static_argnames=("n_layers", "return_all_tokens"))
def vit_wrapper_forward(packed, x, n_layers=N_LAYERS, return_all_tokens=False):
    n_layers = min(int(n_layers), N_BLOCKS)
    bsz = x.shape[0]
    assert bsz == B, "packed constants (attention batch mask, base) were built for batch B"

    patches = patchify(x.astype(jnp.float32))                  # (B, NP, CPP)
    patches = jnp.pad(patches, ((0, 0), (1, 0), (0, 0)))       # zero CLS row -> (B, T, CPP)
    patches = patches.reshape(BT, CPP)

    out_rows = BT if return_all_tokens else bsz

    def full(shape):
        return pl.BlockSpec(shape, lambda i, _n=len(shape): (0,) * _n)

    kernel = functools.partial(_vit_fused_kernel,
                               n_layers=n_layers,
                               return_all_tokens=return_all_tokens)

    # NOTE(v7x): grid=(B,) + ("parallel",) splitting the batch over 2 TCs was
    # dropped — the compute per element is too small to pay weight duplication.
    out = pl.pallas_call(
        kernel,
        grid=(1,),                                             # single pipeline step
        in_specs=[
            full((BT, CPP)),
            full((N_BLOCKS, 3, D, 128)),
            full((N_BLOCKS, MLP_DIM, D)),
            full((N_BLOCKS, 8, 128)),
            full((CST_ROWS, CST_LANES)),
        ],
        out_specs=full((out_rows, HEAD_OUT)),
        out_shape=jax.ShapeDtypeStruct((out_rows, HEAD_OUT), jnp.float32),
        compiler_params=pltpu.CompilerParams(
            dimension_semantics=("arbitrary",)),
        cost_estimate=pl.CostEstimate(
            flops=1_600_000, transcendentals=7_000, bytes_accessed=550_000),
    )(patches, packed["wbm"], packed["wfc2"], packed["wbv"], packed["cst"])

    if return_all_tokens:
        return out.reshape(bsz, T, HEAD_OUT)   # (B, T, HEAD_OUT)
    return out                                  # (B, HEAD_OUT)


# ----------------------------- entry point ------------------------------------
if __name__ == "__main__":
    key = jax.random.PRNGKey(0)
    k_param, k_x = jax.random.split(key)
    packed = prepare_params(init_params(k_param))
    x = jax.random.normal(k_x, (B, C, IMG, IMG), dtype=jnp.float32)   # NCHW like PyTorch

    emb = vit_wrapper_forward(packed, x, n_layers=N_LAYERS, return_all_tokens=False)
    emb = jax.block_until_ready(emb)
    assert emb.shape == (B, HEAD_OUT), emb.shape
    assert bool(jnp.all(jnp.isfinite(emb)))
    print("KERNEL_OK")
</pallas_src>

<mosaic_0001>
module attributes {stable_mosaic.version = 11 : i64} {
  func.func @_vit_fused_kernel(%arg0: i32, %arg1: memref<10x192xf32, #tpu.memory_space<vmem>>, %arg2: memref<4x3x32x128xf32, #tpu.memory_space<vmem>>, %arg3: memref<4x128x32xf32, #tpu.memory_space<vmem>>, %arg4: memref<4x8x128xf32, #tpu.memory_space<vmem>>, %arg5: memref<456x128xf32, #tpu.memory_space<vmem>>, %arg6: memref<2x16xf32, #tpu.memory_space<vmem>>) attributes {dimension_semantics = [#tpu.dimension_semantics<arbitrary>], iteration_bounds = array<i64: 1>, scalar_prefetch = 0 : i64, scratch_operands = 0 : i64, tpu.core_type = #tpu.core_type<tc>, window_params = [{pipeline_mode = #tpu.pipeline_mode<synchronous>, transform_indices = @transform_0, window_bounds = array<i64: 10, 192>}, {pipeline_mode = #tpu.pipeline_mode<synchronous>, transform_indices = @transform_1, window_bounds = array<i64: 4, 3, 32, 128>}, {pipeline_mode = #tpu.pipeline_mode<synchronous>, transform_indices = @transform_2, window_bounds = array<i64: 4, 128, 32>}, {pipeline_mode = #tpu.pipeline_mode<synchronous>, transform_indices = @transform_3, window_bounds = array<i64: 4, 8, 128>}, {pipeline_mode = #tpu.pipeline_mode<synchronous>, transform_indices = @transform_4, window_bounds = array<i64: 456, 128>}, {pipeline_mode = #tpu.pipeline_mode<synchronous>, transform_indices = @transform_5, window_bounds = array<i64: 2, 16>}]} {
    %c0 = arith.constant 0 : index
    %c0_0 = arith.constant 0 : index
    %0 = vector.load %arg5[%c0, %c0_0] : memref<456x128xf32, #tpu.memory_space<vmem>>, vector<192x32xf32>
    %c192 = arith.constant 192 : index
    %c0_1 = arith.constant 0 : index
    %1 = vector.load %arg5[%c192, %c0_1] : memref<456x128xf32, #tpu.memory_space<vmem>>, vector<10x32xf32>
    %c208 = arith.constant 208 : index
    %c0_2 = arith.constant 0 : index
    %2 = vector.load %arg5[%c208, %c0_2] : memref<456x128xf32, #tpu.memory_space<vmem>>, vector<40x32xf32>
    %c248 = arith.constant 248 : index
    %c0_3 = arith.constant 0 : index
    %3 = vector.load %arg5[%c248, %c0_3] : memref<456x128xf32, #tpu.memory_space<vmem>>, vector<10x40xf32>
    %c264 = arith.constant 264 : index
    %c0_4 = arith.constant 0 : index
    %4 = vector.load %arg5[%c264, %c0_4] : memref<456x128xf32, #tpu.memory_space<vmem>>, vector<40x40xf32>
    %c432 = arith.constant 432 : index
    %c0_5 = arith.constant 0 : index
    %5 = vector.load %arg5[%c432, %c0_5] : memref<456x128xf32, #tpu.memory_space<vmem>>, vector<1x32xf32>
    %c440 = arith.constant 440 : index
    %c0_6 = arith.constant 0 : index
    %6 = vector.load %arg5[%c440, %c0_6] : memref<456x128xf32, #tpu.memory_space<vmem>>, vector<1x32xf32>
    %c448 = arith.constant 448 : index
    %c0_7 = arith.constant 0 : index
    %7 = vector.load %arg5[%c448, %c0_7] : memref<456x128xf32, #tpu.memory_space<vmem>>, vector<1x16xf32>
    %c0_8 = arith.constant 0 : index
    %c0_9 = arith.constant 0 : index
    %8 = vector.load %arg1[%c0_8, %c0_9] : memref<10x192xf32, #tpu.memory_space<vmem>>, vector<10x192xf32>
    %cst = arith.constant dense<0.000000e+00> : vector<10x32xf32>
    %9 = tpu.matmul %8, %0, %cst {dimension_numbers = #tpu.dot_dimension_numbers<[1], [0], [0], [1], [0, 0, 1, 1], [], []>} : vector<10x192xf32>, vector<192x32xf32>, vector<10x32xf32> -> vector<10x32xf32>
    %10 = arith.addf %9, %1 : vector<10x32xf32>
    %c0_10 = arith.constant 0 : index
    %c0_11 = arith.constant 0 : index
    %c0_12 = arith.constant 0 : index
    %c0_13 = arith.constant 0 : index
    %11 = vector.load %arg2[%c0_10, %c0_11, %c0_12, %c0_13] : memref<4x3x32x128xf32, #tpu.memory_space<vmem>>, vector<1x3x32x128xf32>
    %12 = vector.shape_cast %11 : vector<1x3x32x128xf32> to vector<3x32x128xf32>
    %c0_14 = arith.constant 0 : index
    %c0_15 = arith.constant 0 : index
    %c0_16 = arith.constant 0 : index
    %13 = vector.load %arg4[%c0_14, %c0_15, %c0_16] : memref<4x8x128xf32, #tpu.memory_space<vmem>>, vector<1x8x128xf32>
    %14 = vector.shape_cast %13 : vector<1x8x128xf32> to vector<8x128xf32>
    %15 = vector.extract_strided_slice %12 {offsets = [0, 0, 0], sizes = [1, 32, 96], strides = [1, 1, 1]} : vector<3x32x128xf32> to vector<1x32x96xf32>
    %16 = vector.shape_cast %15 : vector<1x32x96xf32> to vector<32x96xf32>
    %17 = vector.extract_strided_slice %12 {offsets = [1, 0, 0], sizes = [1, 32, 32], strides = [1, 1, 1]} : vector<3x32x128xf32> to vector<1x32x32xf32>
    %18 = vector.shape_cast %17 : vector<1x32x32xf32> to vector<32x32xf32>
    %19 = vector.extract_strided_slice %12 {offsets = [2, 0, 0], sizes = [1, 32, 128], strides = [1, 1, 1]} : vector<3x32x128xf32> to vector<1x32x128xf32>
    %20 = vector.shape_cast %19 : vector<1x32x128xf32> to vector<32x128xf32>
    %c0_17 = arith.constant 0 : index
    %c0_18 = arith.constant 0 : index
    %c0_19 = arith.constant 0 : index
    %21 = vector.load %arg3[%c0_17, %c0_18, %c0_19] : memref<4x128x32xf32, #tpu.memory_space<vmem>>, vector<1x128x32xf32>
    %22 = vector.shape_cast %21 : vector<1x128x32xf32> to vector<128x32xf32>
    %23 = vector.extract_strided_slice %14 {offsets = [0, 0], sizes = [1, 32], strides = [1, 1]} : vector<8x128xf32> to vector<1x32xf32>
    %24 = vector.extract_strided_slice %14 {offsets = [1, 0], sizes = [1, 32], strides = [1, 1]} : vector<8x128xf32> to vector<1x32xf32>
    %25 = vector.extract_strided_slice %14 {offsets = [2, 0], sizes = [1, 96], strides = [1, 1]} : vector<8x128xf32> to vector<1x96xf32>
    %26 = vector.extract_strided_slice %14 {offsets = [3, 0], sizes = [1, 32], strides = [1, 1]} : vector<8x128xf32> to vector<1x32xf32>
    %27 = vector.extract_strided_slice %14 {offsets = [4, 0], sizes = [1, 32], strides = [1, 1]} : vector<8x128xf32> to vector<1x32xf32>
    %28 = vector.extract_strided_slice %14 {offsets = [5, 0], sizes = [1, 32], strides = [1, 1]} : vector<8x128xf32> to vector<1x32xf32>
    %29 = vector.extract_strided_slice %14 {offsets = [6, 0], sizes = [1, 128], strides = [1, 1]} : vector<8x128xf32> to vector<1x128xf32>
    %30 = vector.extract_strided_slice %14 {offsets = [7, 0], sizes = [1, 32], strides = [1, 1]} : vector<8x128xf32> to vector<1x32xf32>
    %cst_20 = arith.constant dense<0.000000e+00> : vector<10xf32>
    %31 = vector.multi_reduction <add>, %10, %cst_20 [1] : vector<10x32xf32> to vector<10xf32>
    %32 = vector.shape_cast %31 : vector<10xf32> to vector<10x1xf32>
    %cst_21 = arith.constant 3.200000e+01 : f32
    %33 = vector.broadcast %cst_21 : f32 to vector<10x1xf32>
    %34 = arith.divf %32, %33 : vector<10x1xf32>
    %35 = arith.mulf %10, %10 : vector<10x32xf32>
    %cst_22 = arith.constant dense<0.000000e+00> : vector<10xf32>
    %36 = vector.multi_reduction <add>, %35, %cst_22 [1] : vector<10x32xf32> to vector<10xf32>
    %37 = vector.shape_cast %36 : vector<10xf32> to vector<10x1xf32>
    %cst_23 = arith.constant 3.200000e+01 : f32
    %38 = vector.broadcast %cst_23 : f32 to vector<10x1xf32>
    %39 = arith.divf %37, %38 : vector<10x1xf32>
    %40 = vector.broadcast %34 : vector<10x1xf32> to vector<10x32xf32>
    %41 = arith.subf %10, %40 : vector<10x32xf32>
    %42 = arith.mulf %34, %34 : vector<10x1xf32>
    %43 = arith.subf %39, %42 : vector<10x1xf32>
    %cst_24 = arith.constant 9.99999997E-7 : f32
    %44 = vector.broadcast %cst_24 : f32 to vector<10x1xf32>
    %45 = arith.addf %43, %44 : vector<10x1xf32>
    %46 = math.rsqrt %45 : vector<10x1xf32>
    %47 = vector.broadcast %46 : vector<10x1xf32> to vector<10x32xf32>
    %48 = arith.mulf %41, %47 : vector<10x32xf32>
    %49 = vector.broadcast %23 : vector<1x32xf32> to vector<10x32xf32>
    %50 = arith.mulf %48, %49 : vector<10x32xf32>
    %51 = vector.broadcast %24 : vector<1x32xf32> to vector<10x32xf32>
    %52 = arith.addf %50, %51 : vector<10x32xf32>
    %cst_25 = arith.constant dense<0.000000e+00> : vector<10x96xf32>
    %53 = tpu.matmul %52, %16, %cst_25 {dimension_numbers = #tpu.dot_dimension_numbers<[1], [0], [0], [1], [0, 0, 1, 1], [], []>} : vector<10x32xf32>, vector<32x96xf32>, vector<10x96xf32> -> vector<10x96xf32>
    %54 = vector.broadcast %25 : vector<1x96xf32> to vector<10x96xf32>
    %55 = arith.addf %53, %54 : vector<10x96xf32>
    %56 = vector.extract_strided_slice %55 {offsets = [0, 0], sizes = [10, 32], strides = [1, 1]} : vector<10x96xf32> to vector<10x32xf32>
    %57 = vector.extract_strided_slice %55 {offsets = [0, 32], sizes = [10, 32], strides = [1, 1]} : vector<10x96xf32> to vector<10x32xf32>
    %58 = vector.extract_strided_slice %55 {offsets = [0, 64], sizes = [10, 32], strides = [1, 1]} : vector<10x96xf32> to vector<10x32xf32>
    %59 = tpu.concatenate %57, %57, %57, %57 in 0 : vector<10x32xf32>, vector<10x32xf32>, vector<10x32xf32>, vector<10x32xf32> -> vector<40x32xf32>
    %60 = arith.mulf %2, %59 : vector<40x32xf32>
    %61 = tpu.concatenate %58, %58, %58, %58 in 0 : vector<10x32xf32>, vector<10x32xf32>, vector<10x32xf32>, vector<10x32xf32> -> vector<40x32xf32>
    %62 = arith.mulf %2, %61 : vector<40x32xf32>
    %cst_26 = arith.constant dense<0.000000e+00> : vector<10x40xf32>
    %63 = tpu.matmul %56, %60, %cst_26 {dimension_numbers = #tpu.dot_dimension_numbers<[1], [1], [0], [0], [0, 0, 1, 0], [], []>} : vector<10x32xf32>, vector<40x32xf32>, vector<10x40xf32> -> vector<10x40xf32>
    %cst_27 = arith.constant 0.353553385 : f32
    %64 = vector.broadcast %cst_27 : f32 to vector<10x40xf32>
    %65 = arith.mulf %63, %64 : vector<10x40xf32>
    %66 = arith.addf %65, %3 : vector<10x40xf32>
    %cst_28 = arith.constant dense<0xFF800000> : vector<10xf32>
    %67 = vector.multi_reduction <maximumf>, %66, %cst_28 [1] : vector<10x40xf32> to vector<10xf32>
    %68 = vector.shape_cast %67 : vector<10xf32> to vector<10x1xf32>
    %69 = vector.broadcast %68 : vector<10x1xf32> to vector<10x40xf32>
    %70 = arith.subf %66, %69 : vector<10x40xf32>
    %71 = math.exp %70 : vector<10x40xf32>
    %cst_29 = arith.constant dense<0.000000e+00> : vector<10x40xf32>
    %72 = tpu.matmul %71, %4, %cst_29 {dimension_numbers = #tpu.dot_dimension_numbers<[1], [0], [0], [1], [0, 0, 1, 1], [], []>} : vector<10x40xf32>, vector<40x40xf32>, vector<10x40xf32> -> vector<10x40xf32>
    %73 = arith.divf %71, %72 : vector<10x40xf32>
    %cst_30 = arith.constant dense<0.000000e+00> : vector<10x32xf32>
    %74 = tpu.matmul %73, %62, %cst_30 {dimension_numbers = #tpu.dot_dimension_numbers<[1], [0], [0], [1], [0, 0, 1, 1], [], []>} : vector<10x40xf32>, vector<40x32xf32>, vector<10x32xf32> -> vector<10x32xf32>
    %cst_31 = arith.constant dense<0.000000e+00> : vector<10x32xf32>
    %75 = tpu.matmul %74, %18, %cst_31 {dimension_numbers = #tpu.dot_dimension_numbers<[1], [0], [0], [1], [0, 0, 1, 1], [], []>} : vector<10x32xf32>, vector<32x32xf32>, vector<10x32xf32> -> vector<10x32xf32>
    %76 = arith.addf %10, %75 : vector<10x32xf32>
    %77 = vector.broadcast %26 : vector<1x32xf32> to vector<10x32xf32>
    %78 = arith.addf %76, %77 : vector<10x32xf32>
    %cst_32 = arith.constant dense<0.000000e+00> : vector<10xf32>
    %79 = vector.multi_reduction <add>, %78, %cst_32 [1] : vector<10x32xf32> to vector<10xf32>
    %80 = vector.shape_cast %79 : vector<10xf32> to vector<10x1xf32>
    %cst_33 = arith.constant 3.200000e+01 : f32
    %81 = vector.broadcast %cst_33 : f32 to vector<10x1xf32>
    %82 = arith.divf %80, %81 : vector<10x1xf32>
    %83 = arith.mulf %78, %78 : vector<10x32xf32>
    %cst_34 = arith.constant dense<0.000000e+00> : vector<10xf32>
    %84 = vector.multi_reduction <add>, %83, %cst_34 [1] : vector<10x32xf32> to vector<10xf32>
    %85 = vector.shape_cast %84 : vector<10xf32> to vector<10x1xf32>
    %cst_35 = arith.constant 3.200000e+01 : f32
    %86 = vector.broadcast %cst_35 : f32 to vector<10x1xf32>
    %87 = arith.divf %85, %86 : vector<10x1xf32>
    %88 = vector.broadcast %82 : vector<10x1xf32> to vector<10x32xf32>
    %89 = arith.subf %78, %88 : vector<10x32xf32>
    %90 = arith.mulf %82, %82 : vector<10x1xf32>
    %91 = arith.subf %87, %90 : vector<10x1xf32>
    %cst_36 = arith.constant 9.99999997E-7 : f32
    %92 = vector.broadcast %cst_36 : f32 to vector<10x1xf32>
    %93 = arith.addf %91, %92 : vector<10x1xf32>
    %94 = math.rsqrt %93 : vector<10x1xf32>
    %95 = vector.broadcast %94 : vector<10x1xf32> to vector<10x32xf32>
    %96 = arith.mulf %89, %95 : vector<10x32xf32>
    %97 = vector.broadcast %27 : vector<1x32xf32> to vector<10x32xf32>
    %98 = arith.mulf %96, %97 : vector<10x32xf32>
    %99 = vector.broadcast %28 : vector<1x32xf32> to vector<10x32xf32>
    %100 = arith.addf %98, %99 : vector<10x32xf32>
    %cst_37 = arith.constant dense<0.000000e+00> : vector<10x128xf32>
    %101 = tpu.matmul %100, %20, %cst_37 {dimension_numbers = #tpu.dot_dimension_numbers<[1], [0], [0], [1], [0, 0, 1, 1], [], []>} : vector<10x32xf32>, vector<32x128xf32>, vector<10x128xf32> -> vector<10x128xf32>
    %102 = vector.broadcast %29 : vector<1x128xf32> to vector<10x128xf32>
    %103 = arith.addf %101, %102 : vector<10x128xf32>
    %cst_38 = arith.constant 5.000000e-01 : f32
    %104 = vector.broadcast %cst_38 : f32 to vector<10x128xf32>
    %105 = arith.mulf %104, %103 : vector<10x128xf32>
    %cst_39 = arith.constant 4.471500e-02 : f32
    %106 = vector.broadcast %cst_39 : f32 to vector<10x128xf32>
    %107 = arith.mulf %106, %103 : vector<10x128xf32>
    %108 = arith.mulf %107, %103 : vector<10x128xf32>
    %109 = arith.mulf %108, %103 : vector<10x128xf32>
    %110 = arith.addf %103, %109 : vector<10x128xf32>
    %cst_40 = arith.constant 0.797884583 : f32
    %111 = vector.broadcast %cst_40 : f32 to vector<10x128xf32>
    %112 = arith.mulf %111, %110 : vector<10x128xf32>
    %113 = math.tanh %112 : vector<10x128xf32>
    %cst_41 = arith.constant 1.000000e+00 : f32
    %114 = vector.broadcast %cst_41 : f32 to vector<10x128xf32>
    %115 = arith.addf %114, %113 : vector<10x128xf32>
    %116 = arith.mulf %105, %115 : vector<10x128xf32>
    %cst_42 = arith.constant dense<0.000000e+00> : vector<10x32xf32>
    %117 = tpu.matmul %116, %22, %cst_42 {dimension_numbers = #tpu.dot_dimension_numbers<[1], [0], [0], [1], [0, 0, 1, 1], [], []>} : vector<10x128xf32>, vector<128x32xf32>, vector<10x32xf32> -> vector<10x32xf32>
    %118 = arith.addf %78, %117 : vector<10x32xf32>
    %119 = vector.broadcast %30 : vector<1x32xf32> to vector<10x32xf32>
    %120 = arith.addf %118, %119 : vector<10x32xf32>
    %cst_43 = arith.constant dense<0.000000e+00> : vector<10xf32>
    %121 = vector.multi_reduction <add>, %120, %cst_43 [1] : vector<10x32xf32> to vector<10xf32>
    %122 = vector.shape_cast %121 : vector<10xf32> to vector<10x1xf32>
    %cst_44 = arith.constant 3.200000e+01 : f32
    %123 = vector.broadcast %cst_44 : f32 to vector<10x1xf32>
    %124 = arith.divf %122, %123 : vector<10x1xf32>
    %125 = arith.mulf %120, %120 : vector<10x32xf32>
    %cst_45 = arith.constant dense<0.000000e+00> : vector<10xf32>
    %126 = vector.multi_reduction <add>, %125, %cst_45 [1] : vector<10x32xf32> to vector<10xf32>
    %127 = vector.shape_cast %126 : vector<10xf32> to vector<10x1xf32>
    %cst_46 = arith.constant 3.200000e+01 : f32
    %128 = vector.broadcast %cst_46 : f32 to vector<10x1xf32>
    %129 = arith.divf %127, %128 : vector<10x1xf32>
    %130 = vector.broadcast %124 : vector<10x1xf32> to vector<10x32xf32>
    %131 = arith.subf %120, %130 : vector<10x32xf32>
    %132 = arith.mulf %124, %124 : vector<10x1xf32>
    %133 = arith.subf %129, %132 : vector<10x1xf32>
    %cst_47 = arith.constant 9.99999997E-7 : f32
    %134 = vector.broadcast %cst_47 : f32 to vector<10x1xf32>
    %135 = arith.addf %133, %134 : vector<10x1xf32>
    %136 = math.rsqrt %135 : vector<10x1xf32>
    %137 = vector.broadcast %136 : vector<10x1xf32> to vector<10x32xf32>
    %138 = arith.mulf %131, %137 : vector<10x32xf32>
    %139 = vector.broadcast %5 : vector<1x32xf32> to vector<10x32xf32>
    %140 = arith.mulf %138, %139 : vector<10x32xf32>
    %141 = vector.broadcast %6 : vector<1x32xf32> to vector<10x32xf32>
    %142 = arith.addf %140, %141 : vector<10x32xf32>
    %c1 = arith.constant 1 : index
    %c0_48 = arith.constant 0 : index
    %c0_49 = arith.constant 0 : index
    %c0_50 = arith.constant 0 : index
    %143 = vector.load %arg2[%c1, %c0_48, %c0_49, %c0_50] : memref<4x3x32x128xf32, #tpu.memory_space<vmem>>, vector<1x3x32x128xf32>
    %144 = vector.shape_cast %143 : vector<1x3x32x128xf32> to vector<3x32x128xf32>
    %c1_51 = arith.constant 1 : index
    %c0_52 = arith.constant 0 : index
    %c0_53 = arith.constant 0 : index
    %145 = vector.load %arg4[%c1_51, %c0_52, %c0_53] : memref<4x8x128xf32, #tpu.memory_space<vmem>>, vector<1x8x128xf32>
    %146 = vector.shape_cast %145 : vector<1x8x128xf32> to vector<8x128xf32>
    %147 = vector.extract_strided_slice %144 {offsets = [0, 0, 0], sizes = [1, 32, 96], strides = [1, 1, 1]} : vector<3x32x128xf32> to vector<1x32x96xf32>
    %148 = vector.shape_cast %147 : vector<1x32x96xf32> to vector<32x96xf32>
    %149 = vector.extract_strided_slice %144 {offsets = [1, 0, 0], sizes = [1, 32, 32], strides = [1, 1, 1]} : vector<3x32x128xf32> to vector<1x32x32xf32>
    %150 = vector.shape_cast %149 : vector<1x32x32xf32> to vector<32x32xf32>
    %151 = vector.extract_strided_slice %144 {offsets = [2, 0, 0], sizes = [1, 32, 128], strides = [1, 1, 1]} : vector<3x32x128xf32> to vector<1x32x128xf32>
    %152 = vector.shape_cast %151 : vector<1x32x128xf32> to vector<32x128xf32>
    %c1_54 = arith.constant 1 : index
    %c0_55 = arith.constant 0 : index
    %c0_56 = arith.constant 0 : index
    %153 = vector.load %arg3[%c1_54, %c0_55, %c0_56] : memref<4x128x32xf32, #tpu.memory_space<vmem>>, vector<1x128x32xf32>
    %154 = vector.shape_cast %153 : vector<1x128x32xf32> to vector<128x32xf32>
    %155 = vector.extract_strided_slice %146 {offsets = [0, 0], sizes = [1, 32], strides = [1, 1]} : vector<8x128xf32> to vector<1x32xf32>
    %156 = vector.extract_strided_slice %146 {offsets = [1, 0], sizes = [1, 32], strides = [1, 1]} : vector<8x128xf32> to vector<1x32xf32>
    %157 = vector.extract_strided_slice %146 {offsets = [2, 0], sizes = [1, 96], strides = [1, 1]} : vector<8x128xf32> to vector<1x96xf32>
    %158 = vector.extract_strided_slice %146 {offsets = [3, 0], sizes = [1, 32], strides = [1, 1]} : vector<8x128xf32> to vector<1x32xf32>
    %159 = vector.extract_strided_slice %146 {offsets = [4, 0], sizes = [1, 32], strides = [1, 1]} : vector<8x128xf32> to vector<1x32xf32>
    %160 = vector.extract_strided_slice %146 {offsets = [5, 0], sizes = [1, 32], strides = [1, 1]} : vector<8x128xf32> to vector<1x32xf32>
    %161 = vector.extract_strided_slice %146 {offsets = [6, 0], sizes = [1, 128], strides = [1, 1]} : vector<8x128xf32> to vector<1x128xf32>
    %162 = vector.extract_strided_slice %146 {offsets = [7, 0], sizes = [1, 32], strides = [1, 1]} : vector<8x128xf32> to vector<1x32xf32>
    %cst_57 = arith.constant dense<0.000000e+00> : vector<10xf32>
    %163 = vector.multi_reduction <add>, %120, %cst_57 [1] : vector<10x32xf32> to vector<10xf32>
    %164 = vector.shape_cast %163 : vector<10xf32> to vector<10x1xf32>
    %cst_58 = arith.constant 3.200000e+01 : f32
    %165 = vector.broadcast %cst_58 : f32 to vector<10x1xf32>
    %166 = arith.divf %164, %165 : vector<10x1xf32>
    %167 = arith.mulf %120, %120 : vector<10x32xf32>
    %cst_59 = arith.constant dense<0.000000e+00> : vector<10xf32>
    %168 = vector.multi_reduction <add>, %167, %cst_59 [1] : vector<10x32xf32> to vector<10xf32>
    %169 = vector.shape_cast %168 : vector<10xf32> to vector<10x1xf32>
    %cst_60 = arith.constant 3.200000e+01 : f32
    %170 = vector.broadcast %cst_60 : f32 to vector<10x1xf32>
    %171 = arith.divf %169, %170 : vector<10x1xf32>
    %172 = vector.broadcast %166 : vector<10x1xf32> to vector<10x32xf32>
    %173 = arith.subf %120, %172 : vector<10x32xf32>
    %174 = arith.mulf %166, %166 : vector<10x1xf32>
    %175 = arith.subf %171, %174 : vector<10x1xf32>
    %cst_61 = arith.constant 9.99999997E-7 : f32
    %176 = vector.broadcast %cst_61 : f32 to vector<10x1xf32>
    %177 = arith.addf %175, %176 : vector<10x1xf32>
    %178 = math.rsqrt %177 : vector<10x1xf32>
    %179 = vector.broadcast %178 : vector<10x1xf32> to vector<10x32xf32>
    %180 = arith.mulf %173, %179 : vector<10x32xf32>
    %181 = vector.broadcast %155 : vector<1x32xf32> to vector<10x32xf32>
    %182 = arith.mulf %180, %181 : vector<10x32xf32>
    %183 = vector.broadcast %156 : vector<1x32xf32> to vector<10x32xf32>
    %184 = arith.addf %182, %183 : vector<10x32xf32>
    %cst_62 = arith.constant dense<0.000000e+00> : vector<10x96xf32>
    %185 = tpu.matmul %184, %148, %cst_62 {dimension_numbers = #tpu.dot_dimension_numbers<[1], [0], [0], [1], [0, 0, 1, 1], [], []>} : vector<10x32xf32>, vector<32x96xf32>, vector<10x96xf32> -> vector<10x96xf32>
    %186 = vector.broadcast %157 : vector<1x96xf32> to vector<10x96xf32>
    %187 = arith.addf %185, %186 : vector<10x96xf32>
    %188 = vector.extract_strided_slice %187 {offsets = [0, 0], sizes = [10, 32], strides = [1, 1]} : vector<10x96xf32> to vector<10x32xf32>
    %189 = vector.extract_strided_slice %187 {offsets = [0, 32], sizes = [10, 32], strides = [1, 1]} : vector<10x96xf32> to vector<10x32xf32>
    %190 = vector.extract_strided_slice %187 {offsets = [0, 64], sizes = [10, 32], strides = [1, 1]} : vector<10x96xf32> to vector<10x32xf32>
    %191 = tpu.concatenate %189, %189, %189, %189 in 0 : vector<10x32xf32>, vector<10x32xf32>, vector<10x32xf32>, vector<10x32xf32> -> vector<40x32xf32>
    %192 = arith.mulf %2, %191 : vector<40x32xf32>
    %193 = tpu.concatenate %190, %190, %190, %190 in 0 : vector<10x32xf32>, vector<10x32xf32>, vector<10x32xf32>, vector<10x32xf32> -> vector<40x32xf32>
    %194 = arith.mulf %2, %193 : vector<40x32xf32>
    %cst_63 = arith.constant dense<0.000000e+00> : vector<10x40xf32>
    %195 = tpu.matmul %188, %192, %cst_63 {dimension_numbers = #tpu.dot_dimension_numbers<[1], [1], [0], [0], [0, 0, 1, 0], [], []>} : vector<10x32xf32>, vector<40x32xf32>, vector<10x40xf32> -> vector<10x40xf32>
    %cst_64 = arith.constant 0.353553385 : f32
    %196 = vector.broadcast %cst_64 : f32 to vector<10x40xf32>
    %197 = arith.mulf %195, %196 : vector<10x40xf32>
    %198 = arith.addf %197, %3 : vector<10x40xf32>
    %cst_65 = arith.constant dense<0xFF800000> : vector<10xf32>
    %199 = vector.multi_reduction <maximumf>, %198, %cst_65 [1] : vector<10x40xf32> to vector<10xf32>
    %200 = vector.shape_cast %199 : vector<10xf32> to vector<10x1xf32>
    %201 = vector.broadcast %200 : vector<10x1xf32> to vector<10x40xf32>
    %202 = arith.subf %198, %201 : vector<10x40xf32>
    %203 = math.exp %202 : vector<10x40xf32>
    %cst_66 = arith.constant dense<0.000000e+00> : vector<10x40xf32>
    %204 = tpu.matmul %203, %4, %cst_66 {dimension_numbers = #tpu.dot_dimension_numbers<[1], [0], [0], [1], [0, 0, 1, 1], [], []>} : vector<10x40xf32>, vector<40x40xf32>, vector<10x40xf32> -> vector<10x40xf32>
    %205 = arith.divf %203, %204 : vector<10x40xf32>
    %cst_67 = arith.constant dense<0.000000e+00> : vector<10x32xf32>
    %206 = tpu.matmul %205, %194, %cst_67 {dimension_numbers = #tpu.dot_dimension_numbers<[1], [0], [0], [1], [0, 0, 1, 1], [], []>} : vector<10x40xf32>, vector<40x32xf32>, vector<10x32xf32> -> vector<10x32xf32>
    %cst_68 = arith.constant dense<0.000000e+00> : vector<10x32xf32>
    %207 = tpu.matmul %206, %150, %cst_68 {dimension_numbers = #tpu.dot_dimension_numbers<[1], [0], [0], [1], [0, 0, 1, 1], [], []>} : vector<10x32xf32>, vector<32x32xf32>, vector<10x32xf32> -> vector<10x32xf32>
    %208 = arith.addf %120, %207 : vector<10x32xf32>
    %209 = vector.broadcast %158 : vector<1x32xf32> to vector<10x32xf32>
    %210 = arith.addf %208, %209 : vector<10x32xf32>
    %cst_69 = arith.constant dense<0.000000e+00> : vector<10xf32>
    %211 = vector.multi_reduction <add>, %210, %cst_69 [1] : vector<10x32xf32> to vector<10xf32>
    %212 = vector.shape_cast %211 : vector<10xf32> to vector<10x1xf32>
    %cst_70 = arith.constant 3.200000e+01 : f32
    %213 = vector.broadcast %cst_70 : f32 to vector<10x1xf32>
    %214 = arith.divf %212, %213 : vector<10x1xf32>
    %215 = arith.mulf %210, %210 : vector<10x32xf32>
    %cst_71 = arith.constant dense<0.000000e+00> : vector<10xf32>
    %216 = vector.multi_reduction <add>, %215, %cst_71 [1] : vector<10x32xf32> to vector<10xf32>
    %217 = vector.shape_cast %216 : vector<10xf32> to vector<10x1xf32>
    %cst_72 = arith.constant 3.200000e+01 : f32
    %218 = vector.broadcast %cst_72 : f32 to vector<10x1xf32>
    %219 = arith.divf %217, %218 : vector<10x1xf32>
    %220 = vector.broadcast %214 : vector<10x1xf32> to vector<10x32xf32>
    %221 = arith.subf %210, %220 : vector<10x32xf32>
    %222 = arith.mulf %214, %214 : vector<10x1xf32>
    %223 = arith.subf %219, %222 : vector<10x1xf32>
    %cst_73 = arith.constant 9.99999997E-7 : f32
    %224 = vector.broadcast %cst_73 : f32 to vector<10x1xf32>
    %225 = arith.addf %223, %224 : vector<10x1xf32>
    %226 = math.rsqrt %225 : vector<10x1xf32>
    %227 = vector.broadcast %226 : vector<10x1xf32> to vector<10x32xf32>
    %228 = arith.mulf %221, %227 : vector<10x32xf32>
    %229 = vector.broadcast %159 : vector<1x32xf32> to vector<10x32xf32>
    %230 = arith.mulf %228, %229 : vector<10x32xf32>
    %231 = vector.broadcast %160 : vector<1x32xf32> to vector<10x32xf32>
    %232 = arith.addf %230, %231 : vector<10x32xf32>
    %cst_74 = arith.constant dense<0.000000e+00> : vector<10x128xf32>
    %233 = tpu.matmul %232, %152, %cst_74 {dimension_numbers = #tpu.dot_dimension_numbers<[1], [0], [0], [1], [0, 0, 1, 1], [], []>} : vector<10x32xf32>, vector<32x128xf32>, vector<10x128xf32> -> vector<10x128xf32>
    %234 = vector.broadcast %161 : vector<1x128xf32> to vector<10x128xf32>
    %235 = arith.addf %233, %234 : vector<10x128xf32>
    %cst_75 = arith.constant 5.000000e-01 : f32
    %236 = vector.broadcast %cst_75 : f32 to vector<10x128xf32>
    %237 = arith.mulf %236, %235 : vector<10x128xf32>
    %cst_76 = arith.constant 4.471500e-02 : f32
    %238 = vector.broadcast %cst_76 : f32 to vector<10x128xf32>
    %239 = arith.mulf %238, %235 : vector<10x128xf32>
    %240 = arith.mulf %239, %235 : vector<10x128xf32>
    %241 = arith.mulf %240, %235 : vector<10x128xf32>
    %242 = arith.addf %235, %241 : vector<10x128xf32>
    %cst_77 = arith.constant 0.797884583 : f32
    %243 = vector.broadcast %cst_77 : f32 to vector<10x128xf32>
    %244 = arith.mulf %243, %242 : vector<10x128xf32>
    %245 = math.tanh %244 : vector<10x128xf32>
    %cst_78 = arith.constant 1.000000e+00 : f32
    %246 = vector.broadcast %cst_78 : f32 to vector<10x128xf32>
    %247 = arith.addf %246, %245 : vector<10x128xf32>
    %248 = arith.mulf %237, %247 : vector<10x128xf32>
    %cst_79 = arith.constant dense<0.000000e+00> : vector<10x32xf32>
    %249 = tpu.matmul %248, %154, %cst_79 {dimension_numbers = #tpu.dot_dimension_numbers<[1], [0], [0], [1], [0, 0, 1, 1], [], []>} : vector<10x128xf32>, vector<128x32xf32>, vector<10x32xf32> -> vector<10x32xf32>
    %250 = arith.addf %210, %249 : vector<10x32xf32>
    %251 = vector.broadcast %162 : vector<1x32xf32> to vector<10x32xf32>
    %252 = arith.addf %250, %251 : vector<10x32xf32>
    %cst_80 = arith.constant dense<0.000000e+00> : vector<10xf32>
    %253 = vector.multi_reduction <add>, %252, %cst_80 [1] : vector<10x32xf32> to vector<10xf32>
    %254 = vector.shape_cast %253 : vector<10xf32> to vector<10x1xf32>
    %cst_81 = arith.constant 3.200000e+01 : f32
    %255 = vector.broadcast %cst_81 : f32 to vector<10x1xf32>
    %256 = arith.divf %254, %255 : vector<10x1xf32>
    %257 = arith.mulf %252, %252 : vector<10x32xf32>
    %cst_82 = arith.constant dense<0.000000e+00> : vector<10xf32>
    %258 = vector.multi_reduction <add>, %257, %cst_82 [1] : vector<10x32xf32> to vector<10xf32>
    %259 = vector.shape_cast %258 : vector<10xf32> to vector<10x1xf32>
    %cst_83 = arith.constant 3.200000e+01 : f32
    %260 = vector.broadcast %cst_83 : f32 to vector<10x1xf32>
    %261 = arith.divf %259, %260 : vector<10x1xf32>
    %262 = vector.broadcast %256 : vector<10x1xf32> to vector<10x32xf32>
    %263 = arith.subf %252, %262 : vector<10x32xf32>
    %264 = arith.mulf %256, %256 : vector<10x1xf32>
    %265 = arith.subf %261, %264 : vector<10x1xf32>
    %cst_84 = arith.constant 9.99999997E-7 : f32
    %266 = vector.broadcast %cst_84 : f32 to vector<10x1xf32>
    %267 = arith.addf %265, %266 : vector<10x1xf32>
    %268 = math.rsqrt %267 : vector<10x1xf32>
    %269 = vector.broadcast %268 : vector<10x1xf32> to vector<10x32xf32>
    %270 = arith.mulf %263, %269 : vector<10x32xf32>
    %271 = vector.broadcast %5 : vector<1x32xf32> to vector<10x32xf32>
    %272 = arith.mulf %270, %271 : vector<10x32xf32>
    %273 = vector.broadcast %6 : vector<1x32xf32> to vector<10x32xf32>
    %274 = arith.addf %272, %273 : vector<10x32xf32>
    %c2 = arith.constant 2 : index
    %c0_85 = arith.constant 0 : index
    %c0_86 = arith.constant 0 : index
    %c0_87 = arith.constant 0 : index
    %275 = vector.load %arg2[%c2, %c0_85, %c0_86, %c0_87] : memref<4x3x32x128xf32, #tpu.memory_space<vmem>>, vector<1x3x32x128xf32>
    %276 = vector.shape_cast %275 : vector<1x3x32x128xf32> to vector<3x32x128xf32>
    %c2_88 = arith.constant 2 : index
    %c0_89 = arith.constant 0 : index
    %c0_90 = arith.constant 0 : index
    %277 = vector.load %arg4[%c2_88, %c0_89, %c0_90] : memref<4x8x128xf32, #tpu.memory_space<vmem>>, vector<1x8x128xf32>
    %278 = vector.shape_cast %277 : vector<1x8x128xf32> to vector<8x128xf32>
    %279 = vector.extract_strided_slice %276 {offsets = [0, 0, 0], sizes = [1, 32, 96], strides = [1, 1, 1]} : vector<3x32x128xf32> to vector<1x32x96xf32>
    %280 = vector.shape_cast %279 : vector<1x32x96xf32> to vector<32x96xf32>
    %281 = vector.extract_strided_slice %276 {offsets = [1, 0, 0], sizes = [1, 32, 32], strides = [1, 1, 1]} : vector<3x32x128xf32> to vector<1x32x32xf32>
    %282 = vector.shape_cast %281 : vector<1x32x32xf32> to vector<32x32xf32>
    %283 = vector.extract_strided_slice %276 {offsets = [2, 0, 0], sizes = [1, 32, 128], strides = [1, 1, 1]} : vector<3x32x128xf32> to vector<1x32x128xf32>
    %284 = vector.shape_cast %283 : vector<1x32x128xf32> to vector<32x128xf32>
    %c2_91 = arith.constant 2 : index
    %c0_92 = arith.constant 0 : index
    %c0_93 = arith.constant 0 : index
    %285 = vector.load %arg3[%c2_91, %c0_92, %c0_93] : memref<4x128x32xf32, #tpu.memory_space<vmem>>, vector<1x128x32xf32>
    %286 = vector.shape_cast %285 : vector<1x128x32xf32> to vector<128x32xf32>
    %287 = vector.extract_strided_slice %278 {offsets = [0, 0], sizes = [1, 32], strides = [1, 1]} : vector<8x128xf32> to vector<1x32xf32>
    %288 = vector.extract_strided_slice %278 {offsets = [1, 0], sizes = [1, 32], strides = [1, 1]} : vector<8x128xf32> to vector<1x32xf32>
    %289 = vector.extract_strided_slice %278 {offsets = [2, 0], sizes = [1, 96], strides = [1, 1]} : vector<8x128xf32> to vector<1x96xf32>
    %290 = vector.extract_strided_slice %278 {offsets = [3, 0], sizes = [1, 32], strides = [1, 1]} : vector<8x128xf32> to vector<1x32xf32>
    %291 = vector.extract_strided_slice %278 {offsets = [4, 0], sizes = [1, 32], strides = [1, 1]} : vector<8x128xf32> to vector<1x32xf32>
    %292 = vector.extract_strided_slice %278 {offsets = [5, 0], sizes = [1, 32], strides = [1, 1]} : vector<8x128xf32> to vector<1x32xf32>
    %293 = vector.extract_strided_slice %278 {offsets = [6, 0], sizes = [1, 128], strides = [1, 1]} : vector<8x128xf32> to vector<1x128xf32>
    %294 = vector.extract_strided_slice %278 {offsets = [7, 0], sizes = [1, 32], strides = [1, 1]} : vector<8x128xf32> to vector<1x32xf32>
    %cst_94 = arith.constant dense<0.000000e+00> : vector<10xf32>
    %295 = vector.multi_reduction <add>, %252, %cst_94 [1] : vector<10x32xf32> to vector<10xf32>
    %296 = vector.shape_cast %295 : vector<10xf32> to vector<10x1xf32>
    %cst_95 = arith.constant 3.200000e+01 : f32
    %297 = vector.broadcast %cst_95 : f32 to vector<10x1xf32>
    %298 = arith.divf %296, %297 : vector<10x1xf32>
    %299 = arith.mulf %252, %252 : vector<10x32xf32>
    %cst_96 = arith.constant dense<0.000000e+00> : vector<10xf32>
    %300 = vector.multi_reduction <add>, %299, %cst_96 [1] : vector<10x32xf32> to vector<10xf32>
    %301 = vector.shape_cast %300 : vector<10xf32> to vector<10x1xf32>
    %cst_97 = arith.constant 3.200000e+01 : f32
    %302 = vector.broadcast %cst_97 : f32 to vector<10x1xf32>
    %303 = arith.divf %301, %302 : vector<10x1xf32>
    %304 = vector.broadcast %298 : vector<10x1xf32> to vector<10x32xf32>
    %305 = arith.subf %252, %304 : vector<10x32xf32>
    %306 = arith.mulf %298, %298 : vector<10x1xf32>
    %307 = arith.subf %303, %306 : vector<10x1xf32>
    %cst_98 = arith.constant 9.99999997E-7 : f32
    %308 = vector.broadcast %cst_98 : f32 to vector<10x1xf32>
    %309 = arith.addf %307, %308 : vector<10x1xf32>
    %310 = math.rsqrt %309 : vector<10x1xf32>
    %311 = vector.broadcast %310 : vector<10x1xf32> to vector<10x32xf32>
    %312 = arith.mulf %305, %311 : vector<10x32xf32>
    %313 = vector.broadcast %287 : vector<1x32xf32> to vector<10x32xf32>
    %314 = arith.mulf %312, %313 : vector<10x32xf32>
    %315 = vector.broadcast %288 : vector<1x32xf32> to vector<10x32xf32>
    %316 = arith.addf %314, %315 : vector<10x32xf32>
    %cst_99 = arith.constant dense<0.000000e+00> : vector<10x96xf32>
    %317 = tpu.matmul %316, %280, %cst_99 {dimension_numbers = #tpu.dot_dimension_numbers<[1], [0], [0], [1], [0, 0, 1, 1], [], []>} : vector<10x32xf32>, vector<32x96xf32>, vector<10x96xf32> -> vector<10x96xf32>
    %318 = vector.broadcast %289 : vector<1x96xf32> to vector<10x96xf32>
    %319 = arith.addf %317, %318 : vector<10x96xf32>
    %320 = vector.extract_strided_slice %319 {offsets = [0, 0], sizes = [10, 32], strides = [1, 1]} : vector<10x96xf32> to vector<10x32xf32>
    %321 = vector.extract_strided_slice %319 {offsets = [0, 32], sizes = [10, 32], strides = [1, 1]} : vector<10x96xf32> to vector<10x32xf32>
    %322 = vector.extract_strided_slice %319 {offsets = [0, 64], sizes = [10, 32], strides = [1, 1]} : vector<10x96xf32> to vector<10x32xf32>
    %323 = tpu.concatenate %321, %321, %321, %321 in 0 : vector<10x32xf32>, vector<10x32xf32>, vector<10x32xf32>, vector<10x32xf32> -> vector<40x32xf32>
    %324 = arith.mulf %2, %323 : vector<40x32xf32>
    %325 = tpu.concatenate %322, %322, %322, %322 in 0 : vector<10x32xf32>, vector<10x32xf32>, vector<10x32xf32>, vector<10x32xf32> -> vector<40x32xf32>
    %326 = arith.mulf %2, %325 : vector<40x32xf32>
    %cst_100 = arith.constant dense<0.000000e+00> : vector<10x40xf32>
    %327 = tpu.matmul %320, %324, %cst_100 {dimension_numbers = #tpu.dot_dimension_numbers<[1], [1], [0], [0], [0, 0, 1, 0], [], []>} : vector<10x32xf32>, vector<40x32xf32>, vector<10x40xf32> -> vector<10x40xf32>
    %cst_101 = arith.constant 0.353553385 : f32
    %328 = vector.broadcast %cst_101 : f32 to vector<10x40xf32>
    %329 = arith.mulf %327, %328 : vector<10x40xf32>
    %330 = arith.addf %329, %3 : vector<10x40xf32>
    %cst_102 = arith.constant dense<0xFF800000> : vector<10xf32>
    %331 = vector.multi_reduction <maximumf>, %330, %cst_102 [1] : vector<10x40xf32> to vector<10xf32>
    %332 = vector.shape_cast %331 : vector<10xf32> to vector<10x1xf32>
    %333 = vector.broadcast %332 : vector<10x1xf32> to vector<10x40xf32>
    %334 = arith.subf %330, %333 : vector<10x40xf32>
    %335 = math.exp %334 : vector<10x40xf32>
    %cst_103 = arith.constant dense<0.000000e+00> : vector<10x40xf32>
    %336 = tpu.matmul %335, %4, %cst_103 {dimension_numbers = #tpu.dot_dimension_numbers<[1], [0], [0], [1], [0, 0, 1, 1], [], []>} : vector<10x40xf32>, vector<40x40xf32>, vector<10x40xf32> -> vector<10x40xf32>
    %337 = arith.divf %335, %336 : vector<10x40xf32>
    %cst_104 = arith.constant dense<0.000000e+00> : vector<10x32xf32>
    %338 = tpu.matmul %337, %326, %cst_104 {dimension_numbers = #tpu.dot_dimension_numbers<[1], [0], [0], [1], [0, 0, 1, 1], [], []>} : vector<10x40xf32>, vector<40x32xf32>, vector<10x32xf32> -> vector<10x32xf32>
    %cst_105 = arith.constant dense<0.000000e+00> : vector<10x32xf32>
    %339 = tpu.matmul %338, %282, %cst_105 {dimension_numbers = #tpu.dot_dimension_numbers<[1], [0], [0], [1], [0, 0, 1, 1], [], []>} : vector<10x32xf32>, vector<32x32xf32>, vector<10x32xf32> -> vector<10x32xf32>
    %340 = arith.addf %252, %339 : vector<10x32xf32>
    %341 = vector.broadcast %290 : vector<1x32xf32> to vector<10x32xf32>
    %342 = arith.addf %340, %341 : vector<10x32xf32>
    %cst_106 = arith.constant dense<0.000000e+00> : vector<10xf32>
    %343 = vector.multi_reduction <add>, %342, %cst_106 [1] : vector<10x32xf32> to vector<10xf32>
    %344 = vector.shape_cast %343 : vector<10xf32> to vector<10x1xf32>
    %cst_107 = arith.constant 3.200000e+01 : f32
    %345 = vector.broadcast %cst_107 : f32 to vector<10x1xf32>
    %346 = arith.divf %344, %345 : vector<10x1xf32>
    %347 = arith.mulf %342, %342 : vector<10x32xf32>
    %cst_108 = arith.constant dense<0.000000e+00> : vector<10xf32>
    %348 = vector.multi_reduction <add>, %347, %cst_108 [1] : vector<10x32xf32> to vector<10xf32>
    %349 = vector.shape_cast %348 : vector<10xf32> to vector<10x1xf32>
    %cst_109 = arith.constant 3.200000e+01 : f32
    %350 = vector.broadcast %cst_109 : f32 to vector<10x1xf32>
    %351 = arith.divf %349, %350 : vector<10x1xf32>
    %352 = vector.broadcast %346 : vector<10x1xf32> to vector<10x32xf32>
    %353 = arith.subf %342, %352 : vector<10x32xf32>
    %354 = arith.mulf %346, %346 : vector<10x1xf32>
    %355 = arith.subf %351, %354 : vector<10x1xf32>
    %cst_110 = arith.constant 9.99999997E-7 : f32
    %356 = vector.broadcast %cst_110 : f32 to vector<10x1xf32>
    %357 = arith.addf %355, %356 : vector<10x1xf32>
    %358 = math.rsqrt %357 : vector<10x1xf32>
    %359 = vector.broadcast %358 : vector<10x1xf32> to vector<10x32xf32>
    %360 = arith.mulf %353, %359 : vector<10x32xf32>
    %361 = vector.broadcast %291 : vector<1x32xf32> to vector<10x32xf32>
    %362 = arith.mulf %360, %361 : vector<10x32xf32>
    %363 = vector.broadcast %292 : vector<1x32xf32> to vector<10x32xf32>
    %364 = arith.addf %362, %363 : vector<10x32xf32>
    %cst_111 = arith.constant dense<0.000000e+00> : vector<10x128xf32>
    %365 = tpu.matmul %364, %284, %cst_111 {dimension_numbers = #tpu.dot_dimension_numbers<[1], [0], [0], [1], [0, 0, 1, 1], [], []>} : vector<10x32xf32>, vector<32x128xf32>, vector<10x128xf32> -> vector<10x128xf32>
    %366 = vector.broadcast %293 : vector<1x128xf32> to vector<10x128xf32>
    %367 = arith.addf %365, %366 : vector<10x128xf32>
    %cst_112 = arith.constant 5.000000e-01 : f32
    %368 = vector.broadcast %cst_112 : f32 to vector<10x128xf32>
    %369 = arith.mulf %368, %367 : vector<10x128xf32>
    %cst_113 = arith.constant 4.471500e-02 : f32
    %370 = vector.broadcast %cst_113 : f32 to vector<10x128xf32>
    %371 = arith.mulf %370, %367 : vector<10x128xf32>
    %372 = arith.mulf %371, %367 : vector<10x128xf32>
    %373 = arith.mulf %372, %367 : vector<10x128xf32>
    %374 = arith.addf %367, %373 : vector<10x128xf32>
    %cst_114 = arith.constant 0.797884583 : f32
    %375 = vector.broadcast %cst_114 : f32 to vector<10x128xf32>
    %376 = arith.mulf %375, %374 : vector<10x128xf32>
    %377 = math.tanh %376 : vector<10x128xf32>
    %cst_115 = arith.constant 1.000000e+00 : f32
    %378 = vector.broadcast %cst_115 : f32 to vector<10x128xf32>
    %379 = arith.addf %378, %377 : vector<10x128xf32>
    %380 = arith.mulf %369, %379 : vector<10x128xf32>
    %cst_116 = arith.constant dense<0.000000e+00> : vector<10x32xf32>
    %381 = tpu.matmul %380, %286, %cst_116 {dimension_numbers = #tpu.dot_dimension_numbers<[1], [0], [0], [1], [0, 0, 1, 1], [], []>} : vector<10x128xf32>, vector<128x32xf32>, vector<10x32xf32> -> vector<10x32xf32>
    %382 = arith.addf %342, %381 : vector<10x32xf32>
    %383 = vector.broadcast %294 : vector<1x32xf32> to vector<10x32xf32>
    %384 = arith.addf %382, %383 : vector<10x32xf32>
    %cst_117 = arith.constant dense<0.000000e+00> : vector<10xf32>
    %385 = vector.multi_reduction <add>, %384, %cst_117 [1] : vector<10x32xf32> to vector<10xf32>
    %386 = vector.shape_cast %385 : vector<10xf32> to vector<10x1xf32>
    %cst_118 = arith.constant 3.200000e+01 : f32
    %387 = vector.broadcast %cst_118 : f32 to vector<10x1xf32>
    %388 = arith.divf %386, %387 : vector<10x1xf32>
    %389 = arith.mulf %384, %384 : vector<10x32xf32>
    %cst_119 = arith.constant dense<0.000000e+00> : vector<10xf32>
    %390 = vector.multi_reduction <add>, %389, %cst_119 [1] : vector<10x32xf32> to vector<10xf32>
    %391 = vector.shape_cast %390 : vector<10xf32> to vector<10x1xf32>
    %cst_120 = arith.constant 3.200000e+01 : f32
    %392 = vector.broadcast %cst_120 : f32 to vector<10x1xf32>
    %393 = arith.divf %391, %392 : vector<10x1xf32>
    %394 = vector.broadcast %388 : vector<10x1xf32> to vector<10x32xf32>
    %395 = arith.subf %384, %394 : vector<10x32xf32>
    %396 = arith.mulf %388, %388 : vector<10x1xf32>
    %397 = arith.subf %393, %396 : vector<10x1xf32>
    %cst_121 = arith.constant 9.99999997E-7 : f32
    %398 = vector.broadcast %cst_121 : f32 to vector<10x1xf32>
    %399 = arith.addf %397, %398 : vector<10x1xf32>
    %400 = math.rsqrt %399 : vector<10x1xf32>
    %401 = vector.broadcast %400 : vector<10x1xf32> to vector<10x32xf32>
    %402 = arith.mulf %395, %401 : vector<10x32xf32>
    %403 = vector.broadcast %5 : vector<1x32xf32> to vector<10x32xf32>
    %404 = arith.mulf %402, %403 : vector<10x32xf32>
    %405 = vector.broadcast %6 : vector<1x32xf32> to vector<10x32xf32>
    %406 = arith.addf %404, %405 : vector<10x32xf32>
    %c3 = arith.constant 3 : index
    %c0_122 = arith.constant 0 : index
    %c0_123 = arith.constant 0 : index
    %c0_124 = arith.constant 0 : index
    %407 = vector.load %arg2[%c3, %c0_122, %c0_123, %c0_124] : memref<4x3x32x128xf32, #tpu.memory_space<vmem>>, vector<1x3x32x128xf32>
    %408 = vector.shape_cast %407 : vector<1x3x32x128xf32> to vector<3x32x128xf32>
    %c3_125 = arith.constant 3 : index
    %c0_126 = arith.constant 0 : index
    %c0_127 = arith.constant 0 : index
    %409 = vector.load %arg4[%c3_125, %c0_126, %c0_127] : memref<4x8x128xf32, #tpu.memory_space<vmem>>, vector<1x8x128xf32>
    %410 = vector.shape_cast %409 : vector<1x8x128xf32> to vector<8x128xf32>
    %411 = vector.extract_strided_slice %408 {offsets = [0, 0, 0], sizes = [1, 32, 96], strides = [1, 1, 1]} : vector<3x32x128xf32> to vector<1x32x96xf32>
    %412 = vector.shape_cast %411 : vector<1x32x96xf32> to vector<32x96xf32>
    %413 = vector.extract_strided_slice %408 {offsets = [1, 0, 0], sizes = [1, 32, 32], strides = [1, 1, 1]} : vector<3x32x128xf32> to vector<1x32x32xf32>
    %414 = vector.shape_cast %413 : vector<1x32x32xf32> to vector<32x32xf32>
    %415 = vector.extract_strided_slice %408 {offsets = [2, 0, 0], sizes = [1, 32, 128], strides = [1, 1, 1]} : vector<3x32x128xf32> to vector<1x32x128xf32>
    %416 = vector.shape_cast %415 : vector<1x32x128xf32> to vector<32x128xf32>
    %c3_128 = arith.constant 3 : index
    %c0_129 = arith.constant 0 : index
    %c0_130 = arith.constant 0 : index
    %417 = vector.load %arg3[%c3_128, %c0_129, %c0_130] : memref<4x128x32xf32, #tpu.memory_space<vmem>>, vector<1x128x32xf32>
    %418 = vector.shape_cast %417 : vector<1x128x32xf32> to vector<128x32xf32>
    %419 = vector.extract_strided_slice %410 {offsets = [0, 0], sizes = [1, 32], strides = [1, 1]} : vector<8x128xf32> to vector<1x32xf32>
    %420 = vector.extract_strided_slice %410 {offsets = [1, 0], sizes = [1, 32], strides = [1, 1]} : vector<8x128xf32> to vector<1x32xf32>
    %421 = vector.extract_strided_slice %410 {offsets = [2, 0], sizes = [1, 96], strides = [1, 1]} : vector<8x128xf32> to vector<1x96xf32>
    %422 = vector.extract_strided_slice %410 {offsets = [3, 0], sizes = [1, 32], strides = [1, 1]} : vector<8x128xf32> to vector<1x32xf32>
    %423 = vector.extract_strided_slice %410 {offsets = [4, 0], sizes = [1, 32], strides = [1, 1]} : vector<8x128xf32> to vector<1x32xf32>
    %424 = vector.extract_strided_slice %410 {offsets = [5, 0], sizes = [1, 32], strides = [1, 1]} : vector<8x128xf32> to vector<1x32xf32>
    %425 = vector.extract_strided_slice %410 {offsets = [6, 0], sizes = [1, 128], strides = [1, 1]} : vector<8x128xf32> to vector<1x128xf32>
    %426 = vector.extract_strided_slice %410 {offsets = [7, 0], sizes = [1, 32], strides = [1, 1]} : vector<8x128xf32> to vector<1x32xf32>
    %cst_131 = arith.constant dense<0.000000e+00> : vector<10xf32>
    %427 = vector.multi_reduction <add>, %384, %cst_131 [1] : vector<10x32xf32> to vector<10xf32>
    %428 = vector.shape_cast %427 : vector<10xf32> to vector<10x1xf32>
    %cst_132 = arith.constant 3.200000e+01 : f32
    %429 = vector.broadcast %cst_132 : f32 to vector<10x1xf32>
    %430 = arith.divf %428, %429 : vector<10x1xf32>
    %431 = arith.mulf %384, %384 : vector<10x32xf32>
    %cst_133 = arith.constant dense<0.000000e+00> : vector<10xf32>
    %432 = vector.multi_reduction <add>, %431, %cst_133 [1] : vector<10x32xf32> to vector<10xf32>
    %433 = vector.shape_cast %432 : vector<10xf32> to vector<10x1xf32>
    %cst_134 = arith.constant 3.200000e+01 : f32
    %434 = vector.broadcast %cst_134 : f32 to vector<10x1xf32>
    %435 = arith.divf %433, %434 : vector<10x1xf32>
    %436 = vector.broadcast %430 : vector<10x1xf32> to vector<10x32xf32>
    %437 = arith.subf %384, %436 : vector<10x32xf32>
    %438 = arith.mulf %430, %430 : vector<10x1xf32>
    %439 = arith.subf %435, %438 : vector<10x1xf32>
    %cst_135 = arith.constant 9.99999997E-7 : f32
    %440 = vector.broadcast %cst_135 : f32 to vector<10x1xf32>
    %441 = arith.addf %439, %440 : vector<10x1xf32>
    %442 = math.rsqrt %441 : vector<10x1xf32>
    %443 = vector.broadcast %442 : vector<10x1xf32> to vector<10x32xf32>
    %444 = arith.mulf %437, %443 : vector<10x32xf32>
    %445 = vector.broadcast %419 : vector<1x32xf32> to vector<10x32xf32>
    %446 = arith.mulf %444, %445 : vector<10x32xf32>
    %447 = vector.broadcast %420 : vector<1x32xf32> to vector<10x32xf32>
    %448 = arith.addf %446, %447 : vector<10x32xf32>
    %cst_136 = arith.constant dense<0.000000e+00> : vector<10x96xf32>
    %449 = tpu.matmul %448, %412, %cst_136 {dimension_numbers = #tpu.dot_dimension_numbers<[1], [0], [0], [1], [0, 0, 1, 1], [], []>} : vector<10x32xf32>, vector<32x96xf32>, vector<10x96xf32> -> vector<10x96xf32>
    %450 = vector.broadcast %421 : vector<1x96xf32> to vector<10x96xf32>
    %451 = arith.addf %449, %450 : vector<10x96xf32>
    %452 = vector.extract_strided_slice %451 {offsets = [0, 0], sizes = [10, 32], strides = [1, 1]} : vector<10x96xf32> to vector<10x32xf32>
    %453 = vector.extract_strided_slice %451 {offsets = [0, 32], sizes = [10, 32], strides = [1, 1]} : vector<10x96xf32> to vector<10x32xf32>
    %454 = vector.extract_strided_slice %451 {offsets = [0, 64], sizes = [10, 32], strides = [1, 1]} : vector<10x96xf32> to vector<10x32xf32>
    %455 = tpu.concatenate %453, %453, %453, %453 in 0 : vector<10x32xf32>, vector<10x32xf32>, vector<10x32xf32>, vector<10x32xf32> -> vector<40x32xf32>
    %456 = arith.mulf %2, %455 : vector<40x32xf32>
    %457 = tpu.concatenate %454, %454, %454, %454 in 0 : vector<10x32xf32>, vector<10x32xf32>, vector<10x32xf32>, vector<10x32xf32> -> vector<40x32xf32>
    %458 = arith.mulf %2, %457 : vector<40x32xf32>
    %cst_137 = arith.constant dense<0.000000e+00> : vector<10x40xf32>
    %459 = tpu.matmul %452, %456, %cst_137 {dimension_numbers = #tpu.dot_dimension_numbers<[1], [1], [0], [0], [0, 0, 1, 0], [], []>} : vector<10x32xf32>, vector<40x32xf32>, vector<10x40xf32> -> vector<10x40xf32>
    %cst_138 = arith.constant 0.353553385 : f32
    %460 = vector.broadcast %cst_138 : f32 to vector<10x40xf32>
    %461 = arith.mulf %459, %460 : vector<10x40xf32>
    %462 = arith.addf %461, %3 : vector<10x40xf32>
    %cst_139 = arith.constant dense<0xFF800000> : vector<10xf32>
    %463 = vector.multi_reduction <maximumf>, %462, %cst_139 [1] : vector<10x40xf32> to vector<10xf32>
    %464 = vector.shape_cast %463 : vector<10xf32> to vector<10x1xf32>
    %465 = vector.broadcast %464 : vector<10x1xf32> to vector<10x40xf32>
    %466 = arith.subf %462, %465 : vector<10x40xf32>
    %467 = math.exp %466 : vector<10x40xf32>
    %cst_140 = arith.constant dense<0.000000e+00> : vector<10x40xf32>
    %468 = tpu.matmul %467, %4, %cst_140 {dimension_numbers = #tpu.dot_dimension_numbers<[1], [0], [0], [1], [0, 0, 1, 1], [], []>} : vector<10x40xf32>, vector<40x40xf32>, vector<10x40xf32> -> vector<10x40xf32>
    %469 = arith.divf %467, %468 : vector<10x40xf32>
    %cst_141 = arith.constant dense<0.000000e+00> : vector<10x32xf32>
    %470 = tpu.matmul %469, %458, %cst_141 {dimension_numbers = #tpu.dot_dimension_numbers<[1], [0], [0], [1], [0, 0, 1, 1], [], []>} : vector<10x40xf32>, vector<40x32xf32>, vector<10x32xf32> -> vector<10x32xf32>
    %cst_142 = arith.constant dense<0.000000e+00> : vector<10x32xf32>
    %471 = tpu.matmul %470, %414, %cst_142 {dimension_numbers = #tpu.dot_dimension_numbers<[1], [0], [0], [1], [0, 0, 1, 1], [], []>} : vector<10x32xf32>, vector<32x32xf32>, vector<10x32xf32> -> vector<10x32xf32>
    %472 = arith.addf %384, %471 : vector<10x32xf32>
    %473 = vector.broadcast %422 : vector<1x32xf32> to vector<10x32xf32>
    %474 = arith.addf %472, %473 : vector<10x32xf32>
    %cst_143 = arith.constant dense<0.000000e+00> : vector<10xf32>
    %475 = vector.multi_reduction <add>, %474, %cst_143 [1] : vector<10x32xf32> to vector<10xf32>
    %476 = vector.shape_cast %475 : vector<10xf32> to vector<10x1xf32>
    %cst_144 = arith.constant 3.200000e+01 : f32
    %477 = vector.broadcast %cst_144 : f32 to vector<10x1xf32>
    %478 = arith.divf %476, %477 : vector<10x1xf32>
    %479 = arith.mulf %474, %474 : vector<10x32xf32>
    %cst_145 = arith.constant dense<0.000000e+00> : vector<10xf32>
    %480 = vector.multi_reduction <add>, %479, %cst_145 [1] : vector<10x32xf32> to vector<10xf32>
    %481 = vector.shape_cast %480 : vector<10xf32> to vector<10x1xf32>
    %cst_146 = arith.constant 3.200000e+01 : f32
    %482 = vector.broadcast %cst_146 : f32 to vector<10x1xf32>
    %483 = arith.divf %481, %482 : vector<10x1xf32>
    %484 = vector.broadcast %478 : vector<10x1xf32> to vector<10x32xf32>
    %485 = arith.subf %474, %484 : vector<10x32xf32>
    %486 = arith.mulf %478, %478 : vector<10x1xf32>
    %487 = arith.subf %483, %486 : vector<10x1xf32>
    %cst_147 = arith.constant 9.99999997E-7 : f32
    %488 = vector.broadcast %cst_147 : f32 to vector<10x1xf32>
    %489 = arith.addf %487, %488 : vector<10x1xf32>
    %490 = math.rsqrt %489 : vector<10x1xf32>
    %491 = vector.broadcast %490 : vector<10x1xf32> to vector<10x32xf32>
    %492 = arith.mulf %485, %491 : vector<10x32xf32>
    %493 = vector.broadcast %423 : vector<1x32xf32> to vector<10x32xf32>
    %494 = arith.mulf %492, %493 : vector<10x32xf32>
    %495 = vector.broadcast %424 : vector<1x32xf32> to vector<10x32xf32>
    %496 = arith.addf %494, %495 : vector<10x32xf32>
    %cst_148 = arith.constant dense<0.000000e+00> : vector<10x128xf32>
    %497 = tpu.matmul %496, %416, %cst_148 {dimension_numbers = #tpu.dot_dimension_numbers<[1], [0], [0], [1], [0, 0, 1, 1], [], []>} : vector<10x32xf32>, vector<32x128xf32>, vector<10x128xf32> -> vector<10x128xf32>
    %498 = vector.broadcast %425 : vector<1x128xf32> to vector<10x128xf32>
    %499 = arith.addf %497, %498 : vector<10x128xf32>
    %cst_149 = arith.constant 5.000000e-01 : f32
    %500 = vector.broadcast %cst_149 : f32 to vector<10x128xf32>
    %501 = arith.mulf %500, %499 : vector<10x128xf32>
    %cst_150 = arith.constant 4.471500e-02 : f32
    %502 = vector.broadcast %cst_150 : f32 to vector<10x128xf32>
    %503 = arith.mulf %502, %499 : vector<10x128xf32>
    %504 = arith.mulf %503, %499 : vector<10x128xf32>
    %505 = arith.mulf %504, %499 : vector<10x128xf32>
    %506 = arith.addf %499, %505 : vector<10x128xf32>
    %cst_151 = arith.constant 0.797884583 : f32
    %507 = vector.broadcast %cst_151 : f32 to vector<10x128xf32>
    %508 = arith.mulf %507, %506 : vector<10x128xf32>
    %509 = math.tanh %508 : vector<10x128xf32>
    %cst_152 = arith.constant 1.000000e+00 : f32
    %510 = vector.broadcast %cst_152 : f32 to vector<10x128xf32>
    %511 = arith.addf %510, %509 : vector<10x128xf32>
    %512 = arith.mulf %501, %511 : vector<10x128xf32>
    %cst_153 = arith.constant dense<0.000000e+00> : vector<10x32xf32>
    %513 = tpu.matmul %512, %418, %cst_153 {dimension_numbers = #tpu.dot_dimension_numbers<[1], [0], [0], [1], [0, 0, 1, 1], [], []>} : vector<10x128xf32>, vector<128x32xf32>, vector<10x32xf32> -> vector<10x32xf32>
    %514 = arith.addf %474, %513 : vector<10x32xf32>
    %515 = vector.broadcast %426 : vector<1x32xf32> to vector<10x32xf32>
    %516 = arith.addf %514, %515 : vector<10x32xf32>
    %cst_154 = arith.constant dense<0.000000e+00> : vector<10xf32>
    %517 = vector.multi_reduction <add>, %516, %cst_154 [1] : vector<10x32xf32> to vector<10xf32>
    %518 = vector.shape_cast %517 : vector<10xf32> to vector<10x1xf32>
    %cst_155 = arith.constant 3.200000e+01 : f32
    %519 = vector.broadcast %cst_155 : f32 to vector<10x1xf32>
    %520 = arith.divf %518, %519 : vector<10x1xf32>
    %521 = arith.mulf %516, %516 : vector<10x32xf32>
    %cst_156 = arith.constant dense<0.000000e+00> : vector<10xf32>
    %522 = vector.multi_reduction <add>, %521, %cst_156 [1] : vector<10x32xf32> to vector<10xf32>
    %523 = vector.shape_cast %522 : vector<10xf32> to vector<10x1xf32>
    %cst_157 = arith.constant 3.200000e+01 : f32
    %524 = vector.broadcast %cst_157 : f32 to vector<10x1xf32>
    %525 = arith.divf %523, %524 : vector<10x1xf32>
    %526 = vector.broadcast %520 : vector<10x1xf32> to vector<10x32xf32>
    %527 = arith.subf %516, %526 : vector<10x32xf32>
    %528 = arith.mulf %520, %520 : vector<10x1xf32>
    %529 = arith.subf %525, %528 : vector<10x1xf32>
    %cst_158 = arith.constant 9.99999997E-7 : f32
    %530 = vector.broadcast %cst_158 : f32 to vector<10x1xf32>
    %531 = arith.addf %529, %530 : vector<10x1xf32>
    %532 = math.rsqrt %531 : vector<10x1xf32>
    %533 = vector.broadcast %532 : vector<10x1xf32> to vector<10x32xf32>
    %534 = arith.mulf %527, %533 : vector<10x32xf32>
    %535 = vector.broadcast %5 : vector<1x32xf32> to vector<10x32xf32>
    %536 = arith.mulf %534, %535 : vector<10x32xf32>
    %537 = vector.broadcast %6 : vector<1x32xf32> to vector<10x32xf32>
    %538 = arith.addf %536, %537 : vector<10x32xf32>
    %539 = tpu.concatenate %142, %274, %406, %538 in 1 : vector<10x32xf32>, vector<10x32xf32>, vector<10x32xf32>, vector<10x32xf32> -> vector<10x128xf32>
    %540 = vector.extract_strided_slice %539 {offsets = [0, 0], sizes = [1, 128], strides = [1, 1]} : vector<10x128xf32> to vector<1x128xf32>
    %541 = vector.extract_strided_slice %539 {offsets = [5, 0], sizes = [1, 128], strides = [1, 1]} : vector<10x128xf32> to vector<1x128xf32>
    %542 = tpu.concatenate %540, %541 in 0 : vector<1x128xf32>, vector<1x128xf32> -> vector<2x128xf32>
    %c304 = arith.constant 304 : index
    %c0_159 = arith.constant 0 : index
    %543 = vector.load %arg5[%c304, %c0_159] : memref<456x128xf32, #tpu.memory_space<vmem>>, vector<128x16xf32>
    %cst_160 = arith.constant dense<0.000000e+00> : vector<2x16xf32>
    %544 = tpu.matmul %542, %543, %cst_160 {dimension_numbers = #tpu.dot_dimension_numbers<[1], [0], [0], [1], [0, 0, 1, 1], [], []>} : vector<2x128xf32>, vector<128x16xf32>, vector<2x16xf32> -> vector<2x16xf32>
    %545 = vector.broadcast %7 : vector<1x16xf32> to vector<2x16xf32>
    %546 = arith.addf %544, %545 : vector<2x16xf32>
    %c0_161 = arith.constant 0 : index
    %c0_162 = arith.constant 0 : index
    %547 = vector.load %arg6[%c0_161, %c0_162] : memref<2x16xf32, #tpu.memory_space<vmem>>, vector<2x16xf32>
    tpu.vector_store %arg6[%c0_161, %c0_162], %546 {strides = array<i32>} : memref<2x16xf32, #tpu.memory_space<vmem>>, vector<2x16xf32>,
    return
  }
  func.func @transform_0(%arg0: i32) -> (i32, i32) {
    %c0_i32 = arith.constant 0 : i32
    %c0_i32_0 = arith.constant 0 : i32
    %c0_i32_1 = arith.constant 0 : i32
    return %c0_i32, %c0_i32_0 : i32, i32
  }
  func.func @transform_1(%arg0: i32) -> (i32, i32, i32, i32) {
    %c0_i32 = arith.constant 0 : i32
    %c0_i32_0 = arith.constant 0 : i32
    %c0_i32_1 = arith.constant 0 : i32
    %c0_i32_2 = arith.constant 0 : i32
    %c0_i32_3 = arith.constant 0 : i32
    return %c0_i32, %c0_i32_0, %c0_i32_1, %c0_i32_2 : i32, i32, i32, i32
  }
  func.func @transform_2(%arg0: i32) -> (i32, i32, i32) {
    %c0_i32 = arith.constant 0 : i32
    %c0_i32_0 = arith.constant 0 : i32
    %c0_i32_1 = arith.constant 0 : i32
    %c0_i32_2 = arith.constant 0 : i32
    return %c0_i32, %c0_i32_0, %c0_i32_1 : i32, i32, i32
  }
  func.func @transform_3(%arg0: i32) -> (i32, i32, i32) {
    %c0_i32 = arith.constant 0 : i32
    %c0_i32_0 = arith.constant 0 : i32
    %c0_i32_1 = arith.constant 0 : i32
    %c0_i32_2 = arith.constant 0 : i32
    return %c0_i32, %c0_i32_0, %c0_i32_1 : i32, i32, i32
  }
  func.func @transform_4(%arg0: i32) -> (i32, i32) {
    %c0_i32 = arith.constant 0 : i32
    %c0_i32_0 = arith.constant 0 : i32
    %c0_i32_1 = arith.constant 0 : i32
    return %c0_i32, %c0_i32_0 : i32, i32
  }
  func.func @transform_5(%arg0: i32) -> (i32, i32) {
    %c0_i32 = arith.constant 0 : i32
    %c0_i32_0 = arith.constant 0 : i32
    %c0_i32_1 = arith.constant 0 : i32
    return %c0_i32, %c0_i32_0 : i32, i32
  }
}

</mosaic_0001>

<llo_original>
// kernel: vit_wrapper_forward.1
$region0: #{vit_wrapper_forward.1}
  #allocation0 [shape = 'u32[]', space=smem, size = 0x4, offset = 0x4, fixed_abs, tag = 'smem constant byte address 0x4 - core index']
  #allocation1 [shape = 'u32[144,128]{1,0:T(1,128)}', space=vmem, size = 0x12000, scoped, tag = 'internal scratch']
  %s0 = inlined_call_operand.vmem [shape: f32[10,192], index: 0, kind: input, shape index: {}]
  %s1 = inlined_call_operand.vmem [shape: f32[4,3,32,128], index: 1, kind: input, shape index: {}]
  %s2 = inlined_call_operand.vmem [shape: f32[4,128,32], index: 2, kind: input, shape index: {}]
  %s3 = inlined_call_operand.vmem [shape: f32[4,8,128], index: 3, kind: input, shape index: {}]
  %s4 = inlined_call_operand.vmem [shape: f32[456,128], index: 4, kind: input, shape index: {}]
  %s5 = inlined_call_operand.hbm [shape: f32[2,16], index: 5, kind: output, shape index: {}]
  %s6 = sld [smem:[#allocation0]]
  $region30: #{vit_wrapper_forward.1} parent=0
    _
  %s8 = ssub.s32 1, %s6
  %s9 = scalar_select 0, %s8, %s6
  $region1: #{vit_wrapper_forward.1} parent=0
    #allocation2 [shape = 'u8[1024]{0}', space=vmem, size = 0x400, scoped, tag = 'output window, operand 0, single buffered']
    #allocation3 [shape = 's32[1]{0}', space=sflag, size = 0x4, scoped, tag = 'scoped memory for vit_wrapper_forward.1']
    %10 = vsyncpa [#allocation3], 0
    // Predicated region
    $region2: #{vit_wrapper_forward.1} parent=1 // pred_check
      _
    $region3: #{vit_wrapper_forward.1} parent=1 // pred_check_branch
      %12 = sbr.rel (0) target = $region5
    $region4: #{vit_wrapper_forward.1} parent=1 // pred_region
      _
    $region5: #{vit_wrapper_forward.1} parent=1 // pred_fallthru
      _
    // Predicated region
    $region6: #{vit_wrapper_forward.1} parent=1 // pred_check
      _
    $region7: #{vit_wrapper_forward.1} parent=1 // pred_check_branch
      %14 = sbr.rel (0) target = $region9
    $region8: #{vit_wrapper_forward.1} parent=1 // pred_region
      _
    $region9: #{vit_wrapper_forward.1} parent=1 // pred_fallthru
      _
    // Predicated region
    $region10: #{vit_wrapper_forward.1} parent=1 // pred_check
      _
    $region11: #{vit_wrapper_forward.1} parent=1 // pred_check_branch
      %16 = sbr.rel (0) target = $region13
    $region12: #{vit_wrapper_forward.1} parent=1 // pred_region
      _
    $region13: #{vit_wrapper_forward.1} parent=1 // pred_fallthru
      _
    // Predicated region
    $region14: #{vit_wrapper_forward.1} parent=1 // pred_check
      _
    $region15: #{vit_wrapper_forward.1} parent=1 // pred_check_branch
      %18 = sbr.rel (0) target = $region17
    $region16: #{vit_wrapper_forward.1} parent=1 // pred_region
      _
    $region17: #{vit_wrapper_forward.1} parent=1 // pred_fallthru
      _
    // Predicated region
    $region18: #{vit_wrapper_forward.1} parent=1 // pred_check
      _
    $region19: #{vit_wrapper_forward.1} parent=1 // pred_check_branch
      %20 = sbr.rel (0) target = $region21
    $region20: #{vit_wrapper_forward.1} parent=1 // pred_region
      _
    $region21: #{vit_wrapper_forward.1} parent=1 // pred_fallthru
      _
    %v21 = vld [vmem:[%s4] sm:$0xff]
    %v22 = vld [vmem:[%s4 + $0x8] sm:$0xff]
    %v23 = vld [vmem:[%s4 + $0x10] sm:$0xff]
    %v24 = vld [vmem:[%s4 + $0x18] sm:$0xff]
    %v25 = vld [vmem:[%s4 + $0x20] sm:$0xff]
    %v26 = vld [vmem:[%s4 + $0x28] sm:$0xff]
    %v27 = vld [vmem:[%s4 + $0x30] sm:$0xff]
    %v28 = vld [vmem:[%s4 + $0x38] sm:$0xff]
    %v29 = vld [vmem:[%s4 + $0x40] sm:$0xff]
    %v30 = vld [vmem:[%s4 + $0x48] sm:$0xff]
    %v31 = vld [vmem:[%s4 + $0x50] sm:$0xff]
    %v32 = vld [vmem:[%s4 + $0x58] sm:$0xff]
    %v33 = vld [vmem:[%s4 + $0x60] sm:$0xff]
    %v34 = vld [vmem:[%s4 + $0x68] sm:$0xff]
    %v35 = vld [vmem:[%s4 + $0x70] sm:$0xff]
    %v36 = vld [vmem:[%s4 + $0x78] sm:$0xff]
    %v37 = vld [vmem:[%s4 + $0x80] sm:$0xff]
    %v38 = vld [vmem:[%s4 + $0x88] sm:$0xff]
    %v39 = vld [vmem:[%s4 + $0x90] sm:$0xff]
    %v40 = vld [vmem:[%s4 + $0x98] sm:$0xff]
    %v41 = vld [vmem:[%s4 + $0xa0] sm:$0xff]
    %v42 = vld [vmem:[%s4 + $0xa8] sm:$0xff]
    %v43 = vld [vmem:[%s4 + $0xb0] sm:$0xff]
    %v44 = vld [vmem:[%s4 + $0xb8] sm:$0xff]
    %v45 = vld [vmem:[%s4 + $0xc0] sm:$0xff]
    %v46 = vld [vmem:[%s4 + $0xc8] sm:$0x3]
    %v47 = vld [vmem:[%s4 + $0xd0] sm:$0xff]
    %v48 = vld [vmem:[%s4 + $0xd8] sm:$0xff]
    %v49 = vld [vmem:[%s4 + $0xe0] sm:$0xff]
    %v50 = vld [vmem:[%s4 + $0xe8] sm:$0xff]
    %v51 = vld [vmem:[%s4 + $0xf0] sm:$0xff]
    %v52 = vld [vmem:[%s4 + $0xf8] sm:$0xff]
    %v53 = vld [vmem:[%s4 + $0x100] sm:$0x3]
    %v54 = vld [vmem:[%s4 + $0x108] sm:$0xff]
    %v55 = vld [vmem:[%s4 + $0x110] sm:$0xff]
    %v56 = vld [vmem:[%s4 + $0x118] sm:$0xff]
    %v57 = vld [vmem:[%s4 + $0x120] sm:$0xff]
    %v58 = vld [vmem:[%s4 + $0x128] sm:$0xff]
    %v59 = vld [vmem:[%s4 + $0x1b0] sm:$0x1]
    %v60 = vld [vmem:[%s4 + $0x1b8] sm:$0x1]
    %v61 = vld [vmem:[%s4 + $0x1c0] sm:$0x1]
    %v62 = vld [vmem:[%s0] sm:$0xff]
    %v63 = vld [vmem:[%s0 + $0x8] sm:$0xff]
    %v64 = vld [vmem:[%s0 + $0x10] sm:$0x3]
    %v65 = vld [vmem:[%s0 + $0x18] sm:$0x3]
    %vm66 = vcmask 523264
    %v68 = vsel %vm66, %v63, 0
    %v71 = vsel %vm66, %v65, 0
    %73 = vmatprep.subr.mxu0 0.0
    %74 = vmatpush1.msra.mxu0 %v21
    %75 = vmatprep.subr.mxu0 0.0
    %76 = vmatpush1.msra.mxu0 %v22
    %77 = vmatprep.subr.mxu0 0.0
    %78 = vmatpush1.msra.mxu0 %v23
    %79 = vmatprep.subr.mxu0 0.0
    %80 = vmatpush1.msra.mxu0 %v24
    %81 = vmatprep.subr.mxu0 0.0
    %82 = vmatpush1.msra.mxu0 %v25
    %83 = vmatprep.subr.mxu0 0.0
    %84 = vmatpush1.msra.mxu0 %v26
    %85 = vmatprep.subr.mxu0 0.0
    %86 = vmatpush1.msra.mxu0 %v27
    %87 = vmatprep.subr.mxu0 0.0
    %88 = vmatpush1.msra.mxu0 %v28
    %89 = vmatprep.subr.mxu0 0.0
    %90 = vmatpush1.msra.mxu0 %v29
    %91 = vmatprep.subr.mxu0 0.0
    %92 = vmatpush1.msra.mxu0 %v30
    %93 = vmatprep.subr.mxu0 0.0
    %94 = vmatpush1.msra.mxu0 %v31
    %95 = vmatprep.subr.mxu0 0.0
    %96 = vmatpush1.msra.mxu0 %v32
    %97 = vmatprep.subr.mxu0 0.0
    %98 = vmatpush1.msra.mxu0 %v33
    %99 = vmatprep.subr.mxu0 0.0
    %100 = vmatpush1.msra.mxu0 %v34
    %101 = vmatprep.subr.mxu0 0.0
    %102 = vmatpush1.msra.mxu0 %v35
    %103 = vmatprep.subr.mxu0 0.0
    %104 = vmatpush1.msra.mxu0 %v36
    %105 = vmatprep.subr.mxu0 0.0
    %106 = vmatpush1.msra.mxu0 %v37
    %107 = vmatprep.subr.mxu0 0.0
    %108 = vmatpush1.msra.mxu0 %v38
    %109 = vmatprep.subr.mxu0 0.0
    %110 = vmatpush1.msra.mxu0 %v39
    %111 = vmatprep.subr.mxu0 0.0
    %112 = vmatpush1.msra.mxu0 %v40
    %113 = vmatprep.subr.mxu0 0.0
    %114 = vmatpush1.msra.mxu0 %v41
    %115 = vmatprep.subr.mxu0 0.0
    %116 = vmatpush1.msra.mxu0 %v42
    %117 = vmatprep.subr.mxu0 0.0
    %118 = vmatpush1.msra.mxu0 %v43
    %119 = vmatprep.subr.mxu0 0.0
    %120 = vmatpush1.msra.mxu0 %v44
    %121 = vmatprep.subr.mxu0 0.0
    %122 = vmatpush1.msra.mxu0 0.0
    %123 = vmatprep.subr.mxu0 0.0
    %124 = vmatpush1.msra.mxu0 0.0
    %125 = vmatprep.subr.mxu0 0.0
    %126 = vmatpush1.msra.mxu0 0.0
    %127 = vmatprep.subr.mxu0 0.0
    %128 = vmatpush1.msra.mxu0 0.0
    %129 = vmatprep.subr.mxu0 0.0
    %130 = vmatpush1.msra.mxu0 0.0
    %131 = vmatprep.subr.mxu0 0.0
    %132 = vmatpush1.msra.mxu0 0.0
    %133 = vmatprep.subr.mxu0 0.0
    %134 = vmatpush1.msra.mxu0 0.0
    %135 = vmatprep.subr.mxu0 0.0
    %136 = vmatpush1.msra.mxu0 0.0
    %137 = vmatprep.mubr.f32.mxu0 %v68
    %138 = vmatmul.mubr.f32.gmra.mrb[0].mxu0 %v62
    %v139 = vpop.f32.mrb[0].mxu0
    %v140 = vadd.f32 %v45, %v139
    %v141 = vpop.f32.mrb[0].mxu0
    %142 = vmatprep.mubr.f32.mxu0 %v71
    %143 = vmatmul.mubr.f32.gmra.mrb[0].mxu0 %v64
    %v144 = vpop.f32.mrb[0].mxu0
    %v145 = vadd.f32 %v46, %v144
    %v146 = vpop.f32.mrb[0].mxu0
    %147 = vdwg.mxu0
    %v148 = vld [vmem:[%s1] sm:$0xff]
    %v149 = vld [vmem:[%s1 + $0x8] sm:$0xff]
    %v150 = vld [vmem:[%s1 + $0x10] sm:$0xff]
    %v151 = vld [vmem:[%s1 + $0x18] sm:$0xff]
    %v152 = vld [vmem:[%s1 + $0x20] sm:$0xff]
    %v153 = vld [vmem:[%s1 + $0x28] sm:$0xff]
    %v154 = vld [vmem:[%s1 + $0x30] sm:$0xff]
    %v155 = vld [vmem:[%s1 + $0x38] sm:$0xff]
    %v156 = vld [vmem:[%s1 + $0x40] sm:$0xff]
    %v157 = vld [vmem:[%s1 + $0x48] sm:$0xff]
    %v158 = vld [vmem:[%s1 + $0x50] sm:$0xff]
    %v159 = vld [vmem:[%s1 + $0x58] sm:$0xff]
    %v160 = vld [vmem:[%s3] sm:$0xff]
    %v161 = vld [vmem:[%s2] sm:$0xff]
    %v162 = vld [vmem:[%s2 + $0x8] sm:$0xff]
    %v163 = vld [vmem:[%s2 + $0x10] sm:$0xff]
    %v164 = vld [vmem:[%s2 + $0x18] sm:$0xff]
    %v165 = vld [vmem:[%s2 + $0x20] sm:$0xff]
    %v166 = vld [vmem:[%s2 + $0x28] sm:$0xff]
    %v167 = vld [vmem:[%s2 + $0x30] sm:$0xff]
    %v168 = vld [vmem:[%s2 + $0x38] sm:$0xff]
    %v169 = vld [vmem:[%s2 + $0x40] sm:$0xff]
    %v170 = vld [vmem:[%s2 + $0x48] sm:$0xff]
    %v171 = vld [vmem:[%s2 + $0x50] sm:$0xff]
    %v172 = vld [vmem:[%s2 + $0x58] sm:$0xff]
    %v173 = vld [vmem:[%s2 + $0x60] sm:$0xff]
    %v174 = vld [vmem:[%s2 + $0x68] sm:$0xff]
    %v175 = vld [vmem:[%s2 + $0x70] sm:$0xff]
    %v176 = vld [vmem:[%s2 + $0x78] sm:$0xff]
    %vm177 = vcmask 261120
    %v178 = vsel %vm177, %v140, 0.0
    %179 = vadd.xlane.f32.xlu0 %v178
    %v180 = vpop.xlane.xlu0 %179
    %vm181 = vcmask 254976
    %v182 = vsel %vm181, %v145, 0.0
    %183 = vadd.xlane.f32.xlu0 %v182
    %v184 = vpop.xlane.xlu0 %183
    %v185 = vrcp.pop 32.0
    %v186 = vmul.f32 %v180, %v185
    %v187 = vmul.f32 %v184, %v185
    %v188 = vmul.f32 %v140, %v140
    %v189 = vmul.f32 %v145, %v145
    %v190 = vsel %vm177, %v188, 0.0
    %191 = vadd.xlane.f32.xlu0 %v190
    %v192 = vpop.xlane.xlu0 %191
    %v193 = vsel %vm181, %v189, 0.0
    %194 = vadd.xlane.f32.xlu0 %v193
    %v195 = vpop.xlane.xlu0 %194
    %v196 = vmul.f32 %v192, %v185
    %v197 = vmul.f32 %v195, %v185
    %v198 = vsub.f32 %v140, %v186
    %v199 = vsub.f32 %v145, %v187
    %v200 = vmul.f32 %v186, %v186
    %v201 = vmul.f32 %v187, %v187
    %v202 = vsub.f32 %v196, %v200
    %v203 = vsub.f32 %v197, %v201
    %v204 = vadd.f32 %v202, 1e-06
    %v205 = vadd.f32 %v203, 1e-06
    %v206 = vrsqrt.pop %v204
    %v207 = vrsqrt.pop %v205
    %v208 = vmul.f32 %v198, %v206
    %v209 = vmul.f32 %v199, %v207
    %v210 = vlaneseq
    %v211 = vshrl.u32 %v210, 7
    %v212 = vsub.s32 0, %v211
    %v213 = vrot.slane %v160, %v212
    %v214 = vmul.f32 %v208, %v213
    %v215 = vmul.f32 %v209, %v213
    %v216 = vlaneseq
    %v217 = vshrl.u32 %v216, 7
    %v218 = vsub.s32 1, %v217
    %v219 = vrot.slane %v160, %v218
    %v220 = vadd.f32 %v214, %v219
    %v221 = vadd.f32 %v215, %v219
    %v222 = vlaneseq
    %v223 = vshrl.u32 %v222, 7
    %v224 = vsub.s32 2, %v223
    %v225 = vrot.slane %v160, %v224
    %v227 = vsel %vm177, %v220, 0
    %v230 = vsel %vm177, %v221, 0
    %232 = vmatprep.subr.mxu0 0.0
    %233 = vmatpush1.msra.mxu0 %v148
    %234 = vmatprep.subr.mxu0 0.0
    %235 = vmatpush1.msra.mxu0 %v149
    %236 = vmatprep.subr.mxu0 0.0
    %237 = vmatpush1.msra.mxu0 %v150
    %238 = vmatprep.subr.mxu0 0.0
    %239 = vmatpush1.msra.mxu0 %v151
    %240 = vmatprep.subr.mxu0 0.0
    %241 = vmatpush1.msra.mxu0 0.0
    %242 = vmatprep.subr.mxu0 0.0
    %243 = vmatpush1.msra.mxu0 0.0
    %244 = vmatprep.subr.mxu0 0.0
    %245 = vmatpush1.msra.mxu0 0.0
    %246 = vmatprep.subr.mxu0 0.0
    %247 = vmatpush1.msra.mxu0 0.0
    %248 = vmatprep.subr.mxu0 0.0
    %249 = vmatpush1.msra.mxu0 0.0
    %250 = vmatprep.subr.mxu0 0.0
    %251 = vmatpush1.msra.mxu0 0.0
    %252 = vmatprep.subr.mxu0 0.0
    %253 = vmatpush1.msra.mxu0 0.0
    %254 = vmatprep.subr.mxu0 0.0
    %255 = vmatpush1.msra.mxu0 0.0
    %256 = vmatprep.subr.mxu0 0.0
    %257 = vmatpush1.msra.mxu0 0.0
    %258 = vmatprep.subr.mxu0 0.0
    %259 = vmatpush1.msra.mxu0 0.0
    %260 = vmatprep.subr.mxu0 0.0
    %261 = vmatpush1.msra.mxu0 0.0
    %262 = vmatprep.subr.mxu0 0.0
    %263 = vmatpush1.msra.mxu0 0.0
    %264 = vmatprep.subr.mxu0 0.0
    %265 = vmatpush1.msra.mxu0 0.0
    %266 = vmatprep.subr.mxu0 0.0
    %267 = vmatpush1.msra.mxu0 0.0
    %268 = vmatprep.subr.mxu0 0.0
    %269 = vmatpush1.msra.mxu0 0.0
    %270 = vmatprep.subr.mxu0 0.0
    %271 = vmatpush1.msra.mxu0 0.0
    %272 = vmatprep.subr.mxu0 0.0
    %273 = vmatpush1.msra.mxu0 0.0
    %274 = vmatprep.subr.mxu0 0.0
    %275 = vmatpush1.msra.mxu0 0.0
    %276 = vmatprep.subr.mxu0 0.0
    %277 = vmatpush1.msra.mxu0 0.0
    %278 = vmatprep.subr.mxu0 0.0
    %279 = vmatpush1.msra.mxu0 0.0
    %280 = vmatprep.subr.mxu0 0.0
    %281 = vmatpush1.msra.mxu0 0.0
    %282 = vmatprep.subr.mxu0 0.0
    %283 = vmatpush1.msra.mxu0 0.0
    %284 = vmatprep.subr.mxu0 0.0
    %285 = vmatpush1.msra.mxu0 0.0
    %286 = vmatprep.subr.mxu0 0.0
    %287 = vmatpush1.msra.mxu0 0.0
    %288 = vmatprep.subr.mxu0 0.0
    %289 = vmatpush1.msra.mxu0 0.0
    %290 = vmatprep.subr.mxu0 0.0
    %291 = vmatpush1.msra.mxu0 0.0
    %292 = vmatprep.subr.mxu0 0.0
    %293 = vmatpush1.msra.mxu0 0.0
    %294 = vmatprep.subr.mxu0 0.0
    %295 = vmatpush1.msra.mxu0 0.0
    %296 = vmatprep.mubr.f32.mxu0 0.0
    %297 = vmatmul.mubr.f32.gmra.mrb[0].mxu0 %v227
    %v298 = vpop.f32.mrb[0].mxu0
    %v299 = vadd.f32 %v225, %v298
    %v300 = vpop.f32.mrb[0].mxu0
    %301 = vmatprep.mubr.f32.mxu0 0.0
    %302 = vmatmul.mubr.f32.gmra.mrb[0].mxu0 %v230
    %v303 = vpop.f32.mrb[0].mxu0
    %v304 = vadd.f32 %v225, %v303
    %v305 = vpop.f32.mrb[0].mxu0
    %306 = vdwg.mxu0
    %vm309 = vcmask 1041408
    %v310 = vrot.slane %v299, 6
    %v311 = vrot.slane %v304, 6
    %v312 = vsel %vm309, %v310, %v311
    %vm315 = vcmask 1043456
    %v316 = vrot.slane %v299, 4
    %v317 = vrot.slane %v304, 4
    %v318 = vsel %vm315, %v316, %v317
    %vm321 = vcmask 1045504
    %v322 = vrot.slane %v299, 2
    %v323 = vrot.slane %v304, 2
    %v324 = vsel %vm321, %v322, %v323
    %v326 = vsel %vm309, %v304, %v310
    %v327 = vsel %vm315, %v312, %v316
    %v328 = vsel %vm321, %v318, %v322
    %332 = vrot.lane.b32.xlu0 %v299, 96
    %v333 = vpop.permute.xlu0 %332
    %334 = vrot.lane.b32.xlu0 %v326, 96
    %v335 = vpop.permute.xlu0 %334
    %336 = vrot.lane.b32.xlu0 %v327, 96
    %v337 = vpop.permute.xlu0 %336
    %338 = vrot.lane.b32.xlu0 %v328, 96
    %v339 = vpop.permute.xlu0 %338
    %340 = vrot.lane.b32.xlu0 %v324, 96
    %v341 = vpop.permute.xlu0 %340
    %v347 = vmul.f32 %v47, %v333
    %v348 = vmul.f32 %v48, %v335
    %v349 = vmul.f32 %v49, %v337
    %v350 = vmul.f32 %v50, %v339
    %v351 = vmul.f32 %v51, %v341
    %352 = vrot.lane.b32.xlu0 %v299, 64
    %v353 = vpop.permute.xlu0 %352
    %354 = vrot.lane.b32.xlu0 %v326, 64
    %v355 = vpop.permute.xlu0 %354
    %356 = vrot.lane.b32.xlu0 %v327, 64
    %v357 = vpop.permute.xlu0 %356
    %358 = vrot.lane.b32.xlu0 %v328, 64
    %v359 = vpop.permute.xlu0 %358
    %360 = vrot.lane.b32.xlu0 %v324, 64
    %v361 = vpop.permute.xlu0 %360
    %v367 = vmul.f32 %v47, %v353
    %v368 = vmul.f32 %v48, %v355
    %v369 = vmul.f32 %v49, %v357
    %v370 = vmul.f32 %v50, %v359
    %v371 = vmul.f32 %v51, %v361
    %v372 = vsel %vm177, %v299, 0
    %v374 = vsel %vm177, %v304, 0
    %v377 = vsel %vm177, %v347, 0
    %v380 = vsel %vm177, %v348, 0
    %v383 = vsel %vm177, %v349, 0
    %v386 = vsel %vm177, %v350, 0
    %v389 = vsel %vm177, %v351, 0
    %391 = vmatprep.subr.mxu0 0.0
    %392 = vmatpush1.xpose.msra.mxu0 %v377
    %393 = vmatprep.subr.mxu0 0.0
    %394 = vmatpush1.xpose.msra.mxu0 %v380
    %395 = vmatprep.subr.mxu0 0.0
    %396 = vmatpush1.xpose.msra.mxu0 %v383
    %397 = vmatprep.subr.mxu0 0.0
    %398 = vmatpush1.xpose.msra.mxu0 %v386
    %399 = vmatprep.subr.mxu0 0.0
    %400 = vmatpush1.xpose.msra.mxu0 %v389
    %401 = vmatprep.subr.mxu0 0.0
    %402 = vmatpush1.xpose.msra.mxu0 0.0
    %403 = vmatprep.subr.mxu0 0.0
    %404 = vmatpush1.xpose.msra.mxu0 0.0
    %405 = vmatprep.subr.mxu0 0.0
    %406 = vmatpush1.xpose.msra.mxu0 0.0
    %407 = vmatprep.subr.mxu0 0.0
    %408 = vmatpush1.xpose.msra.mxu0 0.0
    %409 = vmatprep.subr.mxu0 0.0
    %410 = vmatpush1.xpose.msra.mxu0 0.0
    %411 = vmatprep.subr.mxu0 0.0
    %412 = vmatpush1.xpose.msra.mxu0 0.0
    %413 = vmatprep.subr.mxu0 0.0
    %414 = vmatpush1.xpose.msra.mxu0 0.0
    %415 = vmatprep.subr.mxu0 0.0
    %416 = vmatpush1.xpose.msra.mxu0 0.0
    %417 = vmatprep.subr.mxu0 0.0
    %418 = vmatpush1.xpose.msra.mxu0 0.0
    %419 = vmatprep.subr.mxu0 0.0
    %420 = vmatpush1.xpose.msra.mxu0 0.0
    %421 = vmatprep.subr.mxu0 0.0
    %422 = vmatpush1.xpose.msra.mxu0 0.0
    %423 = vmatprep.subr.mxu0 0.0
    %424 = vmatpush1.xpose.msra.mxu0 0.0
    %425 = vmatprep.subr.mxu0 0.0
    %426 = vmatpush1.xpose.msra.mxu0 0.0
    %427 = vmatprep.subr.mxu0 0.0
    %428 = vmatpush1.xpose.msra.mxu0 0.0
    %429 = vmatprep.subr.mxu0 0.0
    %430 = vmatpush1.xpose.msra.mxu0 0.0
    %431 = vmatprep.subr.mxu0 0.0
    %432 = vmatpush1.xpose.msra.mxu0 0.0
    %433 = vmatprep.subr.mxu0 0.0
    %434 = vmatpush1.xpose.msra.mxu0 0.0
    %435 = vmatprep.subr.mxu0 0.0
    %436 = vmatpush1.xpose.msra.mxu0 0.0
    %437 = vmatprep.subr.mxu0 0.0
    %438 = vmatpush1.xpose.msra.mxu0 0.0
    %439 = vmatprep.subr.mxu0 0.0
    %440 = vmatpush1.xpose.msra.mxu0 0.0
    %441 = vmatprep.subr.mxu0 0.0
    %442 = vmatpush1.xpose.msra.mxu0 0.0
    %443 = vmatprep.subr.mxu0 0.0
    %444 = vmatpush1.xpose.msra.mxu0 0.0
    %445 = vmatprep.subr.mxu0 0.0
    %446 = vmatpush1.xpose.msra.mxu0 0.0
    %447 = vmatprep.subr.mxu0 0.0
    %448 = vmatpush1.xpose.msra.mxu0 0.0
    %449 = vmatprep.subr.mxu0 0.0
    %450 = vmatpush1.xpose.msra.mxu0 0.0
    %451 = vmatprep.subr.mxu0 0.0
    %452 = vmatpush1.xpose.msra.mxu0 0.0
    %453 = vmatprep.subr.mxu0 0.0
    %454 = vmatpush1.xpose.msra.mxu0 0.0
    %455 = vmatprep.mubr.f32.mxu0 0.0
    %456 = vmatmul.mubr.f32.gmra.mrb[0].mxu0 %v372
    %v457 = vpop.f32.mrb[0].mxu0
    %v458 = vadd.f32 0.0, %v457
    %v459 = vpop.f32.mrb[0].mxu0
    %460 = vmatprep.mubr.f32.mxu0 0.0
    %461 = vmatmul.mubr.f32.gmra.mrb[0].mxu0 %v374
    %v462 = vpop.f32.mrb[0].mxu0
    %v463 = vadd.f32 0.0, %v462
    %v464 = vpop.f32.mrb[0].mxu0
    %465 = vdwg.mxu0
    %v466 = vmul.f32 %v458, 0.35355338
    %v467 = vmul.f32 %v463, 0.35355338
    %v468 = vadd.f32 %v466, %v52
    %v469 = vadd.f32 %v467, %v53
    %vm470 = vcmask 326656
    %v471 = vsel %vm470, %v468, -inf
    %472 = vmax.xlane.f32.xlu0 %v471
    %v473 = vpop.xlane.xlu0 %472
    %vm474 = vcmask 320512
    %v475 = vsel %vm474, %v469, -inf
    %476 = vmax.xlane.f32.xlu0 %v475
    %v477 = vpop.xlane.xlu0 %476
    %v478 = vsub.f32 %v468, %v473
    %v479 = vsub.f32 %v469, %v477
    %v480 = vmul.f32 %v478, 1.442695
    %v481 = vpow.pop %v480
    %v482 = vmul.f32 %v479, 1.442695
    %v483 = vpow.pop %v482
    %v485 = vsel %vm470, %v481, 0
    %v488 = vsel %vm470, %v483, 0
    %490 = vmatprep.subr.mxu0 0.0
    %491 = vmatpush1.msra.mxu0 %v54
    %492 = vmatprep.subr.mxu0 0.0
    %493 = vmatpush1.msra.mxu0 %v55
    %494 = vmatprep.subr.mxu0 0.0
    %495 = vmatpush1.msra.mxu0 %v56
    %496 = vmatprep.subr.mxu0 0.0
    %497 = vmatpush1.msra.mxu0 %v57
    %498 = vmatprep.subr.mxu0 0.0
    %499 = vmatpush1.msra.mxu0 %v58
    %500 = vmatprep.subr.mxu0 0.0
    %501 = vmatpush1.msra.mxu0 0.0
    %502 = vmatprep.subr.mxu0 0.0
    %503 = vmatpush1.msra.mxu0 0.0
    %504 = vmatprep.subr.mxu0 0.0
    %505 = vmatpush1.msra.mxu0 0.0
    %506 = vmatprep.subr.mxu0 0.0
    %507 = vmatpush1.msra.mxu0 0.0
    %508 = vmatprep.subr.mxu0 0.0
    %509 = vmatpush1.msra.mxu0 0.0
    %510 = vmatprep.subr.mxu0 0.0
    %511 = vmatpush1.msra.mxu0 0.0
    %512 = vmatprep.subr.mxu0 0.0
    %513 = vmatpush1.msra.mxu0 0.0
    %514 = vmatprep.subr.mxu0 0.0
    %515 = vmatpush1.msra.mxu0 0.0
    %516 = vmatprep.subr.mxu0 0.0
    %517 = vmatpush1.msra.mxu0 0.0
    %518 = vmatprep.subr.mxu0 0.0
    %519 = vmatpush1.msra.mxu0 0.0
    %520 = vmatprep.subr.mxu0 0.0
    %521 = vmatpush1.msra.mxu0 0.0
    %522 = vmatprep.subr.mxu0 0.0
    %523 = vmatpush1.msra.mxu0 0.0
    %524 = vmatprep.subr.mxu0 0.0
    %525 = vmatpush1.msra.mxu0 0.0
    %526 = vmatprep.subr.mxu0 0.0
    %527 = vmatpush1.msra.mxu0 0.0
    %528 = vmatprep.subr.mxu0 0.0
    %529 = vmatpush1.msra.mxu0 0.0
    %530 = vmatprep.subr.mxu0 0.0
    %531 = vmatpush1.msra.mxu0 0.0
    %532 = vmatprep.subr.mxu0 0.0
    %533 = vmatpush1.msra.mxu0 0.0
    %534 = vmatprep.subr.mxu0 0.0
    %535 = vmatpush1.msra.mxu0 0.0
    %536 = vmatprep.subr.mxu0 0.0
    %537 = vmatpush1.msra.mxu0 0.0
    %538 = vmatprep.subr.mxu0 0.0
    %539 = vmatpush1.msra.mxu0 0.0
    %540 = vmatprep.subr.mxu0 0.0
    %541 = vmatpush1.msra.mxu0 0.0
    %542 = vmatprep.subr.mxu0 0.0
    %543 = vmatpush1.msra.mxu0 0.0
    %544 = vmatprep.subr.mxu0 0.0
    %545 = vmatpush1.msra.mxu0 0.0
    %546 = vmatprep.subr.mxu0 0.0
    %547 = vmatpush1.msra.mxu0 0.0
    %548 = vmatprep.subr.mxu0 0.0
    %549 = vmatpush1.msra.mxu0 0.0
    %550 = vmatprep.subr.mxu0 0.0
    %551 = vmatpush1.msra.mxu0 0.0
    %552 = vmatprep.subr.mxu0 0.0
    %553 = vmatpush1.msra.mxu0 0.0
    %554 = vmatprep.mubr.f32.mxu0 0.0
    %555 = vmatmul.mubr.f32.gmra.mrb[0].mxu0 %v485
    %v556 = vpop.f32.mrb[0].mxu0
    %v557 = vadd.f32 0.0, %v556
    %v558 = vpop.f32.mrb[0].mxu0
    %559 = vmatprep.mubr.f32.mxu0 0.0
    %560 = vmatmul.mubr.f32.gmra.mrb[0].mxu0 %v488
    %v561 = vpop.f32.mrb[0].mxu0
    %v562 = vadd.f32 0.0, %v561
    %v563 = vpop.f32.mrb[0].mxu0
    %564 = vdwg.mxu0
    %v565 = vrcp.pop %v557
    %v566 = vmul.f32 %v481, %v565
    %v567 = vrcp.pop %v562
    %v568 = vmul.f32 %v483, %v567
    %v570 = vsel %vm470, %v566, 0
    %v573 = vsel %vm470, %v568, 0
    %575 = vmatprep.subr.mxu0 0.0
    %576 = vmatpush1.msra.mxu0 %v367
    %577 = vmatprep.subr.mxu0 0.0
    %578 = vmatpush1.msra.mxu0 %v368
    %579 = vmatprep.subr.mxu0 0.0
    %580 = vmatpush1.msra.mxu0 %v369
    %581 = vmatprep.subr.mxu0 0.0
    %582 = vmatpush1.msra.mxu0 %v370
    %583 = vmatprep.subr.mxu0 0.0
    %584 = vmatpush1.msra.mxu0 %v371
    %585 = vmatprep.subr.mxu0 0.0
    %586 = vmatpush1.msra.mxu0 0.0
    %587 = vmatprep.subr.mxu0 0.0
    %588 = vmatpush1.msra.mxu0 0.0
    %589 = vmatprep.subr.mxu0 0.0
    %590 = vmatpush1.msra.mxu0 0.0
    %591 = vmatprep.subr.mxu0 0.0
    %592 = vmatpush1.msra.mxu0 0.0
    %593 = vmatprep.subr.mxu0 0.0
    %594 = vmatpush1.msra.mxu0 0.0
    %595 = vmatprep.subr.mxu0 0.0
    %596 = vmatpush1.msra.mxu0 0.0
    %597 = vmatprep.subr.mxu0 0.0
    %598 = vmatpush1.msra.mxu0 0.0
    %599 = vmatprep.subr.mxu0 0.0
    %600 = vmatpush1.msra.mxu0 0.0
    %601 = vmatprep.subr.mxu0 0.0
    %602 = vmatpush1.msra.mxu0 0.0
    %603 = vmatprep.subr.mxu0 0.0
    %604 = vmatpush1.msra.mxu0 0.0
    %605 = vmatprep.subr.mxu0 0.0
    %606 = vmatpush1.msra.mxu0 0.0
    %607 = vmatprep.subr.mxu0 0.0
    %608 = vmatpush1.msra.mxu0 0.0
    %609 = vmatprep.subr.mxu0 0.0
    %610 = vmatpush1.msra.mxu0 0.0
    %611 = vmatprep.subr.mxu0 0.0
    %612 = vmatpush1.msra.mxu0 0.0
    %613 = vmatprep.subr.mxu0 0.0
    %614 = vmatpush1.msra.mxu0 0.0
    %615 = vmatprep.subr.mxu0 0.0
    %616 = vmatpush1.msra.mxu0 0.0
    %617 = vmatprep.subr.mxu0 0.0
    %618 = vmatpush1.msra.mxu0 0.0
    %619 = vmatprep.subr.mxu0 0.0
    %620 = vmatpush1.msra.mxu0 0.0
    %621 = vmatprep.subr.mxu0 0.0
    %622 = vmatpush1.msra.mxu0 0.0
    %623 = vmatprep.subr.mxu0 0.0
    %624 = vmatpush1.msra.mxu0 0.0
    %625 = vmatprep.subr.mxu0 0.0
    %626 = vmatpush1.msra.mxu0 0.0
    %627 = vmatprep.subr.mxu0 0.0
    %628 = vmatpush1.msra.mxu0 0.0
    %629 = vmatprep.subr.mxu0 0.0
    %630 = vmatpush1.msra.mxu0 0.0
    %631 = vmatprep.subr.mxu0 0.0
    %632 = vmatpush1.msra.mxu0 0.0
    %633 = vmatprep.subr.mxu0 0.0
    %634 = vmatpush1.msra.mxu0 0.0
    %635 = vmatprep.subr.mxu0 0.0
    %636 = vmatpush1.msra.mxu0 0.0
    %637 = vmatprep.subr.mxu0 0.0
    %638 = vmatpush1.msra.mxu0 0.0
    %639 = vmatprep.mubr.f32.mxu0 0.0
    %640 = vmatmul.mubr.f32.gmra.mrb[0].mxu0 %v570
    %v641 = vpop.f32.mrb[0].mxu0
    %v642 = vadd.f32 0.0, %v641
    %v643 = vpop.f32.mrb[0].mxu0
    %644 = vmatprep.mubr.f32.mxu0 0.0
    %645 = vmatmul.mubr.f32.gmra.mrb[0].mxu0 %v573
    %v646 = vpop.f32.mrb[0].mxu0
    %v647 = vadd.f32 0.0, %v646
    %v648 = vpop.f32.mrb[0].mxu0
    %649 = vdwg.mxu0
    %v651 = vsel %vm177, %v642, 0
    %v654 = vsel %vm177, %v647, 0
    %656 = vmatprep.subr.mxu0 0.0
    %657 = vmatpush1.msra.mxu0 %v152
    %658 = vmatprep.subr.mxu0 0.0
    %659 = vmatpush1.msra.mxu0 %v153
    %660 = vmatprep.subr.mxu0 0.0
    %661 = vmatpush1.msra.mxu0 %v154
    %662 = vmatprep.subr.mxu0 0.0
    %663 = vmatpush1.msra.mxu0 %v155
    %664 = vmatprep.subr.mxu0 0.0
    %665 = vmatpush1.msra.mxu0 0.0
    %666 = vmatprep.subr.mxu0 0.0
    %667 = vmatpush1.msra.mxu0 0.0
    %668 = vmatprep.subr.mxu0 0.0
    %669 = vmatpush1.msra.mxu0 0.0
    %670 = vmatprep.subr.mxu0 0.0
    %671 = vmatpush1.msra.mxu0 0.0
    %672 = vmatprep.subr.mxu0 0.0
    %673 = vmatpush1.msra.mxu0 0.0
    %674 = vmatprep.subr.mxu0 0.0
    %675 = vmatpush1.msra.mxu0 0.0
    %676 = vmatprep.subr.mxu0 0.0
    %677 = vmatpush1.msra.mxu0 0.0
    %678 = vmatprep.subr.mxu0 0.0
    %679 = vmatpush1.msra.mxu0 0.0
    %680 = vmatprep.subr.mxu0 0.0
    %681 = vmatpush1.msra.mxu0 0.0
    %682 = vmatprep.subr.mxu0 0.0
    %683 = vmatpush1.msra.mxu0 0.0
    %684 = vmatprep.subr.mxu0 0.0
    %685 = vmatpush1.msra.mxu0 0.0
    %686 = vmatprep.subr.mxu0 0.0
    %687 = vmatpush1.msra.mxu0 0.0
    %688 = vmatprep.subr.mxu0 0.0
    %689 = vmatpush1.msra.mxu0 0.0
    %690 = vmatprep.subr.mxu0 0.0
    %691 = vmatpush1.msra.mxu0 0.0
    %692 = vmatprep.subr.mxu0 0.0
    %693 = vmatpush1.msra.mxu0 0.0
    %694 = vmatprep.subr.mxu0 0.0
    %695 = vmatpush1.msra.mxu0 0.0
    %696 = vmatprep.subr.mxu0 0.0
    %697 = vmatpush1.msra.mxu0 0.0
    %698 = vmatprep.subr.mxu0 0.0
    %699 = vmatpush1.msra.mxu0 0.0
    %700 = vmatprep.subr.mxu0 0.0
    %701 = vmatpush1.msra.mxu0 0.0
    %702 = vmatprep.subr.mxu0 0.0
    %703 = vmatpush1.msra.mxu0 0.0
    %704 = vmatprep.subr.mxu0 0.0
    %705 = vmatpush1.msra.mxu0 0.0
    %706 = vmatprep.subr.mxu0 0.0
    %707 = vmatpush1.msra.mxu0 0.0
    %708 = vmatprep.subr.mxu0 0.0
    %709 = vmatpush1.msra.mxu0 0.0
    %710 = vmatprep.subr.mxu0 0.0
    %711 = vmatpush1.msra.mxu0 0.0
    %712 = vmatprep.subr.mxu0 0.0
    %713 = vmatpush1.msra.mxu0 0.0
    %714 = vmatprep.subr.mxu0 0.0
    %715 = vmatpush1.msra.mxu0 0.0
    %716 = vmatprep.subr.mxu0 0.0
    %717 = vmatpush1.msra.mxu0 0.0
    %718 = vmatprep.subr.mxu0 0.0
    %719 = vmatpush1.msra.mxu0 0.0
    %720 = vmatprep.mubr.f32.mxu0 0.0
    %721 = vmatmul.mubr.f32.gmra.mrb[0].mxu0 %v651
    %v722 = vpop.f32.mrb[0].mxu0
    %v723 = vadd.f32 0.0, %v722
    %v724 = vpop.f32.mrb[0].mxu0
    %725 = vmatprep.mubr.f32.mxu0 0.0
    %726 = vmatmul.mubr.f32.gmra.mrb[0].mxu0 %v654
    %v727 = vpop.f32.mrb[0].mxu0
    %v728 = vadd.f32 0.0, %v727
    %v729 = vpop.f32.mrb[0].mxu0
    %730 = vdwg.mxu0
    %v731 = vadd.f32 %v140, %v723
    %v732 = vadd.f32 %v145, %v728
    %v733 = vlaneseq
    %v734 = vshrl.u32 %v733, 7
    %v735 = vsub.s32 3, %v734
    %v736 = vrot.slane %v160, %v735
    %v737 = vadd.f32 %v731, %v736
    %v738 = vadd.f32 %v732, %v736
    %v739 = vsel %vm177, %v737, 0.0
    %740 = vadd.xlane.f32.xlu0 %v739
    %v741 = vpop.xlane.xlu0 %740
    %v742 = vsel %vm181, %v738, 0.0
    %743 = vadd.xlane.f32.xlu0 %v742
    %v744 = vpop.xlane.xlu0 %743
    %v745 = vmul.f32 %v741, %v185
    %v746 = vmul.f32 %v744, %v185
    %v747 = vmul.f32 %v737, %v737
    %v748 = vmul.f32 %v738, %v738
    %v749 = vsel %vm177, %v747, 0.0
    %750 = vadd.xlane.f32.xlu0 %v749
    %v751 = vpop.xlane.xlu0 %750
    %v752 = vsel %vm181, %v748, 0.0
    %753 = vadd.xlane.f32.xlu0 %v752
    %v754 = vpop.xlane.xlu0 %753
    %v755 = vmul.f32 %v751, %v185
    %v756 = vmul.f32 %v754, %v185
    %v757 = vsub.f32 %v737, %v745
    %v758 = vsub.f32 %v738, %v746
    %v759 = vmul.f32 %v745, %v745
    %v760 = vmul.f32 %v746, %v746
    %v761 = vsub.f32 %v755, %v759
    %v762 = vsub.f32 %v756, %v760
    %v763 = vadd.f32 %v761, 1e-06
    %v764 = vadd.f32 %v762, 1e-06
    %v765 = vrsqrt.pop %v763
    %v766 = vrsqrt.pop %v764
    %v767 = vmul.f32 %v757, %v765
    %v768 = vmul.f32 %v758, %v766
    %v769 = vlaneseq
    %v770 = vshrl.u32 %v769, 7
    %v771 = vsub.s32 4, %v770
    %v772 = vrot.slane %v160, %v771
    %v773 = vmul.f32 %v767, %v772
    %v774 = vmul.f32 %v768, %v772
    %v775 = vlaneseq
    %v776 = vshrl.u32 %v775, 7
    %v777 = vsub.s32 5, %v776
    %v778 = vrot.slane %v160, %v777
    %v779 = vadd.f32 %v773, %v778
    %v780 = vadd.f32 %v774, %v778
    %v781 = vlaneseq
    %v782 = vshrl.u32 %v781, 7
    %v783 = vsub.s32 6, %v782
    %v784 = vrot.slane %v160, %v783
    %v786 = vsel %vm177, %v779, 0
    %v789 = vsel %vm177, %v780, 0
    %791 = vmatprep.subr.mxu0 0.0
    %792 = vmatpush1.msra.mxu0 %v156
    %793 = vmatprep.subr.mxu0 0.0
    %794 = vmatpush1.msra.mxu0 %v157
    %795 = vmatprep.subr.mxu0 0.0
    %796 = vmatpush1.msra.mxu0 %v158
    %797 = vmatprep.subr.mxu0 0.0
    %798 = vmatpush1.msra.mxu0 %v159
    %799 = vmatprep.subr.mxu0 0.0
    %800 = vmatpush1.msra.mxu0 0.0
    %801 = vmatprep.subr.mxu0 0.0
    %802 = vmatpush1.msra.mxu0 0.0
    %803 = vmatprep.subr.mxu0 0.0
    %804 = vmatpush1.msra.mxu0 0.0
    %805 = vmatprep.subr.mxu0 0.0
    %806 = vmatpush1.msra.mxu0 0.0
    %807 = vmatprep.subr.mxu0 0.0
    %808 = vmatpush1.msra.mxu0 0.0
    %809 = vmatprep.subr.mxu0 0.0
    %810 = vmatpush1.msra.mxu0 0.0
    %811 = vmatprep.subr.mxu0 0.0
    %812 = vmatpush1.msra.mxu0 0.0
    %813 = vmatprep.subr.mxu0 0.0
    %814 = vmatpush1.msra.mxu0 0.0
    %815 = vmatprep.subr.mxu0 0.0
    %816 = vmatpush1.msra.mxu0 0.0
    %817 = vmatprep.subr.mxu0 0.0
    %818 = vmatpush1.msra.mxu0 0.0
    %819 = vmatprep.subr.mxu0 0.0
    %820 = vmatpush1.msra.mxu0 0.0
    %821 = vmatprep.subr.mxu0 0.0
    %822 = vmatpush1.msra.mxu0 0.0
    %823 = vmatprep.subr.mxu0 0.0
    %824 = vmatpush1.msra.mxu0 0.0
    %825 = vmatprep.subr.mxu0 0.0
    %826 = vmatpush1.msra.mxu0 0.0
    %827 = vmatprep.subr.mxu0 0.0
    %828 = vmatpush1.msra.mxu0 0.0
    %829 = vmatprep.subr.mxu0 0.0
    %830 = vmatpush1.msra.mxu0 0.0
    %831 = vmatprep.subr.mxu0 0.0
    %832 = vmatpush1.msra.mxu0 0.0
    %833 = vmatprep.subr.mxu0 0.0
    %834 = vmatpush1.msra.mxu0 0.0
    %835 = vmatprep.subr.mxu0 0.0
    %836 = vmatpush1.msra.mxu0 0.0
    %837 = vmatprep.subr.mxu0 0.0
    %838 = vmatpush1.msra.mxu0 0.0
    %839 = vmatprep.subr.mxu0 0.0
    %840 = vmatpush1.msra.mxu0 0.0
    %841 = vmatprep.subr.mxu0 0.0
    %842 = vmatpush1.msra.mxu0 0.0
    %843 = vmatprep.subr.mxu0 0.0
    %844 = vmatpush1.msra.mxu0 0.0
    %845 = vmatprep.subr.mxu0 0.0
    %846 = vmatpush1.msra.mxu0 0.0
    %847 = vmatprep.subr.mxu0 0.0
    %848 = vmatpush1.msra.mxu0 0.0
    %849 = vmatprep.subr.mxu0 0.0
    %850 = vmatpush1.msra.mxu0 0.0
    %851 = vmatprep.subr.mxu0 0.0
    %852 = vmatpush1.msra.mxu0 0.0
    %853 = vmatprep.subr.mxu0 0.0
    %854 = vmatpush1.msra.mxu0 0.0
    %855 = vmatprep.mubr.f32.mxu0 0.0
    %856 = vmatmul.mubr.f32.gmra.mrb[0].mxu0 %v786
    %v857 = vpop.f32.mrb[0].mxu0
    %v858 = vadd.f32 %v784, %v857
    %v859 = vpop.f32.mrb[0].mxu0
    %860 = vmatprep.mubr.f32.mxu0 0.0
    %861 = vmatmul.mubr.f32.gmra.mrb[0].mxu0 %v789
    %v862 = vpop.f32.mrb[0].mxu0
    %v863 = vadd.f32 %v784, %v862
    %v864 = vpop.f32.mrb[0].mxu0
    %865 = vdwg.mxu0
    %v866 = vmul.f32 %v858, 0.5
    %v867 = vmul.f32 %v863, 0.5
    %v868 = vmul.f32 %v858, 0.044715
    %v869 = vmul.f32 %v863, 0.044715
    %v870 = vmul.f32 %v868, %v858
    %v871 = vmul.f32 %v869, %v863
    %v872 = vmul.f32 %v870, %v858
    %v873 = vmul.f32 %v871, %v863
    %v874 = vadd.f32 %v858, %v872
    %v875 = vadd.f32 %v863, %v873
    %v876 = vmul.f32 %v874, 0.7978846
    %v877 = vmul.f32 %v875, 0.7978846
    %v878 = vtanh.pop %v876
    %v879 = vtanh.pop %v877
    %v880 = vadd.f32 %v878, 1.0
    %v881 = vadd.f32 %v879, 1.0
    %v882 = vmul.f32 %v866, %v880
    %v883 = vmul.f32 %v867, %v881
    %884 = vmatprep.subr.mxu0 0.0
    %885 = vmatpush1.msra.mxu0 %v161
    %886 = vmatprep.subr.mxu0 0.0
    %887 = vmatpush1.msra.mxu0 %v162
    %888 = vmatprep.subr.mxu0 0.0
    %889 = vmatpush1.msra.mxu0 %v163
    %890 = vmatprep.subr.mxu0 0.0
    %891 = vmatpush1.msra.mxu0 %v164
    %892 = vmatprep.subr.mxu0 0.0
    %893 = vmatpush1.msra.mxu0 %v165
    %894 = vmatprep.subr.mxu0 0.0
    %895 = vmatpush1.msra.mxu0 %v166
    %896 = vmatprep.subr.mxu0 0.0
    %897 = vmatpush1.msra.mxu0 %v167
    %898 = vmatprep.subr.mxu0 0.0
    %899 = vmatpush1.msra.mxu0 %v168
    %900 = vmatprep.subr.mxu0 0.0
    %901 = vmatpush1.msra.mxu0 %v169
    %902 = vmatprep.subr.mxu0 0.0
    %903 = vmatpush1.msra.mxu0 %v170
    %904 = vmatprep.subr.mxu0 0.0
    %905 = vmatpush1.msra.mxu0 %v171
    %906 = vmatprep.subr.mxu0 0.0
    %907 = vmatpush1.msra.mxu0 %v172
    %908 = vmatprep.subr.mxu0 0.0
    %909 = vmatpush1.msra.mxu0 %v173
    %910 = vmatprep.subr.mxu0 0.0
    %911 = vmatpush1.msra.mxu0 %v174
    %912 = vmatprep.subr.mxu0 0.0
    %913 = vmatpush1.msra.mxu0 %v175
    %914 = vmatprep.subr.mxu0 0.0
    %915 = vmatpush1.msra.mxu0 %v176
    %916 = vmatprep.subr.mxu0 0.0
    %917 = vmatpush1.msra.mxu0 0.0
    %918 = vmatprep.subr.mxu0 0.0
    %919 = vmatpush1.msra.mxu0 0.0
    %920 = vmatprep.subr.mxu0 0.0
    %921 = vmatpush1.msra.mxu0 0.0
    %922 = vmatprep.subr.mxu0 0.0
    %923 = vmatpush1.msra.mxu0 0.0
    %924 = vmatprep.subr.mxu0 0.0
    %925 = vmatpush1.msra.mxu0 0.0
    %926 = vmatprep.subr.mxu0 0.0
    %927 = vmatpush1.msra.mxu0 0.0
    %928 = vmatprep.subr.mxu0 0.0
    %929 = vmatpush1.msra.mxu0 0.0
    %930 = vmatprep.subr.mxu0 0.0
    %931 = vmatpush1.msra.mxu0 0.0
    %932 = vmatprep.subr.mxu0 0.0
    %933 = vmatpush1.msra.mxu0 0.0
    %934 = vmatprep.subr.mxu0 0.0
    %935 = vmatpush1.msra.mxu0 0.0
    %936 = vmatprep.subr.mxu0 0.0
    %937 = vmatpush1.msra.mxu0 0.0
    %938 = vmatprep.subr.mxu0 0.0
    %939 = vmatpush1.msra.mxu0 0.0
    %940 = vmatprep.subr.mxu0 0.0
    %941 = vmatpush1.msra.mxu0 0.0
    %942 = vmatprep.subr.mxu0 0.0
    %943 = vmatpush1.msra.mxu0 0.0
    %944 = vmatprep.subr.mxu0 0.0
    %945 = vmatpush1.msra.mxu0 0.0
    %946 = vmatprep.subr.mxu0 0.0
    %947 = vmatpush1.msra.mxu0 0.0
    %948 = vmatprep.mubr.f32.mxu0 0.0
    %949 = vmatmul.mubr.f32.gmra.mrb[0].mxu0 %v882
    %v950 = vpop.f32.mrb[0].mxu0
    %v951 = vadd.f32 0.0, %v950
    %v952 = vpop.f32.mrb[0].mxu0
    %953 = vmatprep.mubr.f32.mxu0 0.0
    %954 = vmatmul.mubr.f32.gmra.mrb[0].mxu0 %v883
    %v955 = vpop.f32.mrb[0].mxu0
    %v956 = vadd.f32 0.0, %v955
    %v957 = vpop.f32.mrb[0].mxu0
    %958 = vdwg.mxu0
    %v959 = vadd.f32 %v737, %v951
    %v960 = vadd.f32 %v738, %v956
    %v961 = vlaneseq
    %v962 = vshrl.u32 %v961, 7
    %v963 = vsub.s32 7, %v962
    %v964 = vrot.slane %v160, %v963
    %v965 = vadd.f32 %v959, %v964
    %v966 = vadd.f32 %v960, %v964
    %v967 = vsel %vm177, %v965, 0.0
    %968 = vadd.xlane.f32.xlu0 %v967
    %v969 = vpop.xlane.xlu0 %968
    %v970 = vsel %vm181, %v966, 0.0
    %971 = vadd.xlane.f32.xlu0 %v970
    %v972 = vpop.xlane.xlu0 %971
    %v973 = vmul.f32 %v969, %v185
    %v974 = vmul.f32 %v972, %v185
    %v975 = vmul.f32 %v965, %v965
    %v976 = vmul.f32 %v966, %v966
    %v977 = vsel %vm177, %v975, 0.0
    %978 = vadd.xlane.f32.xlu0 %v977
    %v979 = vpop.xlane.xlu0 %978
    %v980 = vsel %vm181, %v976, 0.0
    %981 = vadd.xlane.f32.xlu0 %v980
    %v982 = vpop.xlane.xlu0 %981
    %v983 = vmul.f32 %v979, %v185
    %v984 = vmul.f32 %v982, %v185
    %v985 = vsub.f32 %v965, %v973
    %v986 = vsub.f32 %v966, %v974
    %v987 = vmul.f32 %v973, %v973
    %v988 = vmul.f32 %v974, %v974
    %v989 = vsub.f32 %v983, %v987
    %v990 = vsub.f32 %v984, %v988
    %v991 = vadd.f32 %v989, 1e-06
    %v992 = vadd.f32 %v990, 1e-06
    %v993 = vrsqrt.pop %v991
    %v994 = vrsqrt.pop %v992
    %v995 = vmul.f32 %v985, %v993
    %v996 = vmul.f32 %v986, %v994
    %v997 = vlaneseq
    %v998 = vshrl.u32 %v997, 7
    %v999 = vsub.s32 0, %v998
    %v1000 = vrot.slane %v59, %v999
    %v1001 = vmul.f32 %v995, %v1000
    %v1002 = vlaneseq
    %v1003 = vshrl.u32 %v1002, 7
    %v1004 = vsub.s32 0, %v1003
    %v1005 = vrot.slane %v60, %v1004
    %v1006 = vadd.f32 %v1001, %v1005
    %s1007 = scalar_lea.vmem %s1, 96
    %v1008 = vld [vmem:[%s1007] sm:$0xff]
    %v1009 = vld [vmem:[%s1007 + $0x8] sm:$0xff]
    %v1010 = vld [vmem:[%s1007 + $0x10] sm:$0xff]
    %v1011 = vld [vmem:[%s1007 + $0x18] sm:$0xff]
    %v1012 = vld [vmem:[%s1007 + $0x20] sm:$0xff]
    %v1013 = vld [vmem:[%s1007 + $0x28] sm:$0xff]
    %v1014 = vld [vmem:[%s1007 + $0x30] sm:$0xff]
    %v1015 = vld [vmem:[%s1007 + $0x38] sm:$0xff]
    %v1016 = vld [vmem:[%s1007 + $0x40] sm:$0xff]
    %v1017 = vld [vmem:[%s1007 + $0x48] sm:$0xff]
    %v1018 = vld [vmem:[%s1007 + $0x50] sm:$0xff]
    %v1019 = vld [vmem:[%s1007 + $0x58] sm:$0xff]
    %s1020 = scalar_lea.vmem %s3, 8
    %v1021 = vld [vmem:[%s1020] sm:$0xff]
    %s1022 = scalar_lea.vmem %s2, 128
    %v1023 = vld [vmem:[%s1022] sm:$0xff]
    %v1024 = vld [vmem:[%s1022 + $0x8] sm:$0xff]
    %v1025 = vld [vmem:[%s1022 + $0x10] sm:$0xff]
    %v1026 = vld [vmem:[%s1022 + $0x18] sm:$0xff]
    %v1027 = vld [vmem:[%s1022 + $0x20] sm:$0xff]
    %v1028 = vld [vmem:[%s1022 + $0x28] sm:$0xff]
    %v1029 = vld [vmem:[%s1022 + $0x30] sm:$0xff]
    %v1030 = vld [vmem:[%s1022 + $0x38] sm:$0xff]
    %v1031 = vld [vmem:[%s1022 + $0x40] sm:$0xff]
    %v1032 = vld [vmem:[%s1022 + $0x48] sm:$0xff]
    %v1033 = vld [vmem:[%s1022 + $0x50] sm:$0xff]
    %v1034 = vld [vmem:[%s1022 + $0x58] sm:$0xff]
    %v1035 = vld [vmem:[%s1022 + $0x60] sm:$0xff]
    %v1036 = vld [vmem:[%s1022 + $0x68] sm:$0xff]
    %v1037 = vld [vmem:[%s1022 + $0x70] sm:$0xff]
    %v1038 = vld [vmem:[%s1022 + $0x78] sm:$0xff]
    %v1039 = vlaneseq
    %v1040 = vshrl.u32 %v1039, 7
    %v1041 = vsub.s32 0, %v1040
    %v1042 = vrot.slane %v1021, %v1041
    %v1043 = vmul.f32 %v995, %v1042
    %v1044 = vmul.f32 %v996, %v1042
    %v1045 = vlaneseq
    %v1046 = vshrl.u32 %v1045, 7
    %v1047 = vsub.s32 1, %v1046
    %v1048 = vrot.slane %v1021, %v1047
    %v1049 = vadd.f32 %v1043, %v1048
    %v1050 = vadd.f32 %v1044, %v1048
    %v1051 = vlaneseq
    %v1052 = vshrl.u32 %v1051, 7
    %v1053 = vsub.s32 2, %v1052
    %v1054 = vrot.slane %v1021, %v1053
    %v1056 = vsel %vm177, %v1049, 0
    %v1059 = vsel %vm177, %v1050, 0
    %1061 = vmatprep.subr.mxu0 0.0
    %1062 = vmatpush1.msra.mxu0 %v1008
    %1063 = vmatprep.subr.mxu0 0.0
    %1064 = vmatpush1.msra.mxu0 %v1009
    %1065 = vmatprep.subr.mxu0 0.0
    %1066 = vmatpush1.msra.mxu0 %v1010
    %1067 = vmatprep.subr.mxu0 0.0
    %1068 = vmatpush1.msra.mxu0 %v1011
    %1069 = vmatprep.subr.mxu0 0.0
    %1070 = vmatpush1.msra.mxu0 0.0
    %1071 = vmatprep.subr.mxu0 0.0
    %1072 = vmatpush1.msra.mxu0 0.0
    %1073 = vmatprep.subr.mxu0 0.0
    %1074 = vmatpush1.msra.mxu0 0.0
    %1075 = vmatprep.subr.mxu0 0.0
    %1076 = vmatpush1.msra.mxu0 0.0
    %1077 = vmatprep.subr.mxu0 0.0
    %1078 = vmatpush1.msra.mxu0 0.0
    %1079 = vmatprep.subr.mxu0 0.0
    %1080 = vmatpush1.msra.mxu0 0.0
    %1081 = vmatprep.subr.mxu0 0.0
    %1082 = vmatpush1.msra.mxu0 0.0
    %1083 = vmatprep.subr.mxu0 0.0
    %1084 = vmatpush1.msra.mxu0 0.0
    %1085 = vmatprep.subr.mxu0 0.0
    %1086 = vmatpush1.msra.mxu0 0.0
    %1087 = vmatprep.subr.mxu0 0.0
    %1088 = vmatpush1.msra.mxu0 0.0
    %1089 = vmatprep.subr.mxu0 0.0
    %1090 = vmatpush1.msra.mxu0 0.0
    %1091 = vmatprep.subr.mxu0 0.0
    %1092 = vmatpush1.msra.mxu0 0.0
    %1093 = vmatprep.subr.mxu0 0.0
    %1094 = vmatpush1.msra.mxu0 0.0
    %1095 = vmatprep.subr.mxu0 0.0
    %1096 = vmatpush1.msra.mxu0 0.0
    %1097 = vmatprep.subr.mxu0 0.0
    %1098 = vmatpush1.msra.mxu0 0.0
    %1099 = vmatprep.subr.mxu0 0.0
    %1100 = vmatpush1.msra.mxu0 0.0
    %1101 = vmatprep.subr.mxu0 0.0
    %1102 = vmatpush1.msra.mxu0 0.0
    %1103 = vmatprep.subr.mxu0 0.0
    %1104 = vmatpush1.msra.mxu0 0.0
    %1105 = vmatprep.subr.mxu0 0.0
    %1106 = vmatpush1.msra.mxu0 0.0
    %1107 = vmatprep.subr.mxu0 0.0
    %1108 = vmatpush1.msra.mxu0 0.0
    %1109 = vmatprep.subr.mxu0 0.0
    %1110 = vmatpush1.msra.mxu0 0.0
    %1111 = vmatprep.subr.mxu0 0.0
    %1112 = vmatpush1.msra.mxu0 0.0
    %1113 = vmatprep.subr.mxu0 0.0
    %1114 = vmatpush1.msra.mxu0 0.0
    %1115 = vmatprep.subr.mxu0 0.0
    %1116 = vmatpush1.msra.mxu0 0.0
    %1117 = vmatprep.subr.mxu0 0.0
    %1118 = vmatpush1.msra.mxu0 0.0
    %1119 = vmatprep.subr.mxu0 0.0
    %1120 = vmatpush1.msra.mxu0 0.0
    %1121 = vmatprep.subr.mxu0 0.0
    %1122 = vmatpush1.msra.mxu0 0.0
    %1123 = vmatprep.subr.mxu0 0.0
    %1124 = vmatpush1.msra.mxu0 0.0
    %1125 = vmatprep.mubr.f32.mxu0 0.0
    %1126 = vmatmul.mubr.f32.gmra.mrb[0].mxu0 %v1056
    %v1127 = vpop.f32.mrb[0].mxu0
    %v1128 = vadd.f32 %v1054, %v1127
    %v1129 = vpop.f32.mrb[0].mxu0
    %1130 = vmatprep.mubr.f32.mxu0 0.0
    %1131 = vmatmul.mubr.f32.gmra.mrb[0].mxu0 %v1059
    %v1132 = vpop.f32.mrb[0].mxu0
    %v1133 = vadd.f32 %v1054, %v1132
    %v1134 = vpop.f32.mrb[0].mxu0
    %1135 = vdwg.mxu0
    %v1138 = vrot.slane %v1128, 6
    %v1139 = vrot.slane %v1133, 6
    %v1140 = vsel %vm309, %v1138, %v1139
    %v1143 = vrot.slane %v1128, 4
    %v1144 = vrot.slane %v1133, 4
    %v1145 = vsel %vm315, %v1143, %v1144
    %v1148 = vrot.slane %v1128, 2
    %v1149 = vrot.slane %v1133, 2
    %v1150 = vsel %vm321, %v1148, %v1149
    %v1152 = vsel %vm309, %v1133, %v1138
    %v1153 = vsel %vm315, %v1140, %v1143
    %v1154 = vsel %vm321, %v1145, %v1148
    %1158 = vrot.lane.b32.xlu0 %v1128, 96
    %v1159 = vpop.permute.xlu0 %1158
    %1160 = vrot.lane.b32.xlu0 %v1152, 96
    %v1161 = vpop.permute.xlu0 %1160
    %1162 = vrot.lane.b32.xlu0 %v1153, 96
    %v1163 = vpop.permute.xlu0 %1162
    %1164 = vrot.lane.b32.xlu0 %v1154, 96
    %v1165 = vpop.permute.xlu0 %1164
    %1166 = vrot.lane.b32.xlu0 %v1150, 96
    %v1167 = vpop.permute.xlu0 %1166
    %v1173 = vmul.f32 %v47, %v1159
    %v1174 = vmul.f32 %v48, %v1161
    %v1175 = vmul.f32 %v49, %v1163
    %v1176 = vmul.f32 %v50, %v1165
    %v1177 = vmul.f32 %v51, %v1167
    %1178 = vrot.lane.b32.xlu0 %v1128, 64
    %v1179 = vpop.permute.xlu0 %1178
    %1180 = vrot.lane.b32.xlu0 %v1152, 64
    %v1181 = vpop.permute.xlu0 %1180
    %1182 = vrot.lane.b32.xlu0 %v1153, 64
    %v1183 = vpop.permute.xlu0 %1182
    %1184 = vrot.lane.b32.xlu0 %v1154, 64
    %v1185 = vpop.permute.xlu0 %1184
    %1186 = vrot.lane.b32.xlu0 %v1150, 64
    %v1187 = vpop.permute.xlu0 %1186
    %v1193 = vmul.f32 %v47, %v1179
    %v1194 = vmul.f32 %v48, %v1181
    %v1195 = vmul.f32 %v49, %v1183
    %v1196 = vmul.f32 %v50, %v1185
    %v1197 = vmul.f32 %v51, %v1187
    %v1198 = vsel %vm177, %v1128, 0
    %v1200 = vsel %vm177, %v1133, 0
    %v1203 = vsel %vm177, %v1173, 0
    %v1206 = vsel %vm177, %v1174, 0
    %v1209 = vsel %vm177, %v1175, 0
    %v1212 = vsel %vm177, %v1176, 0
    %v1215 = vsel %vm177, %v1177, 0
    %1217 = vmatprep.subr.mxu0 0.0
    %1218 = vmatpush1.xpose.msra.mxu0 %v1203
    %1219 = vmatprep.subr.mxu0 0.0
    %1220 = vmatpush1.xpose.msra.mxu0 %v1206
    %1221 = vmatprep.subr.mxu0 0.0
    %1222 = vmatpush1.xpose.msra.mxu0 %v1209
    %1223 = vmatprep.subr.mxu0 0.0
    %1224 = vmatpush1.xpose.msra.mxu0 %v1212
    %1225 = vmatprep.subr.mxu0 0.0
    %1226 = vmatpush1.xpose.msra.mxu0 %v1215
    %1227 = vmatprep.subr.mxu0 0.0
    %1228 = vmatpush1.xpose.msra.mxu0 0.0
    %1229 = vmatprep.subr.mxu0 0.0
    %1230 = vmatpush1.xpose.msra.mxu0 0.0
    %1231 = vmatprep.subr.mxu0 0.0
    %1232 = vmatpush1.xpose.msra.mxu0 0.0
    %1233 = vmatprep.subr.mxu0 0.0
    %1234 = vmatpush1.xpose.msra.mxu0 0.0
    %1235 = vmatprep.subr.mxu0 0.0
    %1236 = vmatpush1.xpose.msra.mxu0 0.0
    %1237 = vmatprep.subr.mxu0 0.0
    %1238 = vmatpush1.xpose.msra.mxu0 0.0
    %1239 = vmatprep.subr.mxu0 0.0
    %1240 = vmatpush1.xpose.msra.mxu0 0.0
    %1241 = vmatprep.subr.mxu0 0.0
    %1242 = vmatpush1.xpose.msra.mxu0 0.0
    %1243 = vmatprep.subr.mxu0 0.0
    %1244 = vmatpush1.xpose.msra.mxu0 0.0
    %1245 = vmatprep.subr.mxu0 0.0
    %1246 = vmatpush1.xpose.msra.mxu0 0.0
    %1247 = vmatprep.subr.mxu0 0.0
    %1248 = vmatpush1.xpose.msra.mxu0 0.0
    %1249 = vmatprep.subr.mxu0 0.0
    %1250 = vmatpush1.xpose.msra.mxu0 0.0
    %1251 = vmatprep.subr.mxu0 0.0
    %1252 = vmatpush1.xpose.msra.mxu0 0.0
    %1253 = vmatprep.subr.mxu0 0.0
    %1254 = vmatpush1.xpose.msra.mxu0 0.0
    %1255 = vmatprep.subr.mxu0 0.0
    %1256 = vmatpush1.xpose.msra.mxu0 0.0
    %1257 = vmatprep.subr.mxu0 0.0
    %1258 = vmatpush1.xpose.msra.mxu0 0.0
    %1259 = vmatprep.subr.mxu0 0.0
    %1260 = vmatpush1.xpose.msra.mxu0 0.0
    %1261 = vmatprep.subr.mxu0 0.0
    %1262 = vmatpush1.xpose.msra.mxu0 0.0
    %1263 = vmatprep.subr.mxu0 0.0
    %1264 = vmatpush1.xpose.msra.mxu0 0.0
    %1265 = vmatprep.subr.mxu0 0.0
    %1266 = vmatpush1.xpose.msra.mxu0 0.0
    %1267 = vmatprep.subr.mxu0 0.0
    %1268 = vmatpush1.xpose.msra.mxu0 0.0
    %1269 = vmatprep.subr.mxu0 0.0
    %1270 = vmatpush1.xpose.msra.mxu0 0.0
    %1271 = vmatprep.subr.mxu0 0.0
    %1272 = vmatpush1.xpose.msra.mxu0 0.0
    %1273 = vmatprep.subr.mxu0 0.0
    %1274 = vmatpush1.xpose.msra.mxu0 0.0
    %1275 = vmatprep.subr.mxu0 0.0
    %1276 = vmatpush1.xpose.msra.mxu0 0.0
    %1277 = vmatprep.subr.mxu0 0.0
    %1278 = vmatpush1.xpose.msra.mxu0 0.0
    %1279 = vmatprep.subr.mxu0 0.0
    %1280 = vmatpush1.xpose.msra.mxu0 0.0
    %1281 = vmatprep.mubr.f32.mxu0 0.0
    %1282 = vmatmul.mubr.f32.gmra.mrb[0].mxu0 %v1198
    %v1283 = vpop.f32.mrb[0].mxu0
    %v1284 = vadd.f32 0.0, %v1283
    %v1285 = vpop.f32.mrb[0].mxu0
    %1286 = vmatprep.mubr.f32.mxu0 0.0
    %1287 = vmatmul.mubr.f32.gmra.mrb[0].mxu0 %v1200
    %v1288 = vpop.f32.mrb[0].mxu0
    %v1289 = vadd.f32 0.0, %v1288
    %v1290 = vpop.f32.mrb[0].mxu0
    %1291 = vdwg.mxu0
    %v1292 = vmul.f32 %v1284, 0.35355338
    %v1293 = vmul.f32 %v1289, 0.35355338
    %v1294 = vadd.f32 %v1292, %v52
    %v1295 = vadd.f32 %v1293, %v53
    %v1296 = vsel %vm470, %v1294, -inf
    %1297 = vmax.xlane.f32.xlu0 %v1296
    %v1298 = vpop.xlane.xlu0 %1297
    %v1299 = vsel %vm474, %v1295, -inf
    %1300 = vmax.xlane.f32.xlu0 %v1299
    %v1301 = vpop.xlane.xlu0 %1300
    %v1302 = vsub.f32 %v1294, %v1298
    %v1303 = vsub.f32 %v1295, %v1301
    %v1304 = vmul.f32 %v1302, 1.442695
    %v1305 = vpow.pop %v1304
    %v1306 = vmul.f32 %v1303, 1.442695
    %v1307 = vpow.pop %v1306
    %v1309 = vsel %vm470, %v1305, 0
    %v1312 = vsel %vm470, %v1307, 0
    %1314 = vmatprep.subr.mxu0 0.0
    %1315 = vmatpush1.msra.mxu0 %v54
    %1316 = vmatprep.subr.mxu0 0.0
    %1317 = vmatpush1.msra.mxu0 %v55
    %1318 = vmatprep.subr.mxu0 0.0
    %1319 = vmatpush1.msra.mxu0 %v56
    %1320 = vmatprep.subr.mxu0 0.0
    %1321 = vmatpush1.msra.mxu0 %v57
    %1322 = vmatprep.subr.mxu0 0.0
    %1323 = vmatpush1.msra.mxu0 %v58
    %1324 = vmatprep.subr.mxu0 0.0
    %1325 = vmatpush1.msra.mxu0 0.0
    %1326 = vmatprep.subr.mxu0 0.0
    %1327 = vmatpush1.msra.mxu0 0.0
    %1328 = vmatprep.subr.mxu0 0.0
    %1329 = vmatpush1.msra.mxu0 0.0
    %1330 = vmatprep.subr.mxu0 0.0
    %1331 = vmatpush1.msra.mxu0 0.0
    %1332 = vmatprep.subr.mxu0 0.0
    %1333 = vmatpush1.msra.mxu0 0.0
    %1334 = vmatprep.subr.mxu0 0.0
    %1335 = vmatpush1.msra.mxu0 0.0
    %1336 = vmatprep.subr.mxu0 0.0
    %1337 = vmatpush1.msra.mxu0 0.0
    %1338 = vmatprep.subr.mxu0 0.0
    %1339 = vmatpush1.msra.mxu0 0.0
    %1340 = vmatprep.subr.mxu0 0.0
    %1341 = vmatpush1.msra.mxu0 0.0
    %1342 = vmatprep.subr.mxu0 0.0
    %1343 = vmatpush1.msra.mxu0 0.0
    %1344 = vmatprep.subr.mxu0 0.0
    %1345 = vmatpush1.msra.mxu0 0.0
    %1346 = vmatprep.subr.mxu0 0.0
    %1347 = vmatpush1.msra.mxu0 0.0
    %1348 = vmatprep.subr.mxu0 0.0
    %1349 = vmatpush1.msra.mxu0 0.0
    %1350 = vmatprep.subr.mxu0 0.0
    %1351 = vmatpush1.msra.mxu0 0.0
    %1352 = vmatprep.subr.mxu0 0.0
    %1353 = vmatpush1.msra.mxu0 0.0
    %1354 = vmatprep.subr.mxu0 0.0
    %1355 = vmatpush1.msra.mxu0 0.0
    %1356 = vmatprep.subr.mxu0 0.0
    %1357 = vmatpush1.msra.mxu0 0.0
    %1358 = vmatprep.subr.mxu0 0.0
    %1359 = vmatpush1.msra.mxu0 0.0
    %1360 = vmatprep.subr.mxu0 0.0
    %1361 = vmatpush1.msra.mxu0 0.0
    %1362 = vmatprep.subr.mxu0 0.0
    %1363 = vmatpush1.msra.mxu0 0.0
    %1364 = vmatprep.subr.mxu0 0.0
    %1365 = vmatpush1.msra.mxu0 0.0
    %1366 = vmatprep.subr.mxu0 0.0
    %1367 = vmatpush1.msra.mxu0 0.0
    %1368 = vmatprep.subr.mxu0 0.0
    %1369 = vmatpush1.msra.mxu0 0.0
    %1370 = vmatprep.subr.mxu0 0.0
    %1371 = vmatpush1.msra.mxu0 0.0
    %1372 = vmatprep.subr.mxu0 0.0
    %1373 = vmatpush1.msra.mxu0 0.0
    %1374 = vmatprep.subr.mxu0 0.0
    %1375 = vmatpush1.msra.mxu0 0.0
    %1376 = vmatprep.subr.mxu0 0.0
    %1377 = vmatpush1.msra.mxu0 0.0
    %1378 = vmatprep.mubr.f32.mxu0 0.0
    %1379 = vmatmul.mubr.f32.gmra.mrb[0].mxu0 %v1309
    %v1380 = vpop.f32.mrb[0].mxu0
    %v1381 = vadd.f32 0.0, %v1380
    %v1382 = vpop.f32.mrb[0].mxu0
    %1383 = vmatprep.mubr.f32.mxu0 0.0
    %1384 = vmatmul.mubr.f32.gmra.mrb[0].mxu0 %v1312
    %v1385 = vpop.f32.mrb[0].mxu0
    %v1386 = vadd.f32 0.0, %v1385
    %v1387 = vpop.f32.mrb[0].mxu0
    %1388 = vdwg.mxu0
    %v1389 = vrcp.pop %v1381
    %v1390 = vmul.f32 %v1305, %v1389
    %v1391 = vrcp.pop %v1386
    %v1392 = vmul.f32 %v1307, %v1391
    %v1394 = vsel %vm470, %v1390, 0
    %v1397 = vsel %vm470, %v1392, 0
    %1399 = vmatprep.subr.mxu0 0.0
    %1400 = vmatpush1.msra.mxu0 %v1193
    %1401 = vmatprep.subr.mxu0 0.0
    %1402 = vmatpush1.msra.mxu0 %v1194
    %1403 = vmatprep.subr.mxu0 0.0
    %1404 = vmatpush1.msra.mxu0 %v1195
    %1405 = vmatprep.subr.mxu0 0.0
    %1406 = vmatpush1.msra.mxu0 %v1196
    %1407 = vmatprep.subr.mxu0 0.0
    %1408 = vmatpush1.msra.mxu0 %v1197
    %1409 = vmatprep.subr.mxu0 0.0
    %1410 = vmatpush1.msra.mxu0 0.0
    %1411 = vmatprep.subr.mxu0 0.0
    %1412 = vmatpush1.msra.mxu0 0.0
    %1413 = vmatprep.subr.mxu0 0.0
    %1414 = vmatpush1.msra.mxu0 0.0
    %1415 = vmatprep.subr.mxu0 0.0
    %1416 = vmatpush1.msra.mxu0 0.0
    %1417 = vmatprep.subr.mxu0 0.0
    %1418 = vmatpush1.msra.mxu0 0.0
    %1419 = vmatprep.subr.mxu0 0.0
    %1420 = vmatpush1.msra.mxu0 0.0
    %1421 = vmatprep.subr.mxu0 0.0
    %1422 = vmatpush1.msra.mxu0 0.0
    %1423 = vmatprep.subr.mxu0 0.0
    %1424 = vmatpush1.msra.mxu0 0.0
    %1425 = vmatprep.subr.mxu0 0.0
    %1426 = vmatpush1.msra.mxu0 0.0
    %1427 = vmatprep.subr.mxu0 0.0
    %1428 = vmatpush1.msra.mxu0 0.0
    %1429 = vmatprep.subr.mxu0 0.0
    %1430 = vmatpush1.msra.mxu0 0.0
    %1431 = vmatprep.subr.mxu0 0.0
    %1432 = vmatpush1.msra.mxu0 0.0
    %1433 = vmatprep.subr.mxu0 0.0
    %1434 = vmatpush1.msra.mxu0 0.0
    %1435 = vmatprep.subr.mxu0 0.0
    %1436 = vmatpush1.msra.mxu0 0.0
    %1437 = vmatprep.subr.mxu0 0.0
    %1438 = vmatpush1.msra.mxu0 0.0
    %1439 = vmatprep.subr.mxu0 0.0
    %1440 = vmatpush1.msra.mxu0 0.0
    %1441 = vmatprep.subr.mxu0 0.0
    %1442 = vmatpush1.msra.mxu0 0.0
    %1443 = vmatprep.subr.mxu0 0.0
    %1444 = vmatpush1.msra.mxu0 0.0
    %1445 = vmatprep.subr.mxu0 0.0
    %1446 = vmatpush1.msra.mxu0 0.0
    %1447 = vmatprep.subr.mxu0 0.0
    %1448 = vmatpush1.msra.mxu0 0.0
    %1449 = vmatprep.subr.mxu0 0.0
    %1450 = vmatpush1.msra.mxu0 0.0
    %1451 = vmatprep.subr.mxu0 0.0
    %1452 = vmatpush1.msra.mxu0 0.0
    %1453 = vmatprep.subr.mxu0 0.0
    %1454 = vmatpush1.msra.mxu0 0.0
    %1455 = vmatprep.subr.mxu0 0.0
    %1456 = vmatpush1.msra.mxu0 0.0
    %1457 = vmatprep.subr.mxu0 0.0
    %1458 = vmatpush1.msra.mxu0 0.0
    %1459 = vmatprep.subr.mxu0 0.0
    %1460 = vmatpush1.msra.mxu0 0.0
    %1461 = vmatprep.subr.mxu0 0.0
    %1462 = vmatpush1.msra.mxu0 0.0
    %1463 = vmatprep.mubr.f32.mxu0 0.0
    %1464 = vmatmul.mubr.f32.gmra.mrb[0].mxu0 %v1394
    %v1465 = vpop.f32.mrb[0].mxu0
    %v1466 = vadd.f32 0.0, %v1465
    %v1467 = vpop.f32.mrb[0].mxu0
    %1468 = vmatprep.mubr.f32.mxu0 0.0
    %1469 = vmatmul.mubr.f32.gmra.mrb[0].mxu0 %v1397
    %v1470 = vpop.f32.mrb[0].mxu0
    %v1471 = vadd.f32 0.0, %v1470
    %v1472 = vpop.f32.mrb[0].mxu0
    %1473 = vdwg.mxu0
    %v1475 = vsel %vm177, %v1466, 0
    %v1478 = vsel %vm177, %v1471, 0
    %1480 = vmatprep.subr.mxu0 0.0
    %1481 = vmatpush1.msra.mxu0 %v1012
    %1482 = vmatprep.subr.mxu0 0.0
    %1483 = vmatpush1.msra.mxu0 %v1013
    %1484 = vmatprep.subr.mxu0 0.0
    %1485 = vmatpush1.msra.mxu0 %v1014
    %1486 = vmatprep.subr.mxu0 0.0
    %1487 = vmatpush1.msra.mxu0 %v1015
    %1488 = vmatprep.subr.mxu0 0.0
    %1489 = vmatpush1.msra.mxu0 0.0
    %1490 = vmatprep.subr.mxu0 0.0
    %1491 = vmatpush1.msra.mxu0 0.0
    %1492 = vmatprep.subr.mxu0 0.0
    %1493 = vmatpush1.msra.mxu0 0.0
    %1494 = vmatprep.subr.mxu0 0.0
    %1495 = vmatpush1.msra.mxu0 0.0
    %1496 = vmatprep.subr.mxu0 0.0
    %1497 = vmatpush1.msra.mxu0 0.0
    %1498 = vmatprep.subr.mxu0 0.0
    %1499 = vmatpush1.msra.mxu0 0.0
    %1500 = vmatprep.subr.mxu0 0.0
    %1501 = vmatpush1.msra.mxu0 0.0
    %1502 = vmatprep.subr.mxu0 0.0
    %1503 = vmatpush1.msra.mxu0 0.0
    %1504 = vmatprep.subr.mxu0 0.0
    %1505 = vmatpush1.msra.mxu0 0.0
    %1506 = vmatprep.subr.mxu0 0.0
    %1507 = vmatpush1.msra.mxu0 0.0
    %1508 = vmatprep.subr.mxu0 0.0
    %1509 = vmatpush1.msra.mxu0 0.0
    %1510 = vmatprep.subr.mxu0 0.0
    %1511 = vmatpush1.msra.mxu0 0.0
    %1512 = vmatprep.subr.mxu0 0.0
    %1513 = vmatpush1.msra.mxu0 0.0
    %1514 = vmatprep.subr.mxu0 0.0
    %1515 = vmatpush1.msra.mxu0 0.0
    %1516 = vmatprep.subr.mxu0 0.0
    %1517 = vmatpush1.msra.mxu0 0.0
    %1518 = vmatprep.subr.mxu0 0.0
    %1519 = vmatpush1.msra.mxu0 0.0
    %1520 = vmatprep.subr.mxu0 0.0
    %1521 = vmatpush1.msra.mxu0 0.0
    %1522 = vmatprep.subr.mxu0 0.0
    %1523 = vmatpush1.msra.mxu0 0.0
    %1524 = vmatprep.subr.mxu0 0.0
    %1525 = vmatpush1.msra.mxu0 0.0
    %1526 = vmatprep.subr.mxu0 0.0
    %1527 = vmatpush1.msra.mxu0 0.0
    %1528 = vmatprep.subr.mxu0 0.0
    %1529 = vmatpush1.msra.mxu0 0.0
    %1530 = vmatprep.subr.mxu0 0.0
    %1531 = vmatpush1.msra.mxu0 0.0
    %1532 = vmatprep.subr.mxu0 0.0
    %1533 = vmatpush1.msra.mxu0 0.0
    %1534 = vmatprep.subr.mxu0 0.0
    %1535 = vmatpush1.msra.mxu0 0.0
    %1536 = vmatprep.subr.mxu0 0.0
    %1537 = vmatpush1.msra.mxu0 0.0
    %1538 = vmatprep.subr.mxu0 0.0
    %1539 = vmatpush1.msra.mxu0 0.0
    %1540 = vmatprep.subr.mxu0 0.0
    %1541 = vmatpush1.msra.mxu0 0.0
    %1542 = vmatprep.subr.mxu0 0.0
    %1543 = vmatpush1.msra.mxu0 0.0
    %1544 = vmatprep.mubr.f32.mxu0 0.0
    %1545 = vmatmul.mubr.f32.gmra.mrb[0].mxu0 %v1475
    %v1546 = vpop.f32.mrb[0].mxu0
    %v1547 = vadd.f32 0.0, %v1546
    %v1548 = vpop.f32.mrb[0].mxu0
    %1549 = vmatprep.mubr.f32.mxu0 0.0
    %1550 = vmatmul.mubr.f32.gmra.mrb[0].mxu0 %v1478
    %v1551 = vpop.f32.mrb[0].mxu0
    %v1552 = vadd.f32 0.0, %v1551
    %v1553 = vpop.f32.mrb[0].mxu0
    %1554 = vdwg.mxu0
    %v1555 = vadd.f32 %v965, %v1547
    %v1556 = vadd.f32 %v966, %v1552
    %v1557 = vlaneseq
    %v1558 = vshrl.u32 %v1557, 7
    %v1559 = vsub.s32 3, %v1558
    %v1560 = vrot.slane %v1021, %v1559
    %v1561 = vadd.f32 %v1555, %v1560
    %v1562 = vadd.f32 %v1556, %v1560
    %v1563 = vsel %vm177, %v1561, 0.0
    %1564 = vadd.xlane.f32.xlu0 %v1563
    %v1565 = vpop.xlane.xlu0 %1564
    %v1566 = vsel %vm181, %v1562, 0.0
    %1567 = vadd.xlane.f32.xlu0 %v1566
    %v1568 = vpop.xlane.xlu0 %1567
    %v1569 = vmul.f32 %v1565, %v185
    %v1570 = vmul.f32 %v1568, %v185
    %v1571 = vmul.f32 %v1561, %v1561
    %v1572 = vmul.f32 %v1562, %v1562
    %v1573 = vsel %vm177, %v1571, 0.0
    %1574 = vadd.xlane.f32.xlu0 %v1573
    %v1575 = vpop.xlane.xlu0 %1574
    %v1576 = vsel %vm181, %v1572, 0.0
    %1577 = vadd.xlane.f32.xlu0 %v1576
    %v1578 = vpop.xlane.xlu0 %1577
    %v1579 = vmul.f32 %v1575, %v185
    %v1580 = vmul.f32 %v1578, %v185
    %v1581 = vsub.f32 %v1561, %v1569
    %v1582 = vsub.f32 %v1562, %v1570
    %v1583 = vmul.f32 %v1569, %v1569
    %v1584 = vmul.f32 %v1570, %v1570
    %v1585 = vsub.f32 %v1579, %v1583
    %v1586 = vsub.f32 %v1580, %v1584
    %v1587 = vadd.f32 %v1585, 1e-06
    %v1588 = vadd.f32 %v1586, 1e-06
    %v1589 = vrsqrt.pop %v1587
    %v1590 = vrsqrt.pop %v1588
    %v1591 = vmul.f32 %v1581, %v1589
    %v1592 = vmul.f32 %v1582, %v1590
    %v1593 = vlaneseq
    %v1594 = vshrl.u32 %v1593, 7
    %v1595 = vsub.s32 4, %v1594
    %v1596 = vrot.slane %v1021, %v1595
    %v1597 = vmul.f32 %v1591, %v1596
    %v1598 = vmul.f32 %v1592, %v1596
    %v1599 = vlaneseq
    %v1600 = vshrl.u32 %v1599, 7
    %v1601 = vsub.s32 5, %v1600
    %v1602 = vrot.slane %v1021, %v1601
    %v1603 = vadd.f32 %v1597, %v1602
    %v1604 = vadd.f32 %v1598, %v1602
    %v1605 = vlaneseq
    %v1606 = vshrl.u32 %v1605, 7
    %v1607 = vsub.s32 6, %v1606
    %v1608 = vrot.slane %v1021, %v1607
    %v1610 = vsel %vm177, %v1603, 0
    %v1613 = vsel %vm177, %v1604, 0
    %1615 = vmatprep.subr.mxu0 0.0
    %1616 = vmatpush1.msra.mxu0 %v1016
    %1617 = vmatprep.subr.mxu0 0.0
    %1618 = vmatpush1.msra.mxu0 %v1017
    %1619 = vmatprep.subr.mxu0 0.0
    %1620 = vmatpush1.msra.mxu0 %v1018
    %1621 = vmatprep.subr.mxu0 0.0
    %1622 = vmatpush1.msra.mxu0 %v1019
    %1623 = vmatprep.subr.mxu0 0.0
    %1624 = vmatpush1.msra.mxu0 0.0
    %1625 = vmatprep.subr.mxu0 0.0
    %1626 = vmatpush1.msra.mxu0 0.0
    %1627 = vmatprep.subr.mxu0 0.0
    %1628 = vmatpush1.msra.mxu0 0.0
    %1629 = vmatprep.subr.mxu0 0.0
    %1630 = vmatpush1.msra.mxu0 0.0
    %1631 = vmatprep.subr.mxu0 0.0
    %1632 = vmatpush1.msra.mxu0 0.0
    %1633 = vmatprep.subr.mxu0 0.0
    %1634 = vmatpush1.msra.mxu0 0.0
    %1635 = vmatprep.subr.mxu0 0.0
    %1636 = vmatpush1.msra.mxu0 0.0
    %1637 = vmatprep.subr.mxu0 0.0
    %1638 = vmatpush1.msra.mxu0 0.0
    %1639 = vmatprep.subr.mxu0 0.0
    %1640 = vmatpush1.msra.mxu0 0.0
    %1641 = vmatprep.subr.mxu0 0.0
    %1642 = vmatpush1.msra.mxu0 0.0
    %1643 = vmatprep.subr.mxu0 0.0
    %1644 = vmatpush1.msra.mxu0 0.0
    %1645 = vmatprep.subr.mxu0 0.0
    %1646 = vmatpush1.msra.mxu0 0.0
    %1647 = vmatprep.subr.mxu0 0.0
    %1648 = vmatpush1.msra.mxu0 0.0
    %1649 = vmatprep.subr.mxu0 0.0
    %1650 = vmatpush1.msra.mxu0 0.0
    %1651 = vmatprep.subr.mxu0 0.0
    %1652 = vmatpush1.msra.mxu0 0.0
    %1653 = vmatprep.subr.mxu0 0.0
    %1654 = vmatpush1.msra.mxu0 0.0
    %1655 = vmatprep.subr.mxu0 0.0
    %1656 = vmatpush1.msra.mxu0 0.0
    %1657 = vmatprep.subr.mxu0 0.0
    %1658 = vmatpush1.msra.mxu0 0.0
    %1659 = vmatprep.subr.mxu0 0.0
    %1660 = vmatpush1.msra.mxu0 0.0
    %1661 = vmatprep.subr.mxu0 0.0
    %1662 = vmatpush1.msra.mxu0 0.0
    %1663 = vmatprep.subr.mxu0 0.0
    %1664 = vmatpush1.msra.mxu0 0.0
    %1665 = vmatprep.subr.mxu0 0.0
    %1666 = vmatpush1.msra.mxu0 0.0
    %1667 = vmatprep.subr.mxu0 0.0
    %1668 = vmatpush1.msra.mxu0 0.0
    %1669 = vmatprep.subr.mxu0 0.0
    %1670 = vmatpush1.msra.mxu0 0.0
    %1671 = vmatprep.subr.mxu0 0.0
    %1672 = vmatpush1.msra.mxu0 0.0
    %1673 = vmatprep.subr.mxu0 0.0
    %1674 = vmatpush1.msra.mxu0 0.0
    %1675 = vmatprep.subr.mxu0 0.0
    %1676 = vmatpush1.msra.mxu0 0.0
    %1677 = vmatprep.subr.mxu0 0.0
    %1678 = vmatpush1.msra.mxu0 0.0
    %1679 = vmatprep.mubr.f32.mxu0 0.0
    %1680 = vmatmul.mubr.f32.gmra.mrb[0].mxu0 %v1610
    %v1681 = vpop.f32.mrb[0].mxu0
    %v1682 = vadd.f32 %v1608, %v1681
    %v1683 = vpop.f32.mrb[0].mxu0
    %1684 = vmatprep.mubr.f32.mxu0 0.0
    %1685 = vmatmul.mubr.f32.gmra.mrb[0].mxu0 %v1613
    %v1686 = vpop.f32.mrb[0].mxu0
    %v1687 = vadd.f32 %v1608, %v1686
    %v1688 = vpop.f32.mrb[0].mxu0
    %1689 = vdwg.mxu0
    %v1690 = vmul.f32 %v1682, 0.5
    %v1691 = vmul.f32 %v1687, 0.5
    %v1692 = vmul.f32 %v1682, 0.044715
    %v1693 = vmul.f32 %v1687, 0.044715
    %v1694 = vmul.f32 %v1692, %v1682
    %v1695 = vmul.f32 %v1693, %v1687
    %v1696 = vmul.f32 %v1694, %v1682
    %v1697 = vmul.f32 %v1695, %v1687
    %v1698 = vadd.f32 %v1682, %v1696
    %v1699 = vadd.f32 %v1687, %v1697
    %v1700 = vmul.f32 %v1698, 0.7978846
    %v1701 = vmul.f32 %v1699, 0.7978846
    %v1702 = vtanh.pop %v1700
    %v1703 = vtanh.pop %v1701
    %v1704 = vadd.f32 %v1702, 1.0
    %v1705 = vadd.f32 %v1703, 1.0
    %v1706 = vmul.f32 %v1690, %v1704
    %v1707 = vmul.f32 %v1691, %v1705
    %1708 = vmatprep.subr.mxu0 0.0
    %1709 = vmatpush1.msra.mxu0 %v1023
    %1710 = vmatprep.subr.mxu0 0.0
    %1711 = vmatpush1.msra.mxu0 %v1024
    %1712 = vmatprep.subr.mxu0 0.0
    %1713 = vmatpush1.msra.mxu0 %v1025
    %1714 = vmatprep.subr.mxu0 0.0
    %1715 = vmatpush1.msra.mxu0 %v1026
    %1716 = vmatprep.subr.mxu0 0.0
    %1717 = vmatpush1.msra.mxu0 %v1027
    %1718 = vmatprep.subr.mxu0 0.0
    %1719 = vmatpush1.msra.mxu0 %v1028
    %1720 = vmatprep.subr.mxu0 0.0
    %1721 = vmatpush1.msra.mxu0 %v1029
    %1722 = vmatprep.subr.mxu0 0.0
    %1723 = vmatpush1.msra.mxu0 %v1030
    %1724 = vmatprep.subr.mxu0 0.0
    %1725 = vmatpush1.msra.mxu0 %v1031
    %1726 = vmatprep.subr.mxu0 0.0
    %1727 = vmatpush1.msra.mxu0 %v1032
    %1728 = vmatprep.subr.mxu0 0.0
    %1729 = vmatpush1.msra.mxu0 %v1033
    %1730 = vmatprep.subr.mxu0 0.0
    %1731 = vmatpush1.msra.mxu0 %v1034
    %1732 = vmatprep.subr.mxu0 0.0
    %1733 = vmatpush1.msra.mxu0 %v1035
    %1734 = vmatprep.subr.mxu0 0.0
    %1735 = vmatpush1.msra.mxu0 %v1036
    %1736 = vmatprep.subr.mxu0 0.0
    %1737 = vmatpush1.msra.mxu0 %v1037
    %1738 = vmatprep.subr.mxu0 0.0
    %1739 = vmatpush1.msra.mxu0 %v1038
    %1740 = vmatprep.subr.mxu0 0.0
    %1741 = vmatpush1.msra.mxu0 0.0
    %1742 = vmatprep.subr.mxu0 0.0
    %1743 = vmatpush1.msra.mxu0 0.0
    %1744 = vmatprep.subr.mxu0 0.0
    %1745 = vmatpush1.msra.mxu0 0.0
    %1746 = vmatprep.subr.mxu0 0.0
    %1747 = vmatpush1.msra.mxu0 0.0
    %1748 = vmatprep.subr.mxu0 0.0
    %1749 = vmatpush1.msra.mxu0 0.0
    %1750 = vmatprep.subr.mxu0 0.0
    %1751 = vmatpush1.msra.mxu0 0.0
    %1752 = vmatprep.subr.mxu0 0.0
    %1753 = vmatpush1.msra.mxu0 0.0
    %1754 = vmatprep.subr.mxu0 0.0
    %1755 = vmatpush1.msra.mxu0 0.0
    %1756 = vmatprep.subr.mxu0 0.0
    %1757 = vmatpush1.msra.mxu0 0.0
    %1758 = vmatprep.subr.mxu0 0.0
    %1759 = vmatpush1.msra.mxu0 0.0
    %1760 = vmatprep.subr.mxu0 0.0
    %1761 = vmatpush1.msra.mxu0 0.0
    %1762 = vmatprep.subr.mxu0 0.0
    %1763 = vmatpush1.msra.mxu0 0.0
    %1764 = vmatprep.subr.mxu0 0.0
    %1765 = vmatpush1.msra.mxu0 0.0
    %1766 = vmatprep.subr.mxu0 0.0
    %1767 = vmatpush1.msra.mxu0 0.0
    %1768 = vmatprep.subr.mxu0 0.0
    %1769 = vmatpush1.msra.mxu0 0.0
    %1770 = vmatprep.subr.mxu0 0.0
    %1771 = vmatpush1.msra.mxu0 0.0
    %1772 = vmatprep.mubr.f32.mxu0 0.0
    %1773 = vmatmul.mubr.f32.gmra.mrb[0].mxu0 %v1706
    %v1774 = vpop.f32.mrb[0].mxu0
    %v1775 = vadd.f32 0.0, %v1774
    %v1776 = vpop.f32.mrb[0].mxu0
    %1777 = vmatprep.mubr.f32.mxu0 0.0
    %1778 = vmatmul.mubr.f32.gmra.mrb[0].mxu0 %v1707
    %v1779 = vpop.f32.mrb[0].mxu0
    %v1780 = vadd.f32 0.0, %v1779
    %v1781 = vpop.f32.mrb[0].mxu0
    %1782 = vdwg.mxu0
    %v1783 = vadd.f32 %v1561, %v1775
    %v1784 = vadd.f32 %v1562, %v1780
    %v1785 = vlaneseq
    %v1786 = vshrl.u32 %v1785, 7
    %v1787 = vsub.s32 7, %v1786
    %v1788 = vrot.slane %v1021, %v1787
    %v1789 = vadd.f32 %v1783, %v1788
    %v1790 = vadd.f32 %v1784, %v1788
    %v1791 = vsel %vm177, %v1789, 0.0
    %1792 = vadd.xlane.f32.xlu0 %v1791
    %v1793 = vpop.xlane.xlu0 %1792
    %v1794 = vsel %vm181, %v1790, 0.0
    %1795 = vadd.xlane.f32.xlu0 %v1794
    %v1796 = vpop.xlane.xlu0 %1795
    %v1797 = vmul.f32 %v1793, %v185
    %v1798 = vmul.f32 %v1796, %v185
    %v1799 = vmul.f32 %v1789, %v1789
    %v1800 = vmul.f32 %v1790, %v1790
    %v1801 = vsel %vm177, %v1799, 0.0
    %1802 = vadd.xlane.f32.xlu0 %v1801
    %v1803 = vpop.xlane.xlu0 %1802
    %v1804 = vsel %vm181, %v1800, 0.0
    %1805 = vadd.xlane.f32.xlu0 %v1804
    %v1806 = vpop.xlane.xlu0 %1805
    %v1807 = vmul.f32 %v1803, %v185
    %v1808 = vmul.f32 %v1806, %v185
    %v1809 = vsub.f32 %v1789, %v1797
    %v1810 = vsub.f32 %v1790, %v1798
    %v1811 = vmul.f32 %v1797, %v1797
    %v1812 = vmul.f32 %v1798, %v1798
    %v1813 = vsub.f32 %v1807, %v1811
    %v1814 = vsub.f32 %v1808, %v1812
    %v1815 = vadd.f32 %v1813, 1e-06
    %v1816 = vadd.f32 %v1814, 1e-06
    %v1817 = vrsqrt.pop %v1815
    %v1818 = vrsqrt.pop %v1816
    %v1819 = vmul.f32 %v1809, %v1817
    %v1820 = vmul.f32 %v1810, %v1818
    %v1821 = vmul.f32 %v1819, %v1000
    %v1822 = vadd.f32 %v1821, %v1005
    %s1823 = scalar_lea.vmem %s1, 192
    %v1824 = vld [vmem:[%s1823] sm:$0xff]
    %v1825 = vld [vmem:[%s1823 + $0x8] sm:$0xff]
    %v1826 = vld [vmem:[%s1823 + $0x10] sm:$0xff]
    %v1827 = vld [vmem:[%s1823 + $0x18] sm:$0xff]
    %v1828 = vld [vmem:[%s1823 + $0x20] sm:$0xff]
    %v1829 = vld [vmem:[%s1823 + $0x28] sm:$0xff]
    %v1830 = vld [vmem:[%s1823 + $0x30] sm:$0xff]
    %v1831 = vld [vmem:[%s1823 + $0x38] sm:$0xff]
    %v1832 = vld [vmem:[%s1823 + $0x40] sm:$0xff]
    %v1833 = vld [vmem:[%s1823 + $0x48] sm:$0xff]
    %v1834 = vld [vmem:[%s1823 + $0x50] sm:$0xff]
    %v1835 = vld [vmem:[%s1823 + $0x58] sm:$0xff]
    %s1836 = scalar_lea.vmem %s3, 16
    %v1837 = vld [vmem:[%s1836] sm:$0xff]
    %s1838 = scalar_lea.vmem %s2, 256
    %v1839 = vld [vmem:[%s1838] sm:$0xff]
    %v1840 = vld [vmem:[%s1838 + $0x8] sm:$0xff]
    %v1841 = vld [vmem:[%s1838 + $0x10] sm:$0xff]
    %v1842 = vld [vmem:[%s1838 + $0x18] sm:$0xff]
    %v1843 = vld [vmem:[%s1838 + $0x20] sm:$0xff]
    %v1844 = vld [vmem:[%s1838 + $0x28] sm:$0xff]
    %v1845 = vld [vmem:[%s1838 + $0x30] sm:$0xff]
    %v1846 = vld [vmem:[%s1838 + $0x38] sm:$0xff]
    %v1847 = vld [vmem:[%s1838 + $0x40] sm:$0xff]
    %v1848 = vld [vmem:[%s1838 + $0x48] sm:$0xff]
    %v1849 = vld [vmem:[%s1838 + $0x50] sm:$0xff]
    %v1850 = vld [vmem:[%s1838 + $0x58] sm:$0xff]
    %v1851 = vld [vmem:[%s1838 + $0x60] sm:$0xff]
    %v1852 = vld [vmem:[%s1838 + $0x68] sm:$0xff]
    %v1853 = vld [vmem:[%s1838 + $0x70] sm:$0xff]
    %v1854 = vld [vmem:[%s1838 + $0x78] sm:$0xff]
    %v1855 = vlaneseq
    %v1856 = vshrl.u32 %v1855, 7
    %v1857 = vsub.s32 0, %v1856
    %v1858 = vrot.slane %v1837, %v1857
    %v1859 = vmul.f32 %v1819, %v1858
    %v1860 = vmul.f32 %v1820, %v1858
    %v1861 = vlaneseq
    %v1862 = vshrl.u32 %v1861, 7
    %v1863 = vsub.s32 1, %v1862
    %v1864 = vrot.slane %v1837, %v1863
    %v1865 = vadd.f32 %v1859, %v1864
    %v1866 = vadd.f32 %v1860, %v1864
    %v1867 = vlaneseq
    %v1868 = vshrl.u32 %v1867, 7
    %v1869 = vsub.s32 2, %v1868
    %v1870 = vrot.slane %v1837, %v1869
    %v1872 = vsel %vm177, %v1865, 0
    %v1875 = vsel %vm177, %v1866, 0
    %1877 = vmatprep.subr.mxu0 0.0
    %1878 = vmatpush1.msra.mxu0 %v1824
    %1879 = vmatprep.subr.mxu0 0.0
    %1880 = vmatpush1.msra.mxu0 %v1825
    %1881 = vmatprep.subr.mxu0 0.0
    %1882 = vmatpush1.msra.mxu0 %v1826
    %1883 = vmatprep.subr.mxu0 0.0
    %1884 = vmatpush1.msra.mxu0 %v1827
    %1885 = vmatprep.subr.mxu0 0.0
    %1886 = vmatpush1.msra.mxu0 0.0
    %1887 = vmatprep.subr.mxu0 0.0
    %1888 = vmatpush1.msra.mxu0 0.0
    %1889 = vmatprep.subr.mxu0 0.0
    %1890 = vmatpush1.msra.mxu0 0.0
    %1891 = vmatprep.subr.mxu0 0.0
    %1892 = vmatpush1.msra.mxu0 0.0
    %1893 = vmatprep.subr.mxu0 0.0
    %1894 = vmatpush1.msra.mxu0 0.0
    %1895 = vmatprep.subr.mxu0 0.0
    %1896 = vmatpush1.msra.mxu0 0.0
    %1897 = vmatprep.subr.mxu0 0.0
    %1898 = vmatpush1.msra.mxu0 0.0
    %1899 = vmatprep.subr.mxu0 0.0
    %1900 = vmatpush1.msra.mxu0 0.0
    %1901 = vmatprep.subr.mxu0 0.0
    %1902 = vmatpush1.msra.mxu0 0.0
    %1903 = vmatprep.subr.mxu0 0.0
    %1904 = vmatpush1.msra.mxu0 0.0
    %1905 = vmatprep.subr.mxu0 0.0
    %1906 = vmatpush1.msra.mxu0 0.0
    %1907 = vmatprep.subr.mxu0 0.0
    %1908 = vmatpush1.msra.mxu0 0.0
    %1909 = vmatprep.subr.mxu0 0.0
    %1910 = vmatpush1.msra.mxu0 0.0
    %1911 = vmatprep.subr.mxu0 0.0
    %1912 = vmatpush1.msra.mxu0 0.0
    %1913 = vmatprep.subr.mxu0 0.0
    %1914 = vmatpush1.msra.mxu0 0.0
    %1915 = vmatprep.subr.mxu0 0.0
    %1916 = vmatpush1.msra.mxu0 0.0
    %1917 = vmatprep.subr.mxu0 0.0
    %1918 = vmatpush1.msra.mxu0 0.0
    %1919 = vmatprep.subr.mxu0 0.0
    %1920 = vmatpush1.msra.mxu0 0.0
    %1921 = vmatprep.subr.mxu0 0.0
    %1922 = vmatpush1.msra.mxu0 0.0
    %1923 = vmatprep.subr.mxu0 0.0
    %1924 = vmatpush1.msra.mxu0 0.0
    %1925 = vmatprep.subr.mxu0 0.0
    %1926 = vmatpush1.msra.mxu0 0.0
    %1927 = vmatprep.subr.mxu0 0.0
    %1928 = vmatpush1.msra.mxu0 0.0
    %1929 = vmatprep.subr.mxu0 0.0
    %1930 = vmatpush1.msra.mxu0 0.0
    %1931 = vmatprep.subr.mxu0 0.0
    %1932 = vmatpush1.msra.mxu0 0.0
    %1933 = vmatprep.subr.mxu0 0.0
    %1934 = vmatpush1.msra.mxu0 0.0
    %1935 = vmatprep.subr.mxu0 0.0
    %1936 = vmatpush1.msra.mxu0 0.0
    %1937 = vmatprep.subr.mxu0 0.0
    %1938 = vmatpush1.msra.mxu0 0.0
    %1939 = vmatprep.subr.mxu0 0.0
    %1940 = vmatpush1.msra.mxu0 0.0
    %1941 = vmatprep.mubr.f32.mxu0 0.0
    %1942 = vmatmul.mubr.f32.gmra.mrb[0].mxu0 %v1872
    %v1943 = vpop.f32.mrb[0].mxu0
    %v1944 = vadd.f32 %v1870, %v1943
    %v1945 = vpop.f32.mrb[0].mxu0
    %1946 = vmatprep.mubr.f32.mxu0 0.0
    %1947 = vmatmul.mubr.f32.gmra.mrb[0].mxu0 %v1875
    %v1948 = vpop.f32.mrb[0].mxu0
    %v1949 = vadd.f32 %v1870, %v1948
    %v1950 = vpop.f32.mrb[0].mxu0
    %1951 = vdwg.mxu0
    %v1954 = vrot.slane %v1944, 6
    %v1955 = vrot.slane %v1949, 6
    %v1956 = vsel %vm309, %v1954, %v1955
    %v1959 = vrot.slane %v1944, 4
    %v1960 = vrot.slane %v1949, 4
    %v1961 = vsel %vm315, %v1959, %v1960
    %v1964 = vrot.slane %v1944, 2
    %v1965 = vrot.slane %v1949, 2
    %v1966 = vsel %vm321, %v1964, %v1965
    %v1968 = vsel %vm309, %v1949, %v1954
    %v1969 = vsel %vm315, %v1956, %v1959
    %v1970 = vsel %vm321, %v1961, %v1964
    %1974 = vrot.lane.b32.xlu0 %v1944, 96
    %v1975 = vpop.permute.xlu0 %1974
    %1976 = vrot.lane.b32.xlu0 %v1968, 96
    %v1977 = vpop.permute.xlu0 %1976
    %1978 = vrot.lane.b32.xlu0 %v1969, 96
    %v1979 = vpop.permute.xlu0 %1978
    %1980 = vrot.lane.b32.xlu0 %v1970, 96
    %v1981 = vpop.permute.xlu0 %1980
    %1982 = vrot.lane.b32.xlu0 %v1966, 96
    %v1983 = vpop.permute.xlu0 %1982
    %v1989 = vmul.f32 %v47, %v1975
    %v1990 = vmul.f32 %v48, %v1977
    %v1991 = vmul.f32 %v49, %v1979
    %v1992 = vmul.f32 %v50, %v1981
    %v1993 = vmul.f32 %v51, %v1983
    %1994 = vrot.lane.b32.xlu0 %v1944, 64
    %v1995 = vpop.permute.xlu0 %1994
    %1996 = vrot.lane.b32.xlu0 %v1968, 64
    %v1997 = vpop.permute.xlu0 %1996
    %1998 = vrot.lane.b32.xlu0 %v1969, 64
    %v1999 = vpop.permute.xlu0 %1998
    %2000 = vrot.lane.b32.xlu0 %v1970, 64
    %v2001 = vpop.permute.xlu0 %2000
    %2002 = vrot.lane.b32.xlu0 %v1966, 64
    %v2003 = vpop.permute.xlu0 %2002
    %v2009 = vmul.f32 %v47, %v1995
    %v2010 = vmul.f32 %v48, %v1997
    %v2011 = vmul.f32 %v49, %v1999
    %v2012 = vmul.f32 %v50, %v2001
    %v2013 = vmul.f32 %v51, %v2003
    %v2014 = vsel %vm177, %v1944, 0
    %v2016 = vsel %vm177, %v1949, 0
    %v2019 = vsel %vm177, %v1989, 0
    %v2022 = vsel %vm177, %v1990, 0
    %v2025 = vsel %vm177, %v1991, 0
    %v2028 = vsel %vm177, %v1992, 0
    %v2031 = vsel %vm177, %v1993, 0
    %2033 = vmatprep.subr.mxu0 0.0
    %2034 = vmatpush1.xpose.msra.mxu0 %v2019
    %2035 = vmatprep.subr.mxu0 0.0
    %2036 = vmatpush1.xpose.msra.mxu0 %v2022
    %2037 = vmatprep.subr.mxu0 0.0
    %2038 = vmatpush1.xpose.msra.mxu0 %v2025
    %2039 = vmatprep.subr.mxu0 0.0
    %2040 = vmatpush1.xpose.msra.mxu0 %v2028
    %2041 = vmatprep.subr.mxu0 0.0
    %2042 = vmatpush1.xpose.msra.mxu0 %v2031
    %2043 = vmatprep.subr.mxu0 0.0
    %2044 = vmatpush1.xpose.msra.mxu0 0.0
    %2045 = vmatprep.subr.mxu0 0.0
    %2046 = vmatpush1.xpose.msra.mxu0 0.0
    %2047 = vmatprep.subr.mxu0 0.0
    %2048 = vmatpush1.xpose.msra.mxu0 0.0
    %2049 = vmatprep.subr.mxu0 0.0
    %2050 = vmatpush1.xpose.msra.mxu0 0.0
    %2051 = vmatprep.subr.mxu0 0.0
    %2052 = vmatpush1.xpose.msra.mxu0 0.0
    %2053 = vmatprep.subr.mxu0 0.0
    %2054 = vmatpush1.xpose.msra.mxu0 0.0
    %2055 = vmatprep.subr.mxu0 0.0
    %2056 = vmatpush1.xpose.msra.mxu0 0.0
    %2057 = vmatprep.subr.mxu0 0.0
    %2058 = vmatpush1.xpose.msra.mxu0 0.0
    %2059 = vmatprep.subr.mxu0 0.0
    %2060 = vmatpush1.xpose.msra.mxu0 0.0
    %2061 = vmatprep.subr.mxu0 0.0
    %2062 = vmatpush1.xpose.msra.mxu0 0.0
    %2063 = vmatprep.subr.mxu0 0.0
    %2064 = vmatpush1.xpose.msra.mxu0 0.0
    %2065 = vmatprep.subr.mxu0 0.0
    %2066 = vmatpush1.xpose.msra.mxu0 0.0
    %2067 = vmatprep.subr.mxu0 0.0
    %2068 = vmatpush1.xpose.msra.mxu0 0.0
    %2069 = vmatprep.subr.mxu0 0.0
    %2070 = vmatpush1.xpose.msra.mxu0 0.0
    %2071 = vmatprep.subr.mxu0 0.0
    %2072 = vmatpush1.xpose.msra.mxu0 0.0
    %2073 = vmatprep.subr.mxu0 0.0
    %2074 = vmatpush1.xpose.msra.mxu0 0.0
    %2075 = vmatprep.subr.mxu0 0.0
    %2076 = vmatpush1.xpose.msra.mxu0 0.0
    %2077 = vmatprep.subr.mxu0 0.0
    %2078 = vmatpush1.xpose.msra.mxu0 0.0
    %2079 = vmatprep.subr.mxu0 0.0
    %2080 = vmatpush1.xpose.msra.mxu0 0.0
    %2081 = vmatprep.subr.mxu0 0.0
    %2082 = vmatpush1.xpose.msra.mxu0 0.0
    %2083 = vmatprep.subr.mxu0 0.0
    %2084 = vmatpush1.xpose.msra.mxu0 0.0
    %2085 = vmatprep.subr.mxu0 0.0
    %2086 = vmatpush1.xpose.msra.mxu0 0.0
    %2087 = vmatprep.subr.mxu0 0.0
    %2088 = vmatpush1.xpose.msra.mxu0 0.0
    %2089 = vmatprep.subr.mxu0 0.0
    %2090 = vmatpush1.xpose.msra.mxu0 0.0
    %2091 = vmatprep.subr.mxu0 0.0
    %2092 = vmatpush1.xpose.msra.mxu0 0.0
    %2093 = vmatprep.subr.mxu0 0.0
    %2094 = vmatpush1.xpose.msra.mxu0 0.0
    %2095 = vmatprep.subr.mxu0 0.0
    %2096 = vmatpush1.xpose.msra.mxu0 0.0
    %2097 = vmatprep.mubr.f32.mxu0 0.0
    %2098 = vmatmul.mubr.f32.gmra.mrb[0].mxu0 %v2014
    %v2099 = vpop.f32.mrb[0].mxu0
    %v2100 = vadd.f32 0.0, %v2099
    %v2101 = vpop.f32.mrb[0].mxu0
    %2102 = vmatprep.mubr.f32.mxu0 0.0
    %2103 = vmatmul.mubr.f32.gmra.mrb[0].mxu0 %v2016
    %v2104 = vpop.f32.mrb[0].mxu0
    %v2105 = vadd.f32 0.0, %v2104
    %v2106 = vpop.f32.mrb[0].mxu0
    %2107 = vdwg.mxu0
    %v2108 = vmul.f32 %v2100, 0.35355338
    %v2109 = vmul.f32 %v2105, 0.35355338
    %v2110 = vadd.f32 %v2108, %v52
    %v2111 = vadd.f32 %v2109, %v53
    %v2112 = vsel %vm470, %v2110, -inf
    %2113 = vmax.xlane.f32.xlu0 %v2112
    %v2114 = vpop.xlane.xlu0 %2113
    %v2115 = vsel %vm474, %v2111, -inf
    %2116 = vmax.xlane.f32.xlu0 %v2115
    %v2117 = vpop.xlane.xlu0 %2116
    %v2118 = vsub.f32 %v2110, %v2114
    %v2119 = vsub.f32 %v2111, %v2117
    %v2120 = vmul.f32 %v2118, 1.442695
    %v2121 = vpow.pop %v2120
    %v2122 = vmul.f32 %v2119, 1.442695
    %v2123 = vpow.pop %v2122
    %v2125 = vsel %vm470, %v2121, 0
    %v2128 = vsel %vm470, %v2123, 0
    %2130 = vmatprep.subr.mxu0 0.0
    %2131 = vmatpush1.msra.mxu0 %v54
    %2132 = vmatprep.subr.mxu0 0.0
    %2133 = vmatpush1.msra.mxu0 %v55
    %2134 = vmatprep.subr.mxu0 0.0
    %2135 = vmatpush1.msra.mxu0 %v56
    %2136 = vmatprep.subr.mxu0 0.0
    %2137 = vmatpush1.msra.mxu0 %v57
    %2138 = vmatprep.subr.mxu0 0.0
    %2139 = vmatpush1.msra.mxu0 %v58
    %2140 = vmatprep.subr.mxu0 0.0
    %2141 = vmatpush1.msra.mxu0 0.0
    %2142 = vmatprep.subr.mxu0 0.0
    %2143 = vmatpush1.msra.mxu0 0.0
    %2144 = vmatprep.subr.mxu0 0.0
    %2145 = vmatpush1.msra.mxu0 0.0
    %2146 = vmatprep.subr.mxu0 0.0
    %2147 = vmatpush1.msra.mxu0 0.0
    %2148 = vmatprep.subr.mxu0 0.0
    %2149 = vmatpush1.msra.mxu0 0.0
    %2150 = vmatprep.subr.mxu0 0.0
    %2151 = vmatpush1.msra.mxu0 0.0
    %2152 = vmatprep.subr.mxu0 0.0
    %2153 = vmatpush1.msra.mxu0 0.0
    %2154 = vmatprep.subr.mxu0 0.0
    %2155 = vmatpush1.msra.mxu0 0.0
    %2156 = vmatprep.subr.mxu0 0.0
    %2157 = vmatpush1.msra.mxu0 0.0
    %2158 = vmatprep.subr.mxu0 0.0
    %2159 = vmatpush1.msra.mxu0 0.0
    %2160 = vmatprep.subr.mxu0 0.0
    %2161 = vmatpush1.msra.mxu0 0.0
    %2162 = vmatprep.subr.mxu0 0.0
    %2163 = vmatpush1.msra.mxu0 0.0
    %2164 = vmatprep.subr.mxu0 0.0
    %2165 = vmatpush1.msra.mxu0 0.0
    %2166 = vmatprep.subr.mxu0 0.0
    %2167 = vmatpush1.msra.mxu0 0.0
    %2168 = vmatprep.subr.mxu0 0.0
    %2169 = vmatpush1.msra.mxu0 0.0
    %2170 = vmatprep.subr.mxu0 0.0
    %2171 = vmatpush1.msra.mxu0 0.0
    %2172 = vmatprep.subr.mxu0 0.0
    %2173 = vmatpush1.msra.mxu0 0.0
    %2174 = vmatprep.subr.mxu0 0.0
    %2175 = vmatpush1.msra.mxu0 0.0
    %2176 = vmatprep.subr.mxu0 0.0
    %2177 = vmatpush1.msra.mxu0 0.0
    %2178 = vmatprep.subr.mxu0 0.0
    %2179 = vmatpush1.msra.mxu0 0.0
    %2180 = vmatprep.subr.mxu0 0.0
    %2181 = vmatpush1.msra.mxu0 0.0
    %2182 = vmatprep.subr.mxu0 0.0
    %2183 = vmatpush1.msra.mxu0 0.0
    %2184 = vmatprep.subr.mxu0 0.0
    %2185 = vmatpush1.msra.mxu0 0.0
    %2186 = vmatprep.subr.mxu0 0.0
    %2187 = vmatpush1.msra.mxu0 0.0
    %2188 = vmatprep.subr.mxu0 0.0
    %2189 = vmatpush1.msra.mxu0 0.0
    %2190 = vmatprep.subr.mxu0 0.0
    %2191 = vmatpush1.msra.mxu0 0.0
    %2192 = vmatprep.subr.mxu0 0.0
    %2193 = vmatpush1.msra.mxu0 0.0
    %2194 = vmatprep.mubr.f32.mxu0 0.0
    %2195 = vmatmul.mubr.f32.gmra.mrb[0].mxu0 %v2125
    %v2196 = vpop.f32.mrb[0].mxu0
    %v2197 = vadd.f32 0.0, %v2196
    %v2198 = vpop.f32.mrb[0].mxu0
    %2199 = vmatprep.mubr.f32.mxu0 0.0
    %2200 = vmatmul.mubr.f32.gmra.mrb[0].mxu0 %v2128
    %v2201 = vpop.f32.mrb[0].mxu0
    %v2202 = vadd.f32 0.0, %v2201
    %v2203 = vpop.f32.mrb[0].mxu0
    %2204 = vdwg.mxu0
    %v2205 = vrcp.pop %v2197
    %v2206 = vmul.f32 %v2121, %v2205
    %v2207 = vrcp.pop %v2202
    %v2208 = vmul.f32 %v2123, %v2207
    %v2210 = vsel %vm470, %v2206, 0
    %v2213 = vsel %vm470, %v2208, 0
    %2215 = vmatprep.subr.mxu0 0.0
    %2216 = vmatpush1.msra.mxu0 %v2009
    %2217 = vmatprep.subr.mxu0 0.0
    %2218 = vmatpush1.msra.mxu0 %v2010
    %2219 = vmatprep.subr.mxu0 0.0
    %2220 = vmatpush1.msra.mxu0 %v2011
    %2221 = vmatprep.subr.mxu0 0.0
    %2222 = vmatpush1.msra.mxu0 %v2012
    %2223 = vmatprep.subr.mxu0 0.0
    %2224 = vmatpush1.msra.mxu0 %v2013
    %2225 = vmatprep.subr.mxu0 0.0
    %2226 = vmatpush1.msra.mxu0 0.0
    %2227 = vmatprep.subr.mxu0 0.0
    %2228 = vmatpush1.msra.mxu0 0.0
    %2229 = vmatprep.subr.mxu0 0.0
    %2230 = vmatpush1.msra.mxu0 0.0
    %2231 = vmatprep.subr.mxu0 0.0
    %2232 = vmatpush1.msra.mxu0 0.0
    %2233 = vmatprep.subr.mxu0 0.0
    %2234 = vmatpush1.msra.mxu0 0.0
    %2235 = vmatprep.subr.mxu0 0.0
    %2236 = vmatpush1.msra.mxu0 0.0
    %2237 = vmatprep.subr.mxu0 0.0
    %2238 = vmatpush1.msra.mxu0 0.0
    %2239 = vmatprep.subr.mxu0 0.0
    %2240 = vmatpush1.msra.mxu0 0.0
    %2241 = vmatprep.subr.mxu0 0.0
    %2242 = vmatpush1.msra.mxu0 0.0
    %2243 = vmatprep.subr.mxu0 0.0
    %2244 = vmatpush1.msra.mxu0 0.0
    %2245 = vmatprep.subr.mxu0 0.0
    %2246 = vmatpush1.msra.mxu0 0.0
    %2247 = vmatprep.subr.mxu0 0.0
    %2248 = vmatpush1.msra.mxu0 0.0
    %2249 = vmatprep.subr.mxu0 0.0
    %2250 = vmatpush1.msra.mxu0 0.0
    %2251 = vmatprep.subr.mxu0 0.0
    %2252 = vmatpush1.msra.mxu0 0.0
    %2253 = vmatprep.subr.mxu0 0.0
    %2254 = vmatpush1.msra.mxu0 0.0
    %2255 = vmatprep.subr.mxu0 0.0
    %2256 = vmatpush1.msra.mxu0 0.0
    %2257 = vmatprep.subr.mxu0 0.0
    %2258 = vmatpush1.msra.mxu0 0.0
    %2259 = vmatprep.subr.mxu0 0.0
    %2260 = vmatpush1.msra.mxu0 0.0
    %2261 = vmatprep.subr.mxu0 0.0
    %2262 = vmatpush1.msra.mxu0 0.0
    %2263 = vmatprep.subr.mxu0 0.0
    %2264 = vmatpush1.msra.mxu0 0.0
    %2265 = vmatprep.subr.mxu0 0.0
    %2266 = vmatpush1.msra.mxu0 0.0
    %2267 = vmatprep.subr.mxu0 0.0
    %2268 = vmatpush1.msra.mxu0 0.0
    %2269 = vmatprep.subr.mxu0 0.0
    %2270 = vmatpush1.msra.mxu0 0.0
    %2271 = vmatprep.subr.mxu0 0.0
    %2272 = vmatpush1.msra.mxu0 0.0
    %2273 = vmatprep.subr.mxu0 0.0
    %2274 = vmatpush1.msra.mxu0 0.0
    %2275 = vmatprep.subr.mxu0 0.0
    %2276 = vmatpush1.msra.mxu0 0.0
    %2277 = vmatprep.subr.mxu0 0.0
    %2278 = vmatpush1.msra.mxu0 0.0
    %2279 = vmatprep.mubr.f32.mxu0 0.0
    %2280 = vmatmul.mubr.f32.gmra.mrb[0].mxu0 %v2210
    %v2281 = vpop.f32.mrb[0].mxu0
    %v2282 = vadd.f32 0.0, %v2281
    %v2283 = vpop.f32.mrb[0].mxu0
    %2284 = vmatprep.mubr.f32.mxu0 0.0
    %2285 = vmatmul.mubr.f32.gmra.mrb[0].mxu0 %v2213
    %v2286 = vpop.f32.mrb[0].mxu0
    %v2287 = vadd.f32 0.0, %v2286
    %v2288 = vpop.f32.mrb[0].mxu0
    %2289 = vdwg.mxu0
    %v2291 = vsel %vm177, %v2282, 0
    %v2294 = vsel %vm177, %v2287, 0
    %2296 = vmatprep.subr.mxu0 0.0
    %2297 = vmatpush1.msra.mxu0 %v1828
    %2298 = vmatprep.subr.mxu0 0.0
    %2299 = vmatpush1.msra.mxu0 %v1829
    %2300 = vmatprep.subr.mxu0 0.0
    %2301 = vmatpush1.msra.mxu0 %v1830
    %2302 = vmatprep.subr.mxu0 0.0
    %2303 = vmatpush1.msra.mxu0 %v1831
    %2304 = vmatprep.subr.mxu0 0.0
    %2305 = vmatpush1.msra.mxu0 0.0
    %2306 = vmatprep.subr.mxu0 0.0
    %2307 = vmatpush1.msra.mxu0 0.0
    %2308 = vmatprep.subr.mxu0 0.0
    %2309 = vmatpush1.msra.mxu0 0.0
    %2310 = vmatprep.subr.mxu0 0.0
    %2311 = vmatpush1.msra.mxu0 0.0
    %2312 = vmatprep.subr.mxu0 0.0
    %2313 = vmatpush1.msra.mxu0 0.0
    %2314 = vmatprep.subr.mxu0 0.0
    %2315 = vmatpush1.msra.mxu0 0.0
    %2316 = vmatprep.subr.mxu0 0.0
    %2317 = vmatpush1.msra.mxu0 0.0
    %2318 = vmatprep.subr.mxu0 0.0
    %2319 = vmatpush1.msra.mxu0 0.0
    %2320 = vmatprep.subr.mxu0 0.0
    %2321 = vmatpush1.msra.mxu0 0.0
    %2322 = vmatprep.subr.mxu0 0.0
    %2323 = vmatpush1.msra.mxu0 0.0
    %2324 = vmatprep.subr.mxu0 0.0
    %2325 = vmatpush1.msra.mxu0 0.0
    %2326 = vmatprep.subr.mxu0 0.0
    %2327 = vmatpush1.msra.mxu0 0.0
    %2328 = vmatprep.subr.mxu0 0.0
    %2329 = vmatpush1.msra.mxu0 0.0
    %2330 = vmatprep.subr.mxu0 0.0
    %2331 = vmatpush1.msra.mxu0 0.0
    %2332 = vmatprep.subr.mxu0 0.0
    %2333 = vmatpush1.msra.mxu0 0.0
    %2334 = vmatprep.subr.mxu0 0.0
    %2335 = vmatpush1.msra.mxu0 0.0
    %2336 = vmatprep.subr.mxu0 0.0
    %2337 = vmatpush1.msra.mxu0 0.0
    %2338 = vmatprep.subr.mxu0 0.0
    %2339 = vmatpush1.msra.mxu0 0.0
    %2340 = vmatprep.subr.mxu0 0.0
    %2341 = vmatpush1.msra.mxu0 0.0
    %2342 = vmatprep.subr.mxu0 0.0
    %2343 = vmatpush1.msra.mxu0 0.0
    %2344 = vmatprep.subr.mxu0 0.0
    %2345 = vmatpush1.msra.mxu0 0.0
    %2346 = vmatprep.subr.mxu0 0.0
    %2347 = vmatpush1.msra.mxu0 0.0
    %2348 = vmatprep.subr.mxu0 0.0
    %2349 = vmatpush1.msra.mxu0 0.0
    %2350 = vmatprep.subr.mxu0 0.0
    %2351 = vmatpush1.msra.mxu0 0.0
    %2352 = vmatprep.subr.mxu0 0.0
    %2353 = vmatpush1.msra.mxu0 0.0
    %2354 = vmatprep.subr.mxu0 0.0
    %2355 = vmatpush1.msra.mxu0 0.0
    %2356 = vmatprep.subr.mxu0 0.0
    %2357 = vmatpush1.msra.mxu0 0.0
    %2358 = vmatprep.subr.mxu0 0.0
    %2359 = vmatpush1.msra.mxu0 0.0
    %2360 = vmatprep.mubr.f32.mxu0 0.0
    %2361 = vmatmul.mubr.f32.gmra.mrb[0].mxu0 %v2291
    %v2362 = vpop.f32.mrb[0].mxu0
    %v2363 = vadd.f32 0.0, %v2362
    %v2364 = vpop.f32.mrb[0].mxu0
    %2365 = vmatprep.mubr.f32.mxu0 0.0
    %2366 = vmatmul.mubr.f32.gmra.mrb[0].mxu0 %v2294
    %v2367 = vpop.f32.mrb[0].mxu0
    %v2368 = vadd.f32 0.0, %v2367
    %v2369 = vpop.f32.mrb[0].mxu0
    %2370 = vdwg.mxu0
    %v2371 = vadd.f32 %v1789, %v2363
    %v2372 = vadd.f32 %v1790, %v2368
    %v2373 = vlaneseq
    %v2374 = vshrl.u32 %v2373, 7
    %v2375 = vsub.s32 3, %v2374
    %v2376 = vrot.slane %v1837, %v2375
    %v2377 = vadd.f32 %v2371, %v2376
    %v2378 = vadd.f32 %v2372, %v2376
    %v2379 = vsel %vm177, %v2377, 0.0
    %2380 = vadd.xlane.f32.xlu0 %v2379
    %v2381 = vpop.xlane.xlu0 %2380
    %v2382 = vsel %vm181, %v2378, 0.0
    %2383 = vadd.xlane.f32.xlu0 %v2382
    %v2384 = vpop.xlane.xlu0 %2383
    %v2385 = vmul.f32 %v2381, %v185
    %v2386 = vmul.f32 %v2384, %v185
    %v2387 = vmul.f32 %v2377, %v2377
    %v2388 = vmul.f32 %v2378, %v2378
    %v2389 = vsel %vm177, %v2387, 0.0
    %2390 = vadd.xlane.f32.xlu0 %v2389
    %v2391 = vpop.xlane.xlu0 %2390
    %v2392 = vsel %vm181, %v2388, 0.0
    %2393 = vadd.xlane.f32.xlu0 %v2392
    %v2394 = vpop.xlane.xlu0 %2393
    %v2395 = vmul.f32 %v2391, %v185
    %v2396 = vmul.f32 %v2394, %v185
    %v2397 = vsub.f32 %v2377, %v2385
    %v2398 = vsub.f32 %v2378, %v2386
    %v2399 = vmul.f32 %v2385, %v2385
    %v2400 = vmul.f32 %v2386, %v2386
    %v2401 = vsub.f32 %v2395, %v2399
    %v2402 = vsub.f32 %v2396, %v2400
    %v2403 = vadd.f32 %v2401, 1e-06
    %v2404 = vadd.f32 %v2402, 1e-06
    %v2405 = vrsqrt.pop %v2403
    %v2406 = vrsqrt.pop %v2404
    %v2407 = vmul.f32 %v2397, %v2405
    %v2408 = vmul.f32 %v2398, %v2406
    %v2409 = vlaneseq
    %v2410 = vshrl.u32 %v2409, 7
    %v2411 = vsub.s32 4, %v2410
    %v2412 = vrot.slane %v1837, %v2411
    %v2413 = vmul.f32 %v2407, %v2412
    %v2414 = vmul.f32 %v2408, %v2412
    %v2415 = vlaneseq
    %v2416 = vshrl.u32 %v2415, 7
    %v2417 = vsub.s32 5, %v2416
    %v2418 = vrot.slane %v1837, %v2417
    %v2419 = vadd.f32 %v2413, %v2418
    %v2420 = vadd.f32 %v2414, %v2418
    %v2421 = vlaneseq
    %v2422 = vshrl.u32 %v2421, 7
    %v2423 = vsub.s32 6, %v2422
    %v2424 = vrot.slane %v1837, %v2423
    %v2426 = vsel %vm177, %v2419, 0
    %v2429 = vsel %vm177, %v2420, 0
    %2431 = vmatprep.subr.mxu0 0.0
    %2432 = vmatpush1.msra.mxu0 %v1832
    %2433 = vmatprep.subr.mxu0 0.0
    %2434 = vmatpush1.msra.mxu0 %v1833
    %2435 = vmatprep.subr.mxu0 0.0
    %2436 = vmatpush1.msra.mxu0 %v1834
    %2437 = vmatprep.subr.mxu0 0.0
    %2438 = vmatpush1.msra.mxu0 %v1835
    %2439 = vmatprep.subr.mxu0 0.0
    %2440 = vmatpush1.msra.mxu0 0.0
    %2441 = vmatprep.subr.mxu0 0.0
    %2442 = vmatpush1.msra.mxu0 0.0
    %2443 = vmatprep.subr.mxu0 0.0
    %2444 = vmatpush1.msra.mxu0 0.0
    %2445 = vmatprep.subr.mxu0 0.0
    %2446 = vmatpush1.msra.mxu0 0.0
    %2447 = vmatprep.subr.mxu0 0.0
    %2448 = vmatpush1.msra.mxu0 0.0
    %2449 = vmatprep.subr.mxu0 0.0
    %2450 = vmatpush1.msra.mxu0 0.0
    %2451 = vmatprep.subr.mxu0 0.0
    %2452 = vmatpush1.msra.mxu0 0.0
    %2453 = vmatprep.subr.mxu0 0.0
    %2454 = vmatpush1.msra.mxu0 0.0
    %2455 = vmatprep.subr.mxu0 0.0
    %2456 = vmatpush1.msra.mxu0 0.0
    %2457 = vmatprep.subr.mxu0 0.0
    %2458 = vmatpush1.msra.mxu0 0.0
    %2459 = vmatprep.subr.mxu0 0.0
    %2460 = vmatpush1.msra.mxu0 0.0
    %2461 = vmatprep.subr.mxu0 0.0
    %2462 = vmatpush1.msra.mxu0 0.0
    %2463 = vmatprep.subr.mxu0 0.0
    %2464 = vmatpush1.msra.mxu0 0.0
    %2465 = vmatprep.subr.mxu0 0.0
    %2466 = vmatpush1.msra.mxu0 0.0
    %2467 = vmatprep.subr.mxu0 0.0
    %2468 = vmatpush1.msra.mxu0 0.0
    %2469 = vmatprep.subr.mxu0 0.0
    %2470 = vmatpush1.msra.mxu0 0.0
    %2471 = vmatprep.subr.mxu0 0.0
    %2472 = vmatpush1.msra.mxu0 0.0
    %2473 = vmatprep.subr.mxu0 0.0
    %2474 = vmatpush1.msra.mxu0 0.0
    %2475 = vmatprep.subr.mxu0 0.0
    %2476 = vmatpush1.msra.mxu0 0.0
    %2477 = vmatprep.subr.mxu0 0.0
    %2478 = vmatpush1.msra.mxu0 0.0
    %2479 = vmatprep.subr.mxu0 0.0
    %2480 = vmatpush1.msra.mxu0 0.0
    %2481 = vmatprep.subr.mxu0 0.0
    %2482 = vmatpush1.msra.mxu0 0.0
    %2483 = vmatprep.subr.mxu0 0.0
    %2484 = vmatpush1.msra.mxu0 0.0
    %2485 = vmatprep.subr.mxu0 0.0
    %2486 = vmatpush1.msra.mxu0 0.0
    %2487 = vmatprep.subr.mxu0 0.0
    %2488 = vmatpush1.msra.mxu0 0.0
    %2489 = vmatprep.subr.mxu0 0.0
    %2490 = vmatpush1.msra.mxu0 0.0
    %2491 = vmatprep.subr.mxu0 0.0
    %2492 = vmatpush1.msra.mxu0 0.0
    %2493 = vmatprep.subr.mxu0 0.0
    %2494 = vmatpush1.msra.mxu0 0.0
    %2495 = vmatprep.mubr.f32.mxu0 0.0
    %2496 = vmatmul.mubr.f32.gmra.mrb[0].mxu0 %v2426
    %v2497 = vpop.f32.mrb[0].mxu0
    %v2498 = vadd.f32 %v2424, %v2497
    %v2499 = vpop.f32.mrb[0].mxu0
    %2500 = vmatprep.mubr.f32.mxu0 0.0
    %2501 = vmatmul.mubr.f32.gmra.mrb[0].mxu0 %v2429
    %v2502 = vpop.f32.mrb[0].mxu0
    %v2503 = vadd.f32 %v2424, %v2502
    %v2504 = vpop.f32.mrb[0].mxu0
    %2505 = vdwg.mxu0
    %v2506 = vmul.f32 %v2498, 0.5
    %v2507 = vmul.f32 %v2503, 0.5
    %v2508 = vmul.f32 %v2498, 0.044715
    %v2509 = vmul.f32 %v2503, 0.044715
    %v2510 = vmul.f32 %v2508, %v2498
    %v2511 = vmul.f32 %v2509, %v2503
    %v2512 = vmul.f32 %v2510, %v2498
    %v2513 = vmul.f32 %v2511, %v2503
    %v2514 = vadd.f32 %v2498, %v2512
    %v2515 = vadd.f32 %v2503, %v2513
    %v2516 = vmul.f32 %v2514, 0.7978846
    %v2517 = vmul.f32 %v2515, 0.7978846
    %v2518 = vtanh.pop %v2516
    %v2519 = vtanh.pop %v2517
    %v2520 = vadd.f32 %v2518, 1.0
    %v2521 = vadd.f32 %v2519, 1.0
    %v2522 = vmul.f32 %v2506, %v2520
    %v2523 = vmul.f32 %v2507, %v2521
    %2524 = vmatprep.subr.mxu0 0.0
    %2525 = vmatpush1.msra.mxu0 %v1839
    %2526 = vmatprep.subr.mxu0 0.0
    %2527 = vmatpush1.msra.mxu0 %v1840
    %2528 = vmatprep.subr.mxu0 0.0
    %2529 = vmatpush1.msra.mxu0 %v1841
    %2530 = vmatprep.subr.mxu0 0.0
    %2531 = vmatpush1.msra.mxu0 %v1842
    %2532 = vmatprep.subr.mxu0 0.0
    %2533 = vmatpush1.msra.mxu0 %v1843
    %2534 = vmatprep.subr.mxu0 0.0
    %2535 = vmatpush1.msra.mxu0 %v1844
    %2536 = vmatprep.subr.mxu0 0.0
    %2537 = vmatpush1.msra.mxu0 %v1845
    %2538 = vmatprep.subr.mxu0 0.0
    %2539 = vmatpush1.msra.mxu0 %v1846
    %2540 = vmatprep.subr.mxu0 0.0
    %2541 = vmatpush1.msra.mxu0 %v1847
    %2542 = vmatprep.subr.mxu0 0.0
    %2543 = vmatpush1.msra.mxu0 %v1848
    %2544 = vmatprep.subr.mxu0 0.0
    %2545 = vmatpush1.msra.mxu0 %v1849
    %2546 = vmatprep.subr.mxu0 0.0
    %2547 = vmatpush1.msra.mxu0 %v1850
    %2548 = vmatprep.subr.mxu0 0.0
    %2549 = vmatpush1.msra.mxu0 %v1851
    %2550 = vmatprep.subr.mxu0 0.0
    %2551 = vmatpush1.msra.mxu0 %v1852
    %2552 = vmatprep.subr.mxu0 0.0
    %2553 = vmatpush1.msra.mxu0 %v1853
    %2554 = vmatprep.subr.mxu0 0.0
    %2555 = vmatpush1.msra.mxu0 %v1854
    %2556 = vmatprep.subr.mxu0 0.0
    %2557 = vmatpush1.msra.mxu0 0.0
    %2558 = vmatprep.subr.mxu0 0.0
    %2559 = vmatpush1.msra.mxu0 0.0
    %2560 = vmatprep.subr.mxu0 0.0
    %2561 = vmatpush1.msra.mxu0 0.0
    %2562 = vmatprep.subr.mxu0 0.0
    %2563 = vmatpush1.msra.mxu0 0.0
    %2564 = vmatprep.subr.mxu0 0.0
    %2565 = vmatpush1.msra.mxu0 0.0
    %2566 = vmatprep.subr.mxu0 0.0
    %2567 = vmatpush1.msra.mxu0 0.0
    %2568 = vmatprep.subr.mxu0 0.0
    %2569 = vmatpush1.msra.mxu0 0.0
    %2570 = vmatprep.subr.mxu0 0.0
    %2571 = vmatpush1.msra.mxu0 0.0
    %2572 = vmatprep.subr.mxu0 0.0
    %2573 = vmatpush1.msra.mxu0 0.0
    %2574 = vmatprep.subr.mxu0 0.0
    %2575 = vmatpush1.msra.mxu0 0.0
    %2576 = vmatprep.subr.mxu0 0.0
    %2577 = vmatpush1.msra.mxu0 0.0
    %2578 = vmatprep.subr.mxu0 0.0
    %2579 = vmatpush1.msra.mxu0 0.0
    %2580 = vmatprep.subr.mxu0 0.0
    %2581 = vmatpush1.msra.mxu0 0.0
    %2582 = vmatprep.subr.mxu0 0.0
    %2583 = vmatpush1.msra.mxu0 0.0
    %2584 = vmatprep.subr.mxu0 0.0
    %2585 = vmatpush1.msra.mxu0 0.0
    %2586 = vmatprep.subr.mxu0 0.0
    %2587 = vmatpush1.msra.mxu0 0.0
    %2588 = vmatprep.mubr.f32.mxu0 0.0
    %2589 = vmatmul.mubr.f32.gmra.mrb[0].mxu0 %v2522
    %v2590 = vpop.f32.mrb[0].mxu0
    %v2591 = vadd.f32 0.0, %v2590
    %v2592 = vpop.f32.mrb[0].mxu0
    %2593 = vmatprep.mubr.f32.mxu0 0.0
    %2594 = vmatmul.mubr.f32.gmra.mrb[0].mxu0 %v2523
    %v2595 = vpop.f32.mrb[0].mxu0
    %v2596 = vadd.f32 0.0, %v2595
    %v2597 = vpop.f32.mrb[0].mxu0
    %2598 = vdwg.mxu0
    %v2599 = vadd.f32 %v2377, %v2591
    %v2600 = vadd.f32 %v2378, %v2596
    %v2601 = vlaneseq
    %v2602 = vshrl.u32 %v2601, 7
    %v2603 = vsub.s32 7, %v2602
    %v2604 = vrot.slane %v1837, %v2603
    %v2605 = vadd.f32 %v2599, %v2604
    %v2606 = vadd.f32 %v2600, %v2604
    %v2607 = vsel %vm177, %v2605, 0.0
    %2608 = vadd.xlane.f32.xlu0 %v2607
    %v2609 = vpop.xlane.xlu0 %2608
    %v2610 = vsel %vm181, %v2606, 0.0
    %2611 = vadd.xlane.f32.xlu0 %v2610
    %v2612 = vpop.xlane.xlu0 %2611
    %v2613 = vmul.f32 %v2609, %v185
    %v2614 = vmul.f32 %v2612, %v185
    %v2615 = vmul.f32 %v2605, %v2605
    %v2616 = vmul.f32 %v2606, %v2606
    %v2617 = vsel %vm177, %v2615, 0.0
    %2618 = vadd.xlane.f32.xlu0 %v2617
    %v2619 = vpop.xlane.xlu0 %2618
    %v2620 = vsel %vm181, %v2616, 0.0
    %2621 = vadd.xlane.f32.xlu0 %v2620
    %v2622 = vpop.xlane.xlu0 %2621
    %v2623 = vmul.f32 %v2619, %v185
    %v2624 = vmul.f32 %v2622, %v185
    %v2625 = vsub.f32 %v2605, %v2613
    %v2626 = vsub.f32 %v2606, %v2614
    %v2627 = vmul.f32 %v2613, %v2613
    %v2628 = vmul.f32 %v2614, %v2614
    %v2629 = vsub.f32 %v2623, %v2627
    %v2630 = vsub.f32 %v2624, %v2628
    %v2631 = vadd.f32 %v2629, 1e-06
    %v2632 = vadd.f32 %v2630, 1e-06
    %v2633 = vrsqrt.pop %v2631
    %v2634 = vrsqrt.pop %v2632
    %v2635 = vmul.f32 %v2625, %v2633
    %v2636 = vmul.f32 %v2626, %v2634
    %v2637 = vmul.f32 %v2635, %v1000
    %v2638 = vadd.f32 %v2637, %v1005
    %s2639 = scalar_lea.vmem %s1, 288
    %v2640 = vld [vmem:[%s2639] sm:$0xff]
    %v2641 = vld [vmem:[%s2639 + $0x8] sm:$0xff]
    %v2642 = vld [vmem:[%s2639 + $0x10] sm:$0xff]
    %v2643 = vld [vmem:[%s2639 + $0x18] sm:$0xff]
    %v2644 = vld [vmem:[%s2639 + $0x20] sm:$0xff]
    %v2645 = vld [vmem:[%s2639 + $0x28] sm:$0xff]
    %v2646 = vld [vmem:[%s2639 + $0x30] sm:$0xff]
    %v2647 = vld [vmem:[%s2639 + $0x38] sm:$0xff]
    %v2648 = vld [vmem:[%s2639 + $0x40] sm:$0xff]
    %v2649 = vld [vmem:[%s2639 + $0x48] sm:$0xff]
    %v2650 = vld [vmem:[%s2639 + $0x50] sm:$0xff]
    %v2651 = vld [vmem:[%s2639 + $0x58] sm:$0xff]
    %s2652 = scalar_lea.vmem %s3, 24
    %v2653 = vld [vmem:[%s2652] sm:$0xff]
    %s2654 = scalar_lea.vmem %s2, 384
    %v2655 = vld [vmem:[%s2654] sm:$0xff]
    %v2656 = vld [vmem:[%s2654 + $0x8] sm:$0xff]
    %v2657 = vld [vmem:[%s2654 + $0x10] sm:$0xff]
    %v2658 = vld [vmem:[%s2654 + $0x18] sm:$0xff]
    %v2659 = vld [vmem:[%s2654 + $0x20] sm:$0xff]
    %v2660 = vld [vmem:[%s2654 + $0x28] sm:$0xff]
    %v2661 = vld [vmem:[%s2654 + $0x30] sm:$0xff]
    %v2662 = vld [vmem:[%s2654 + $0x38] sm:$0xff]
    %v2663 = vld [vmem:[%s2654 + $0x40] sm:$0xff]
    %v2664 = vld [vmem:[%s2654 + $0x48] sm:$0xff]
    %v2665 = vld [vmem:[%s2654 + $0x50] sm:$0xff]
    %v2666 = vld [vmem:[%s2654 + $0x58] sm:$0xff]
    %v2667 = vld [vmem:[%s2654 + $0x60] sm:$0xff]
    %v2668 = vld [vmem:[%s2654 + $0x68] sm:$0xff]
    %v2669 = vld [vmem:[%s2654 + $0x70] sm:$0xff]
    %v2670 = vld [vmem:[%s2654 + $0x78] sm:$0xff]
    %v2671 = vlaneseq
    %v2672 = vshrl.u32 %v2671, 7
    %v2673 = vsub.s32 0, %v2672
    %v2674 = vrot.slane %v2653, %v2673
    %v2675 = vmul.f32 %v2635, %v2674
    %v2676 = vmul.f32 %v2636, %v2674
    %v2677 = vlaneseq
    %v2678 = vshrl.u32 %v2677, 7
    %v2679 = vsub.s32 1, %v2678
    %v2680 = vrot.slane %v2653, %v2679
    %v2681 = vadd.f32 %v2675, %v2680
    %v2682 = vadd.f32 %v2676, %v2680
    %v2683 = vlaneseq
    %v2684 = vshrl.u32 %v2683, 7
    %v2685 = vsub.s32 2, %v2684
    %v2686 = vrot.slane %v2653, %v2685
    %v2688 = vsel %vm177, %v2681, 0
    %v2691 = vsel %vm177, %v2682, 0
    %2693 = vmatprep.subr.mxu0 0.0
    %2694 = vmatpush1.msra.mxu0 %v2640
    %2695 = vmatprep.subr.mxu0 0.0
    %2696 = vmatpush1.msra.mxu0 %v2641
    %2697 = vmatprep.subr.mxu0 0.0
    %2698 = vmatpush1.msra.mxu0 %v2642
    %2699 = vmatprep.subr.mxu0 0.0
    %2700 = vmatpush1.msra.mxu0 %v2643
    %2701 = vmatprep.subr.mxu0 0.0
    %2702 = vmatpush1.msra.mxu0 0.0
    %2703 = vmatprep.subr.mxu0 0.0
    %2704 = vmatpush1.msra.mxu0 0.0
    %2705 = vmatprep.subr.mxu0 0.0
    %2706 = vmatpush1.msra.mxu0 0.0
    %2707 = vmatprep.subr.mxu0 0.0
    %2708 = vmatpush1.msra.mxu0 0.0
    %2709 = vmatprep.subr.mxu0 0.0
    %2710 = vmatpush1.msra.mxu0 0.0
    %2711 = vmatprep.subr.mxu0 0.0
    %2712 = vmatpush1.msra.mxu0 0.0
    %2713 = vmatprep.subr.mxu0 0.0
    %2714 = vmatpush1.msra.mxu0 0.0
    %2715 = vmatprep.subr.mxu0 0.0
    %2716 = vmatpush1.msra.mxu0 0.0
    %2717 = vmatprep.subr.mxu0 0.0
    %2718 = vmatpush1.msra.mxu0 0.0
    %2719 = vmatprep.subr.mxu0 0.0
    %2720 = vmatpush1.msra.mxu0 0.0
    %2721 = vmatprep.subr.mxu0 0.0
    %2722 = vmatpush1.msra.mxu0 0.0
    %2723 = vmatprep.subr.mxu0 0.0
    %2724 = vmatpush1.msra.mxu0 0.0
    %2725 = vmatprep.subr.mxu0 0.0
    %2726 = vmatpush1.msra.mxu0 0.0
    %2727 = vmatprep.subr.mxu0 0.0
    %2728 = vmatpush1.msra.mxu0 0.0
    %2729 = vmatprep.subr.mxu0 0.0
    %2730 = vmatpush1.msra.mxu0 0.0
    %2731 = vmatprep.subr.mxu0 0.0
    %2732 = vmatpush1.msra.mxu0 0.0
    %2733 = vmatprep.subr.mxu0 0.0
    %2734 = vmatpush1.msra.mxu0 0.0
    %2735 = vmatprep.subr.mxu0 0.0
    %2736 = vmatpush1.msra.mxu0 0.0
    %2737 = vmatprep.subr.mxu0 0.0
    %2738 = vmatpush1.msra.mxu0 0.0
    %2739 = vmatprep.subr.mxu0 0.0
    %2740 = vmatpush1.msra.mxu0 0.0
    %2741 = vmatprep.subr.mxu0 0.0
    %2742 = vmatpush1.msra.mxu0 0.0
    %2743 = vmatprep.subr.mxu0 0.0
    %2744 = vmatpush1.msra.mxu0 0.0
    %2745 = vmatprep.subr.mxu0 0.0
    %2746 = vmatpush1.msra.mxu0 0.0
    %2747 = vmatprep.subr.mxu0 0.0
    %2748 = vmatpush1.msra.mxu0 0.0
    %2749 = vmatprep.subr.mxu0 0.0
    %2750 = vmatpush1.msra.mxu0 0.0
    %2751 = vmatprep.subr.mxu0 0.0
    %2752 = vmatpush1.msra.mxu0 0.0
    %2753 = vmatprep.subr.mxu0 0.0
    %2754 = vmatpush1.msra.mxu0 0.0
    %2755 = vmatprep.subr.mxu0 0.0
    %2756 = vmatpush1.msra.mxu0 0.0
    %2757 = vmatprep.mubr.f32.mxu0 0.0
    %2758 = vmatmul.mubr.f32.gmra.mrb[0].mxu0 %v2688
    %v2759 = vpop.f32.mrb[0].mxu0
    %v2760 = vadd.f32 %v2686, %v2759
    %v2761 = vpop.f32.mrb[0].mxu0
    %2762 = vmatprep.mubr.f32.mxu0 0.0
    %2763 = vmatmul.mubr.f32.gmra.mrb[0].mxu0 %v2691
    %v2764 = vpop.f32.mrb[0].mxu0
    %v2765 = vadd.f32 %v2686, %v2764
    %v2766 = vpop.f32.mrb[0].mxu0
    %2767 = vdwg.mxu0
    %v2770 = vrot.slane %v2760, 6
    %v2771 = vrot.slane %v2765, 6
    %v2772 = vsel %vm309, %v2770, %v2771
    %v2775 = vrot.slane %v2760, 4
    %v2776 = vrot.slane %v2765, 4
    %v2777 = vsel %vm315, %v2775, %v2776
    %v2780 = vrot.slane %v2760, 2
    %v2781 = vrot.slane %v2765, 2
    %v2782 = vsel %vm321, %v2780, %v2781
    %v2784 = vsel %vm309, %v2765, %v2770
    %v2785 = vsel %vm315, %v2772, %v2775
    %v2786 = vsel %vm321, %v2777, %v2780
    %2790 = vrot.lane.b32.xlu0 %v2760, 96
    %v2791 = vpop.permute.xlu0 %2790
    %2792 = vrot.lane.b32.xlu0 %v2784, 96
    %v2793 = vpop.permute.xlu0 %2792
    %2794 = vrot.lane.b32.xlu0 %v2785, 96
    %v2795 = vpop.permute.xlu0 %2794
    %2796 = vrot.lane.b32.xlu0 %v2786, 96
    %v2797 = vpop.permute.xlu0 %2796
    %2798 = vrot.lane.b32.xlu0 %v2782, 96
    %v2799 = vpop.permute.xlu0 %2798
    %v2805 = vmul.f32 %v47, %v2791
    %v2806 = vmul.f32 %v48, %v2793
    %v2807 = vmul.f32 %v49, %v2795
    %v2808 = vmul.f32 %v50, %v2797
    %v2809 = vmul.f32 %v51, %v2799
    %2810 = vrot.lane.b32.xlu0 %v2760, 64
    %v2811 = vpop.permute.xlu0 %2810
    %2812 = vrot.lane.b32.xlu0 %v2784, 64
    %v2813 = vpop.permute.xlu0 %2812
    %2814 = vrot.lane.b32.xlu0 %v2785, 64
    %v2815 = vpop.permute.xlu0 %2814
    %2816 = vrot.lane.b32.xlu0 %v2786, 64
    %v2817 = vpop.permute.xlu0 %2816
    %2818 = vrot.lane.b32.xlu0 %v2782, 64
    %v2819 = vpop.permute.xlu0 %2818
    %v2825 = vmul.f32 %v47, %v2811
    %v2826 = vmul.f32 %v48, %v2813
    %v2827 = vmul.f32 %v49, %v2815
    %v2828 = vmul.f32 %v50, %v2817
    %v2829 = vmul.f32 %v51, %v2819
    %v2830 = vsel %vm177, %v2760, 0
    %v2832 = vsel %vm177, %v2765, 0
    %v2835 = vsel %vm177, %v2805, 0
    %v2838 = vsel %vm177, %v2806, 0
    %v2841 = vsel %vm177, %v2807, 0
    %v2844 = vsel %vm177, %v2808, 0
    %v2847 = vsel %vm177, %v2809, 0
    %2849 = vmatprep.subr.mxu0 0.0
    %2850 = vmatpush1.xpose.msra.mxu0 %v2835
    %2851 = vmatprep.subr.mxu0 0.0
    %2852 = vmatpush1.xpose.msra.mxu0 %v2838
    %2853 = vmatprep.subr.mxu0 0.0
    %2854 = vmatpush1.xpose.msra.mxu0 %v2841
    %2855 = vmatprep.subr.mxu0 0.0
    %2856 = vmatpush1.xpose.msra.mxu0 %v2844
    %2857 = vmatprep.subr.mxu0 0.0
    %2858 = vmatpush1.xpose.msra.mxu0 %v2847
    %2859 = vmatprep.subr.mxu0 0.0
    %2860 = vmatpush1.xpose.msra.mxu0 0.0
    %2861 = vmatprep.subr.mxu0 0.0
    %2862 = vmatpush1.xpose.msra.mxu0 0.0
    %2863 = vmatprep.subr.mxu0 0.0
    %2864 = vmatpush1.xpose.msra.mxu0 0.0
    %2865 = vmatprep.subr.mxu0 0.0
    %2866 = vmatpush1.xpose.msra.mxu0 0.0
    %2867 = vmatprep.subr.mxu0 0.0
    %2868 = vmatpush1.xpose.msra.mxu0 0.0
    %2869 = vmatprep.subr.mxu0 0.0
    %2870 = vmatpush1.xpose.msra.mxu0 0.0
    %2871 = vmatprep.subr.mxu0 0.0
    %2872 = vmatpush1.xpose.msra.mxu0 0.0
    %2873 = vmatprep.subr.mxu0 0.0
    %2874 = vmatpush1.xpose.msra.mxu0 0.0
    %2875 = vmatprep.subr.mxu0 0.0
    %2876 = vmatpush1.xpose.msra.mxu0 0.0
    %2877 = vmatprep.subr.mxu0 0.0
    %2878 = vmatpush1.xpose.msra.mxu0 0.0
    %2879 = vmatprep.subr.mxu0 0.0
    %2880 = vmatpush1.xpose.msra.mxu0 0.0
    %2881 = vmatprep.subr.mxu0 0.0
    %2882 = vmatpush1.xpose.msra.mxu0 0.0
    %2883 = vmatprep.subr.mxu0 0.0
    %2884 = vmatpush1.xpose.msra.mxu0 0.0
    %2885 = vmatprep.subr.mxu0 0.0
    %2886 = vmatpush1.xpose.msra.mxu0 0.0
    %2887 = vmatprep.subr.mxu0 0.0
    %2888 = vmatpush1.xpose.msra.mxu0 0.0
    %2889 = vmatprep.subr.mxu0 0.0
    %2890 = vmatpush1.xpose.msra.mxu0 0.0
    %2891 = vmatprep.subr.mxu0 0.0
    %2892 = vmatpush1.xpose.msra.mxu0 0.0
    %2893 = vmatprep.subr.mxu0 0.0
    %2894 = vmatpush1.xpose.msra.mxu0 0.0
    %2895 = vmatprep.subr.mxu0 0.0
    %2896 = vmatpush1.xpose.msra.mxu0 0.0
    %2897 = vmatprep.subr.mxu0 0.0
    %2898 = vmatpush1.xpose.msra.mxu0 0.0
    %2899 = vmatprep.subr.mxu0 0.0
    %2900 = vmatpush1.xpose.msra.mxu0 0.0
    %2901 = vmatprep.subr.mxu0 0.0
    %2902 = vmatpush1.xpose.msra.mxu0 0.0
    %2903 = vmatprep.subr.mxu0 0.0
    %2904 = vmatpush1.xpose.msra.mxu0 0.0
    %2905 = vmatprep.subr.mxu0 0.0
    %2906 = vmatpush1.xpose.msra.mxu0 0.0
    %2907 = vmatprep.subr.mxu0 0.0
    %2908 = vmatpush1.xpose.msra.mxu0 0.0
    %2909 = vmatprep.subr.mxu0 0.0
    %2910 = vmatpush1.xpose.msra.mxu0 0.0
    %2911 = vmatprep.subr.mxu0 0.0
    %2912 = vmatpush1.xpose.msra.mxu0 0.0
    %2913 = vmatprep.mubr.f32.mxu0 0.0
    %2914 = vmatmul.mubr.f32.gmra.mrb[0].mxu0 %v2830
    %v2915 = vpop.f32.mrb[0].mxu0
    %v2916 = vadd.f32 0.0, %v2915
    %v2917 = vpop.f32.mrb[0].mxu0
    %2918 = vmatprep.mubr.f32.mxu0 0.0
    %2919 = vmatmul.mubr.f32.gmra.mrb[0].mxu0 %v2832
    %v2920 = vpop.f32.mrb[0].mxu0
    %v2921 = vadd.f32 0.0, %v2920
    %v2922 = vpop.f32.mrb[0].mxu0
    %2923 = vdwg.mxu0
    %v2924 = vmul.f32 %v2916, 0.35355338
    %v2925 = vmul.f32 %v2921, 0.35355338
    %v2926 = vadd.f32 %v2924, %v52
    %v2927 = vadd.f32 %v2925, %v53
    %v2928 = vsel %vm470, %v2926, -inf
    %2929 = vmax.xlane.f32.xlu0 %v2928
    %v2930 = vpop.xlane.xlu0 %2929
    %v2931 = vsel %vm474, %v2927, -inf
    %2932 = vmax.xlane.f32.xlu0 %v2931
    %v2933 = vpop.xlane.xlu0 %2932
    %v2934 = vsub.f32 %v2926, %v2930
    %v2935 = vsub.f32 %v2927, %v2933
    %v2936 = vmul.f32 %v2934, 1.442695
    %v2937 = vpow.pop %v2936
    %v2938 = vmul.f32 %v2935, 1.442695
    %v2939 = vpow.pop %v2938
    %v2941 = vsel %vm470, %v2937, 0
    %v2944 = vsel %vm470, %v2939, 0
    %2946 = vmatprep.subr.mxu0 0.0
    %2947 = vmatpush1.msra.mxu0 %v54
    %2948 = vmatprep.subr.mxu0 0.0
    %2949 = vmatpush1.msra.mxu0 %v55
    %2950 = vmatprep.subr.mxu0 0.0
    %2951 = vmatpush1.msra.mxu0 %v56
    %2952 = vmatprep.subr.mxu0 0.0
    %2953 = vmatpush1.msra.mxu0 %v57
    %2954 = vmatprep.subr.mxu0 0.0
    %2955 = vmatpush1.msra.mxu0 %v58
    %2956 = vmatprep.subr.mxu0 0.0
    %2957 = vmatpush1.msra.mxu0 0.0
    %2958 = vmatprep.subr.mxu0 0.0
    %2959 = vmatpush1.msra.mxu0 0.0
    %2960 = vmatprep.subr.mxu0 0.0
    %2961 = vmatpush1.msra.mxu0 0.0
    %2962 = vmatprep.subr.mxu0 0.0
    %2963 = vmatpush1.msra.mxu0 0.0
    %2964 = vmatprep.subr.mxu0 0.0
    %2965 = vmatpush1.msra.mxu0 0.0
    %2966 = vmatprep.subr.mxu0 0.0
    %2967 = vmatpush1.msra.mxu0 0.0
    %2968 = vmatprep.subr.mxu0 0.0
    %2969 = vmatpush1.msra.mxu0 0.0
    %2970 = vmatprep.subr.mxu0 0.0
    %2971 = vmatpush1.msra.mxu0 0.0
    %2972 = vmatprep.subr.mxu0 0.0
    %2973 = vmatpush1.msra.mxu0 0.0
    %2974 = vmatprep.subr.mxu0 0.0
    %2975 = vmatpush1.msra.mxu0 0.0
    %2976 = vmatprep.subr.mxu0 0.0
    %2977 = vmatpush1.msra.mxu0 0.0
    %2978 = vmatprep.subr.mxu0 0.0
    %2979 = vmatpush1.msra.mxu0 0.0
    %2980 = vmatprep.subr.mxu0 0.0
    %2981 = vmatpush1.msra.mxu0 0.0
    %2982 = vmatprep.subr.mxu0 0.0
    %2983 = vmatpush1.msra.mxu0 0.0
    %2984 = vmatprep.subr.mxu0 0.0
    %2985 = vmatpush1.msra.mxu0 0.0
    %2986 = vmatprep.subr.mxu0 0.0
    %2987 = vmatpush1.msra.mxu0 0.0
    %2988 = vmatprep.subr.mxu0 0.0
    %2989 = vmatpush1.msra.mxu0 0.0
    %2990 = vmatprep.subr.mxu0 0.0
    %2991 = vmatpush1.msra.mxu0 0.0
    %2992 = vmatprep.subr.mxu0 0.0
    %2993 = vmatpush1.msra.mxu0 0.0
    %2994 = vmatprep.subr.mxu0 0.0
    %2995 = vmatpush1.msra.mxu0 0.0
    %2996 = vmatprep.subr.mxu0 0.0
    %2997 = vmatpush1.msra.mxu0 0.0
    %2998 = vmatprep.subr.mxu0 0.0
    %2999 = vmatpush1.msra.mxu0 0.0
    %3000 = vmatprep.subr.mxu0 0.0
    %3001 = vmatpush1.msra.mxu0 0.0
    %3002 = vmatprep.subr.mxu0 0.0
    %3003 = vmatpush1.msra.mxu0 0.0
    %3004 = vmatprep.subr.mxu0 0.0
    %3005 = vmatpush1.msra.mxu0 0.0
    %3006 = vmatprep.subr.mxu0 0.0
    %3007 = vmatpush1.msra.mxu0 0.0
    %3008 = vmatprep.subr.mxu0 0.0
    %3009 = vmatpush1.msra.mxu0 0.0
    %3010 = vmatprep.mubr.f32.mxu0 0.0
    %3011 = vmatmul.mubr.f32.gmra.mrb[0].mxu0 %v2941
    %v3012 = vpop.f32.mrb[0].mxu0
    %v3013 = vadd.f32 0.0, %v3012
    %v3014 = vpop.f32.mrb[0].mxu0
    %3015 = vmatprep.mubr.f32.mxu0 0.0
    %3016 = vmatmul.mubr.f32.gmra.mrb[0].mxu0 %v2944
    %v3017 = vpop.f32.mrb[0].mxu0
    %v3018 = vadd.f32 0.0, %v3017
    %v3019 = vpop.f32.mrb[0].mxu0
    %3020 = vdwg.mxu0
    %v3021 = vrcp.pop %v3013
    %v3022 = vmul.f32 %v2937, %v3021
    %v3023 = vrcp.pop %v3018
    %v3024 = vmul.f32 %v2939, %v3023
    %v3026 = vsel %vm470, %v3022, 0
    %v3029 = vsel %vm470, %v3024, 0
    %3031 = vmatprep.subr.mxu0 0.0
    %3032 = vmatpush1.msra.mxu0 %v2825
    %3033 = vmatprep.subr.mxu0 0.0
    %3034 = vmatpush1.msra.mxu0 %v2826
    %3035 = vmatprep.subr.mxu0 0.0
    %3036 = vmatpush1.msra.mxu0 %v2827
    %3037 = vmatprep.subr.mxu0 0.0
    %3038 = vmatpush1.msra.mxu0 %v2828
    %3039 = vmatprep.subr.mxu0 0.0
    %3040 = vmatpush1.msra.mxu0 %v2829
    %3041 = vmatprep.subr.mxu0 0.0
    %3042 = vmatpush1.msra.mxu0 0.0
    %3043 = vmatprep.subr.mxu0 0.0
    %3044 = vmatpush1.msra.mxu0 0.0
    %3045 = vmatprep.subr.mxu0 0.0
    %3046 = vmatpush1.msra.mxu0 0.0
    %3047 = vmatprep.subr.mxu0 0.0
    %3048 = vmatpush1.msra.mxu0 0.0
    %3049 = vmatprep.subr.mxu0 0.0
    %3050 = vmatpush1.msra.mxu0 0.0
    %3051 = vmatprep.subr.mxu0 0.0
    %3052 = vmatpush1.msra.mxu0 0.0
    %3053 = vmatprep.subr.mxu0 0.0
    %3054 = vmatpush1.msra.mxu0 0.0
    %3055 = vmatprep.subr.mxu0 0.0
    %3056 = vmatpush1.msra.mxu0 0.0
    %3057 = vmatprep.subr.mxu0 0.0
    %3058 = vmatpush1.msra.mxu0 0.0
    %3059 = vmatprep.subr.mxu0 0.0
    %3060 = vmatpush1.msra.mxu0 0.0
    %3061 = vmatprep.subr.mxu0 0.0
    %3062 = vmatpush1.msra.mxu0 0.0
    %3063 = vmatprep.subr.mxu0 0.0
    %3064 = vmatpush1.msra.mxu0 0.0
    %3065 = vmatprep.subr.mxu0 0.0
    %3066 = vmatpush1.msra.mxu0 0.0
    %3067 = vmatprep.subr.mxu0 0.0
    %3068 = vmatpush1.msra.mxu0 0.0
    %3069 = vmatprep.subr.mxu0 0.0
    %3070 = vmatpush1.msra.mxu0 0.0
    %3071 = vmatprep.subr.mxu0 0.0
    %3072 = vmatpush1.msra.mxu0 0.0
    %3073 = vmatprep.subr.mxu0 0.0
    %3074 = vmatpush1.msra.mxu0 0.0
    %3075 = vmatprep.subr.mxu0 0.0
    %3076 = vmatpush1.msra.mxu0 0.0
    %3077 = vmatprep.subr.mxu0 0.0
    %3078 = vmatpush1.msra.mxu0 0.0
    %3079 = vmatprep.subr.mxu0 0.0
    %3080 = vmatpush1.msra.mxu0 0.0
    %3081 = vmatprep.subr.mxu0 0.0
    %3082 = vmatpush1.msra.mxu0 0.0
    %3083 = vmatprep.subr.mxu0 0.0
    %3084 = vmatpush1.msra.mxu0 0.0
    %3085 = vmatprep.subr.mxu0 0.0
    %3086 = vmatpush1.msra.mxu0 0.0
    %3087 = vmatprep.subr.mxu0 0.0
    %3088 = vmatpush1.msra.mxu0 0.0
    %3089 = vmatprep.subr.mxu0 0.0
    %3090 = vmatpush1.msra.mxu0 0.0
    %3091 = vmatprep.subr.mxu0 0.0
    %3092 = vmatpush1.msra.mxu0 0.0
    %3093 = vmatprep.subr.mxu0 0.0
    %3094 = vmatpush1.msra.mxu0 0.0
    %3095 = vmatprep.mubr.f32.mxu0 0.0
    %3096 = vmatmul.mubr.f32.gmra.mrb[0].mxu0 %v3026
    %v3097 = vpop.f32.mrb[0].mxu0
    %v3098 = vadd.f32 0.0, %v3097
    %v3099 = vpop.f32.mrb[0].mxu0
    %3100 = vmatprep.mubr.f32.mxu0 0.0
    %3101 = vmatmul.mubr.f32.gmra.mrb[0].mxu0 %v3029
    %v3102 = vpop.f32.mrb[0].mxu0
    %v3103 = vadd.f32 0.0, %v3102
    %v3104 = vpop.f32.mrb[0].mxu0
    %3105 = vdwg.mxu0
    %v3107 = vsel %vm177, %v3098, 0
    %v3110 = vsel %vm177, %v3103, 0
    %3112 = vmatprep.subr.mxu0 0.0
    %3113 = vmatpush1.msra.mxu0 %v2644
    %3114 = vmatprep.subr.mxu0 0.0
    %3115 = vmatpush1.msra.mxu0 %v2645
    %3116 = vmatprep.subr.mxu0 0.0
    %3117 = vmatpush1.msra.mxu0 %v2646
    %3118 = vmatprep.subr.mxu0 0.0
    %3119 = vmatpush1.msra.mxu0 %v2647
    %3120 = vmatprep.subr.mxu0 0.0
    %3121 = vmatpush1.msra.mxu0 0.0
    %3122 = vmatprep.subr.mxu0 0.0
    %3123 = vmatpush1.msra.mxu0 0.0
    %3124 = vmatprep.subr.mxu0 0.0
    %3125 = vmatpush1.msra.mxu0 0.0
    %3126 = vmatprep.subr.mxu0 0.0
    %3127 = vmatpush1.msra.mxu0 0.0
    %3128 = vmatprep.subr.mxu0 0.0
    %3129 = vmatpush1.msra.mxu0 0.0
    %3130 = vmatprep.subr.mxu0 0.0
    %3131 = vmatpush1.msra.mxu0 0.0
    %3132 = vmatprep.subr.mxu0 0.0
    %3133 = vmatpush1.msra.mxu0 0.0
    %3134 = vmatprep.subr.mxu0 0.0
    %3135 = vmatpush1.msra.mxu0 0.0
    %3136 = vmatprep.subr.mxu0 0.0
    %3137 = vmatpush1.msra.mxu0 0.0
    %3138 = vmatprep.subr.mxu0 0.0
    %3139 = vmatpush1.msra.mxu0 0.0
    %3140 = vmatprep.subr.mxu0 0.0
    %3141 = vmatpush1.msra.mxu0 0.0
    %3142 = vmatprep.subr.mxu0 0.0
    %3143 = vmatpush1.msra.mxu0 0.0
    %3144 = vmatprep.subr.mxu0 0.0
    %3145 = vmatpush1.msra.mxu0 0.0
    %3146 = vmatprep.subr.mxu0 0.0
    %3147 = vmatpush1.msra.mxu0 0.0
    %3148 = vmatprep.subr.mxu0 0.0
    %3149 = vmatpush1.msra.mxu0 0.0
    %3150 = vmatprep.subr.mxu0 0.0
    %3151 = vmatpush1.msra.mxu0 0.0
    %3152 = vmatprep.subr.mxu0 0.0
    %3153 = vmatpush1.msra.mxu0 0.0
    %3154 = vmatprep.subr.mxu0 0.0
    %3155 = vmatpush1.msra.mxu0 0.0
    %3156 = vmatprep.subr.mxu0 0.0
    %3157 = vmatpush1.msra.mxu0 0.0
    %3158 = vmatprep.subr.mxu0 0.0
    %3159 = vmatpush1.msra.mxu0 0.0
    %3160 = vmatprep.subr.mxu0 0.0
    %3161 = vmatpush1.msra.mxu0 0.0
    %3162 = vmatprep.subr.mxu0 0.0
    %3163 = vmatpush1.msra.mxu0 0.0
    %3164 = vmatprep.subr.mxu0 0.0
    %3165 = vmatpush1.msra.mxu0 0.0
    %3166 = vmatprep.subr.mxu0 0.0
    %3167 = vmatpush1.msra.mxu0 0.0
    %3168 = vmatprep.subr.mxu0 0.0
    %3169 = vmatpush1.msra.mxu0 0.0
    %3170 = vmatprep.subr.mxu0 0.0
    %3171 = vmatpush1.msra.mxu0 0.0
    %3172 = vmatprep.subr.mxu0 0.0
    %3173 = vmatpush1.msra.mxu0 0.0
    %3174 = vmatprep.subr.mxu0 0.0
    %3175 = vmatpush1.msra.mxu0 0.0
    %3176 = vmatprep.mubr.f32.mxu0 0.0
    %3177 = vmatmul.mubr.f32.gmra.mrb[0].mxu0 %v3107
    %v3178 = vpop.f32.mrb[0].mxu0
    %v3179 = vadd.f32 0.0, %v3178
    %v3180 = vpop.f32.mrb[0].mxu0
    %3181 = vmatprep.mubr.f32.mxu0 0.0
    %3182 = vmatmul.mubr.f32.gmra.mrb[0].mxu0 %v3110
    %v3183 = vpop.f32.mrb[0].mxu0
    %v3184 = vadd.f32 0.0, %v3183
    %v3185 = vpop.f32.mrb[0].mxu0
    %3186 = vdwg.mxu0
    %v3187 = vadd.f32 %v2605, %v3179
    %v3188 = vadd.f32 %v2606, %v3184
    %v3189 = vlaneseq
    %v3190 = vshrl.u32 %v3189, 7
    %v3191 = vsub.s32 3, %v3190
    %v3192 = vrot.slane %v2653, %v3191
    %v3193 = vadd.f32 %v3187, %v3192
    %v3194 = vadd.f32 %v3188, %v3192
    %v3195 = vsel %vm177, %v3193, 0.0
    %3196 = vadd.xlane.f32.xlu0 %v3195
    %v3197 = vpop.xlane.xlu0 %3196
    %v3198 = vsel %vm181, %v3194, 0.0
    %3199 = vadd.xlane.f32.xlu0 %v3198
    %v3200 = vpop.xlane.xlu0 %3199
    %v3201 = vmul.f32 %v3197, %v185
    %v3202 = vmul.f32 %v3200, %v185
    %v3203 = vmul.f32 %v3193, %v3193
    %v3204 = vmul.f32 %v3194, %v3194
    %v3205 = vsel %vm177, %v3203, 0.0
    %3206 = vadd.xlane.f32.xlu0 %v3205
    %v3207 = vpop.xlane.xlu0 %3206
    %v3208 = vsel %vm181, %v3204, 0.0
    %3209 = vadd.xlane.f32.xlu0 %v3208
    %v3210 = vpop.xlane.xlu0 %3209
    %v3211 = vmul.f32 %v3207, %v185
    %v3212 = vmul.f32 %v3210, %v185
    %v3213 = vsub.f32 %v3193, %v3201
    %v3214 = vsub.f32 %v3194, %v3202
    %v3215 = vmul.f32 %v3201, %v3201
    %v3216 = vmul.f32 %v3202, %v3202
    %v3217 = vsub.f32 %v3211, %v3215
    %v3218 = vsub.f32 %v3212, %v3216
    %v3219 = vadd.f32 %v3217, 1e-06
    %v3220 = vadd.f32 %v3218, 1e-06
    %v3221 = vrsqrt.pop %v3219
    %v3222 = vrsqrt.pop %v3220
    %v3223 = vmul.f32 %v3213, %v3221
    %v3224 = vmul.f32 %v3214, %v3222
    %v3225 = vlaneseq
    %v3226 = vshrl.u32 %v3225, 7
    %v3227 = vsub.s32 4, %v3226
    %v3228 = vrot.slane %v2653, %v3227
    %v3229 = vmul.f32 %v3223, %v3228
    %v3230 = vmul.f32 %v3224, %v3228
    %v3231 = vlaneseq
    %v3232 = vshrl.u32 %v3231, 7
    %v3233 = vsub.s32 5, %v3232
    %v3234 = vrot.slane %v2653, %v3233
    %v3235 = vadd.f32 %v3229, %v3234
    %v3236 = vadd.f32 %v3230, %v3234
    %v3237 = vlaneseq
    %v3238 = vshrl.u32 %v3237, 7
    %v3239 = vsub.s32 6, %v3238
    %v3240 = vrot.slane %v2653, %v3239
    %v3242 = vsel %vm177, %v3235, 0
    %v3245 = vsel %vm177, %v3236, 0
    %3247 = vmatprep.subr.mxu0 0.0
    %3248 = vmatpush1.msra.mxu0 %v2648
    %3249 = vmatprep.subr.mxu0 0.0
    %3250 = vmatpush1.msra.mxu0 %v2649
    %3251 = vmatprep.subr.mxu0 0.0
    %3252 = vmatpush1.msra.mxu0 %v2650
    %3253 = vmatprep.subr.mxu0 0.0
    %3254 = vmatpush1.msra.mxu0 %v2651
    %3255 = vmatprep.subr.mxu0 0.0
    %3256 = vmatpush1.msra.mxu0 0.0
    %3257 = vmatprep.subr.mxu0 0.0
    %3258 = vmatpush1.msra.mxu0 0.0
    %3259 = vmatprep.subr.mxu0 0.0
    %3260 = vmatpush1.msra.mxu0 0.0
    %3261 = vmatprep.subr.mxu0 0.0
    %3262 = vmatpush1.msra.mxu0 0.0
    %3263 = vmatprep.subr.mxu0 0.0
    %3264 = vmatpush1.msra.mxu0 0.0
    %3265 = vmatprep.subr.mxu0 0.0
    %3266 = vmatpush1.msra.mxu0 0.0
    %3267 = vmatprep.subr.mxu0 0.0
    %3268 = vmatpush1.msra.mxu0 0.0
    %3269 = vmatprep.subr.mxu0 0.0
    %3270 = vmatpush1.msra.mxu0 0.0
    %3271 = vmatprep.subr.mxu0 0.0
    %3272 = vmatpush1.msra.mxu0 0.0
    %3273 = vmatprep.subr.mxu0 0.0
    %3274 = vmatpush1.msra.mxu0 0.0
    %3275 = vmatprep.subr.mxu0 0.0
    %3276 = vmatpush1.msra.mxu0 0.0
    %3277 = vmatprep.subr.mxu0 0.0
    %3278 = vmatpush1.msra.mxu0 0.0
    %3279 = vmatprep.subr.mxu0 0.0
    %3280 = vmatpush1.msra.mxu0 0.0
    %3281 = vmatprep.subr.mxu0 0.0
    %3282 = vmatpush1.msra.mxu0 0.0
    %3283 = vmatprep.subr.mxu0 0.0
    %3284 = vmatpush1.msra.mxu0 0.0
    %3285 = vmatprep.subr.mxu0 0.0
    %3286 = vmatpush1.msra.mxu0 0.0
    %3287 = vmatprep.subr.mxu0 0.0
    %3288 = vmatpush1.msra.mxu0 0.0
    %3289 = vmatprep.subr.mxu0 0.0
    %3290 = vmatpush1.msra.mxu0 0.0
    %3291 = vmatprep.subr.mxu0 0.0
    %3292 = vmatpush1.msra.mxu0 0.0
    %3293 = vmatprep.subr.mxu0 0.0
    %3294 = vmatpush1.msra.mxu0 0.0
    %3295 = vmatprep.subr.mxu0 0.0
    %3296 = vmatpush1.msra.mxu0 0.0
    %3297 = vmatprep.subr.mxu0 0.0
    %3298 = vmatpush1.msra.mxu0 0.0
    %3299 = vmatprep.subr.mxu0 0.0
    %3300 = vmatpush1.msra.mxu0 0.0
    %3301 = vmatprep.subr.mxu0 0.0
    %3302 = vmatpush1.msra.mxu0 0.0
    %3303 = vmatprep.subr.mxu0 0.0
    %3304 = vmatpush1.msra.mxu0 0.0
    %3305 = vmatprep.subr.mxu0 0.0
    %3306 = vmatpush1.msra.mxu0 0.0
    %3307 = vmatprep.subr.mxu0 0.0
    %3308 = vmatpush1.msra.mxu0 0.0
    %3309 = vmatprep.subr.mxu0 0.0
    %3310 = vmatpush1.msra.mxu0 0.0
    %3311 = vmatprep.mubr.f32.mxu0 0.0
    %3312 = vmatmul.mubr.f32.gmra.mrb[0].mxu0 %v3242
    %v3313 = vpop.f32.mrb[0].mxu0
    %v3314 = vadd.f32 %v3240, %v3313
    %v3315 = vpop.f32.mrb[0].mxu0
    %3316 = vmatprep.mubr.f32.mxu0 0.0
    %3317 = vmatmul.mubr.f32.gmra.mrb[0].mxu0 %v3245
    %v3318 = vpop.f32.mrb[0].mxu0
    %v3319 = vadd.f32 %v3240, %v3318
    %v3320 = vpop.f32.mrb[0].mxu0
    %3321 = vdwg.mxu0
    %v3322 = vmul.f32 %v3314, 0.5
    %v3323 = vmul.f32 %v3319, 0.5
    %v3324 = vmul.f32 %v3314, 0.044715
    %v3325 = vmul.f32 %v3319, 0.044715
    %v3326 = vmul.f32 %v3324, %v3314
    %v3327 = vmul.f32 %v3325, %v3319
    %v3328 = vmul.f32 %v3326, %v3314
    %v3329 = vmul.f32 %v3327, %v3319
    %v3330 = vadd.f32 %v3314, %v3328
    %v3331 = vadd.f32 %v3319, %v3329
    %v3332 = vmul.f32 %v3330, 0.7978846
    %v3333 = vmul.f32 %v3331, 0.7978846
    %v3334 = vtanh.pop %v3332
    %v3335 = vtanh.pop %v3333
    %v3336 = vadd.f32 %v3334, 1.0
    %v3337 = vadd.f32 %v3335, 1.0
    %v3338 = vmul.f32 %v3322, %v3336
    %v3339 = vmul.f32 %v3323, %v3337
    %3340 = vmatprep.subr.mxu0 0.0
    %3341 = vmatpush1.msra.mxu0 %v2655
    %3342 = vmatprep.subr.mxu0 0.0
    %3343 = vmatpush1.msra.mxu0 %v2656
    %3344 = vmatprep.subr.mxu0 0.0
    %3345 = vmatpush1.msra.mxu0 %v2657
    %3346 = vmatprep.subr.mxu0 0.0
    %3347 = vmatpush1.msra.mxu0 %v2658
    %3348 = vmatprep.subr.mxu0 0.0
    %3349 = vmatpush1.msra.mxu0 %v2659
    %3350 = vmatprep.subr.mxu0 0.0
    %3351 = vmatpush1.msra.mxu0 %v2660
    %3352 = vmatprep.subr.mxu0 0.0
    %3353 = vmatpush1.msra.mxu0 %v2661
    %3354 = vmatprep.subr.mxu0 0.0
    %3355 = vmatpush1.msra.mxu0 %v2662
    %3356 = vmatprep.subr.mxu0 0.0
    %3357 = vmatpush1.msra.mxu0 %v2663
    %3358 = vmatprep.subr.mxu0 0.0
    %3359 = vmatpush1.msra.mxu0 %v2664
    %3360 = vmatprep.subr.mxu0 0.0
    %3361 = vmatpush1.msra.mxu0 %v2665
    %3362 = vmatprep.subr.mxu0 0.0
    %3363 = vmatpush1.msra.mxu0 %v2666
    %3364 = vmatprep.subr.mxu0 0.0
    %3365 = vmatpush1.msra.mxu0 %v2667
    %3366 = vmatprep.subr.mxu0 0.0
    %3367 = vmatpush1.msra.mxu0 %v2668
    %3368 = vmatprep.subr.mxu0 0.0
    %3369 = vmatpush1.msra.mxu0 %v2669
    %3370 = vmatprep.subr.mxu0 0.0
    %3371 = vmatpush1.msra.mxu0 %v2670
    %3372 = vmatprep.subr.mxu0 0.0
    %3373 = vmatpush1.msra.mxu0 0.0
    %3374 = vmatprep.subr.mxu0 0.0
    %3375 = vmatpush1.msra.mxu0 0.0
    %3376 = vmatprep.subr.mxu0 0.0
    %3377 = vmatpush1.msra.mxu0 0.0
    %3378 = vmatprep.subr.mxu0 0.0
    %3379 = vmatpush1.msra.mxu0 0.0
    %3380 = vmatprep.subr.mxu0 0.0
    %3381 = vmatpush1.msra.mxu0 0.0
    %3382 = vmatprep.subr.mxu0 0.0
    %3383 = vmatpush1.msra.mxu0 0.0
    %3384 = vmatprep.subr.mxu0 0.0
    %3385 = vmatpush1.msra.mxu0 0.0
    %3386 = vmatprep.subr.mxu0 0.0
    %3387 = vmatpush1.msra.mxu0 0.0
    %3388 = vmatprep.subr.mxu0 0.0
    %3389 = vmatpush1.msra.mxu0 0.0
    %3390 = vmatprep.subr.mxu0 0.0
    %3391 = vmatpush1.msra.mxu0 0.0
    %3392 = vmatprep.subr.mxu0 0.0
    %3393 = vmatpush1.msra.mxu0 0.0
    %3394 = vmatprep.subr.mxu0 0.0
    %3395 = vmatpush1.msra.mxu0 0.0
    %3396 = vmatprep.subr.mxu0 0.0
    %3397 = vmatpush1.msra.mxu0 0.0
    %3398 = vmatprep.subr.mxu0 0.0
    %3399 = vmatpush1.msra.mxu0 0.0
    %3400 = vmatprep.subr.mxu0 0.0
    %3401 = vmatpush1.msra.mxu0 0.0
    %3402 = vmatprep.subr.mxu0 0.0
    %3403 = vmatpush1.msra.mxu0 0.0
    %3404 = vmatprep.mubr.f32.mxu0 0.0
    %3405 = vmatmul.mubr.f32.gmra.mrb[0].mxu0 %v3338
    %v3406 = vpop.f32.mrb[0].mxu0
    %v3407 = vadd.f32 0.0, %v3406
    %v3408 = vpop.f32.mrb[0].mxu0
    %3409 = vmatprep.mubr.f32.mxu0 0.0
    %3410 = vmatmul.mubr.f32.gmra.mrb[0].mxu0 %v3339
    %v3411 = vpop.f32.mrb[0].mxu0
    %v3412 = vpop.f32.mrb[0].mxu0
    %3413 = vdwg.mxu0
    %v3414 = vadd.f32 %v3193, %v3407
    %v3415 = vlaneseq
    %v3416 = vshrl.u32 %v3415, 7
    %v3417 = vsub.s32 7, %v3416
    %v3418 = vrot.slane %v2653, %v3417
    %v3419 = vadd.f32 %v3414, %v3418
    %v3420 = vsel %vm177, %v3419, 0.0
    %3421 = vadd.xlane.f32.xlu0 %v3420
    %v3422 = vpop.xlane.xlu0 %3421
    %v3423 = vmul.f32 %v3422, %v185
    %v3424 = vmul.f32 %v3419, %v3419
    %v3425 = vsel %vm177, %v3424, 0.0
    %3426 = vadd.xlane.f32.xlu0 %v3425
    %v3427 = vpop.xlane.xlu0 %3426
    %v3428 = vmul.f32 %v3427, %v185
    %v3429 = vsub.f32 %v3419, %v3423
    %v3430 = vmul.f32 %v3423, %v3423
    %v3431 = vsub.f32 %v3428, %v3430
    %v3432 = vadd.f32 %v3431, 1e-06
    %v3433 = vrsqrt.pop %v3432
    %v3434 = vmul.f32 %v3429, %v3433
    %v3435 = vmul.f32 %v3434, %v1000
    %v3436 = vadd.f32 %v3435, %v1005
    %3438 = vrot.lane.b32.xlu0 %v1822, 32
    %v3439 = vpop.permute.xlu0 %3438
    %3442 = vrot.lane.b32.xlu0 %v2638, 64
    %v3443 = vpop.permute.xlu0 %3442
    %3446 = vrot.lane.b32.xlu0 %v3436, 96
    %v3447 = vpop.permute.xlu0 %3446
    %v3449 = vsel %vm177, %v1006, %v3439
    %v3450 = vsel %vm66, %v3449, %v3443
    %vm3451 = vcmask 785408
    %v3452 = vsel %vm3451, %v3450, %v3447
    %v3454 = vrot.slane %v3452, 4
    %vm3456 = vcmask 1040384
    %v3457 = vsel %vm3456, %v3452, %v3454
    %v3458 = vld [vmem:[%s4 + $0x130] sm:$0xff]
    %v3459 = vld [vmem:[%s4 + $0x138] sm:$0xff]
    %v3460 = vld [vmem:[%s4 + $0x140] sm:$0xff]
    %v3461 = vld [vmem:[%s4 + $0x148] sm:$0xff]
    %v3462 = vld [vmem:[%s4 + $0x150] sm:$0xff]
    %v3463 = vld [vmem:[%s4 + $0x158] sm:$0xff]
    %v3464 = vld [vmem:[%s4 + $0x160] sm:$0xff]
    %v3465 = vld [vmem:[%s4 + $0x168] sm:$0xff]
    %v3466 = vld [vmem:[%s4 + $0x170] sm:$0xff]
    %v3467 = vld [vmem:[%s4 + $0x178] sm:$0xff]
    %v3468 = vld [vmem:[%s4 + $0x180] sm:$0xff]
    %v3469 = vld [vmem:[%s4 + $0x188] sm:$0xff]
    %v3470 = vld [vmem:[%s4 + $0x190] sm:$0xff]
    %v3471 = vld [vmem:[%s4 + $0x198] sm:$0xff]
    %v3472 = vld [vmem:[%s4 + $0x1a0] sm:$0xff]
    %v3473 = vld [vmem:[%s4 + $0x1a8] sm:$0xff]
    %v3474 = vlaneseq
    %v3475 = vshrl.u32 %v3474, 7
    %v3476 = vsub.s32 0, %v3475
    %v3477 = vrot.slane %v61, %v3476
    %3478 = vmatprep.subr.mxu0 0.0
    %3479 = vmatpush1.msra.mxu0 %v3458
    %3480 = vmatprep.subr.mxu0 0.0
    %3481 = vmatpush1.msra.mxu0 %v3459
    %3482 = vmatprep.subr.mxu0 0.0
    %3483 = vmatpush1.msra.mxu0 %v3460
    %3484 = vmatprep.subr.mxu0 0.0
    %3485 = vmatpush1.msra.mxu0 %v3461
    %3486 = vmatprep.subr.mxu0 0.0
    %3487 = vmatpush1.msra.mxu0 %v3462
    %3488 = vmatprep.subr.mxu0 0.0
    %3489 = vmatpush1.msra.mxu0 %v3463
    %3490 = vmatprep.subr.mxu0 0.0
    %3491 = vmatpush1.msra.mxu0 %v3464
    %3492 = vmatprep.subr.mxu0 0.0
    %3493 = vmatpush1.msra.mxu0 %v3465
    %3494 = vmatprep.subr.mxu0 0.0
    %3495 = vmatpush1.msra.mxu0 %v3466
    %3496 = vmatprep.subr.mxu0 0.0
    %3497 = vmatpush1.msra.mxu0 %v3467
    %3498 = vmatprep.subr.mxu0 0.0
    %3499 = vmatpush1.msra.mxu0 %v3468
    %3500 = vmatprep.subr.mxu0 0.0
    %3501 = vmatpush1.msra.mxu0 %v3469
    %3502 = vmatprep.subr.mxu0 0.0
    %3503 = vmatpush1.msra.mxu0 %v3470
    %3504 = vmatprep.subr.mxu0 0.0
    %3505 = vmatpush1.msra.mxu0 %v3471
    %3506 = vmatprep.subr.mxu0 0.0
    %3507 = vmatpush1.msra.mxu0 %v3472
    %3508 = vmatprep.subr.mxu0 0.0
    %3509 = vmatpush1.msra.mxu0 %v3473
    %3510 = vmatprep.subr.mxu0 0.0
    %3511 = vmatpush1.msra.mxu0 0.0
    %3512 = vmatprep.subr.mxu0 0.0
    %3513 = vmatpush1.msra.mxu0 0.0
    %3514 = vmatprep.subr.mxu0 0.0
    %3515 = vmatpush1.msra.mxu0 0.0
    %3516 = vmatprep.subr.mxu0 0.0
    %3517 = vmatpush1.msra.mxu0 0.0
    %3518 = vmatprep.subr.mxu0 0.0
    %3519 = vmatpush1.msra.mxu0 0.0
    %3520 = vmatprep.subr.mxu0 0.0
    %3521 = vmatpush1.msra.mxu0 0.0
    %3522 = vmatprep.subr.mxu0 0.0
    %3523 = vmatpush1.msra.mxu0 0.0
    %3524 = vmatprep.subr.mxu0 0.0
    %3525 = vmatpush1.msra.mxu0 0.0
    %3526 = vmatprep.subr.mxu0 0.0
    %3527 = vmatpush1.msra.mxu0 0.0
    %3528 = vmatprep.subr.mxu0 0.0
    %3529 = vmatpush1.msra.mxu0 0.0
    %3530 = vmatprep.subr.mxu0 0.0
    %3531 = vmatpush1.msra.mxu0 0.0
    %3532 = vmatprep.subr.mxu0 0.0
    %3533 = vmatpush1.msra.mxu0 0.0
    %3534 = vmatprep.subr.mxu0 0.0
    %3535 = vmatpush1.msra.mxu0 0.0
    %3536 = vmatprep.subr.mxu0 0.0
    %3537 = vmatpush1.msra.mxu0 0.0
    %3538 = vmatprep.subr.mxu0 0.0
    %3539 = vmatpush1.msra.mxu0 0.0
    %3540 = vmatprep.subr.mxu0 0.0
    %3541 = vmatpush1.msra.mxu0 0.0
    %3542 = vmatprep.mubr.f32.mxu0 0.0
    %3543 = vmatmul.mubr.f32.gmra.mrb[0].mxu0 %v3457
    %v3544 = vpop.f32.mrb[0].mxu0
    %v3545 = vadd.f32 %v3477, %v3544
    %v3546 = vpop.f32.mrb[0].mxu0
    %3547 = vdwg.mxu0
    %vm3548 = vcmask 123904
    %3549 = vst.msk [vmem:[#allocation2] sm:$0x3] %vm3548, %v3545
    // Predicated region
    $region22: #{vit_wrapper_forward.1} parent=1 // pred_check
      _
    $region23: #{vit_wrapper_forward.1} parent=1 // pred_check_branch
      %3551 = sbr.rel (0) target = $region25
    $region24: #{vit_wrapper_forward.1} parent=1 // pred_region
      %s3553 = ssub.s32 32, 32
      %3554 = vsyncadd [#allocation3], %s3553
      %s3556 = sshll.u32 [#allocation2], 4
      %s3557 = int_to_ptr.vmem [resolvable:$true] %s3556
      %3559 = dma.vmem_to_hbm [thread:$0]  %s3557, 32, %s5, [#allocation3]
    $region25: #{vit_wrapper_forward.1} parent=1 // pred_fallthru
      _
    // Predicated region
    $region26: #{vit_wrapper_forward.1} parent=1 // pred_check
      _
    $region27: #{vit_wrapper_forward.1} parent=1 // pred_check_branch
      %3561 = sbr.rel (0) target = $region29
    $region28: #{vit_wrapper_forward.1} parent=1 // pred_region
      %3562 = dma.done [#allocation3], 32
    $region29: #{vit_wrapper_forward.1} parent=1 // pred_fallthru
      _
    %3563 = vsyncpa [#allocation3], 1

</llo_original>
